<compile_context>
chip_gen: v6e
topology: v6e:2x2x1
jax: 0.10.0
libtpu: 0.0.40
codegen_flags: <defaults>
</compile_context>

<pallas_src>
import math

import jax
import jax.numpy as jnp
import numpy as np
from jax.experimental import pallas as pl
from jax.experimental.pallas import tpu as pltpu

# ---- problem sizes (small but consistent with the module's hard-coded dims) ----
D_MODEL = 256      # RoPEAttention(embedding_dim=256), d_model
KV_DIM = 64        # cross_attn_image kv_in_dim=64
D_FF = 512         # dim_feedforward (small synthetic choice; PyTorch default is 2048)
N_Q = 16           # tgt length; must be a perfect square (axial RoPE grid 4x4)
N_K = 64           # memory length; integer multiple of N_Q (rope_k_repeat)
BATCH = 2
LN_EPS = 1e-5
ROPE_THETA = 10000.0
HALF = D_MODEL // 2

# Lane-packed bias table: every segment starts at a 128-multiple lane offset so every
# in-kernel bias read is a static, vreg-aligned ref-level lane slice.
_BIAS_LAYOUT = (
    ("bqkv_s", 3 * D_MODEL),   # fused self-attn q|k|v bias (LN1 + scale folded)
    ("bo_s", D_MODEL),         # self-attn out-proj bias
    ("bq_c", D_MODEL),         # cross-attn q bias (LN2 + scale folded)
    ("bk_c", D_MODEL),         # cross-attn k bias
    ("bv_c", D_MODEL),         # cross-attn v bias
    ("bo_c", D_MODEL),         # cross-attn out-proj bias
    ("b1", D_FF),              # linear1 bias (LN3 folded), stored as a single row
    ("b2", D_MODEL),           # linear2 bias
)
_B_OFF, _B_W = {}, {}
_off = 0
for _name, _w in _BIAS_LAYOUT:
    _B_OFF[_name] = _off
    _B_W[_name] = _w
    _off += _w
BIAS_WIDTH = _off              # 2816 = 22 * 128


# ---------------------------------------------------------------------------
# RoPE tables (axial, as in ultralytics compute_axial_cis), per-pair cos/sin.
# ---------------------------------------------------------------------------
def axial_rope_tables(head_dim, end_x, end_y, theta=ROPE_THETA, repeat=1):
    n = head_dim // 4
    freqs = 1.0 / (theta ** (np.arange(0, head_dim, 4)[:n].astype(np.float64) / head_dim))
    t = np.arange(end_x * end_y)
    t_x = (t % end_x).astype(np.float64)
    t_y = (t // end_x).astype(np.float64)
    ang = np.concatenate([np.outer(t_x, freqs), np.outer(t_y, freqs)], axis=-1)  # (N, D/2)
    cos = np.cos(ang).astype(np.float32)
    sin = np.sin(ang).astype(np.float32)
    if repeat > 1:                      # rope_k_repeat: tile freqs along the key axis
        cos = np.tile(cos, (repeat, 1))
        sin = np.tile(sin, (repeat, 1))
    return jnp.asarray(cos), jnp.asarray(sin)


# ---------------------------------------------------------------------------
# In-kernel helpers (traced inside the Pallas kernel body).
# ---------------------------------------------------------------------------
def _ln(x):
    # Pure normalization: the LayerNorm affine (g, b) is folded into the next matmul.
    mu = jnp.mean(x, axis=-1, keepdims=True)
    var = jnp.mean(jnp.square(x - mu), axis=-1, keepdims=True)
    return (x - mu) * jax.lax.rsqrt(var + LN_EPS)


def _rope(x, rope):
    # x: (B, N, D) with features permuted "evens first | odds second"; rope: (N, D) = [cos|sin].
    cos, sin = rope[:, :HALF], rope[:, HALF:]
    xr, xi = x[..., :HALF], x[..., HALF:]
    return jnp.concatenate([xr * cos - xi * sin, xr * sin + xi * cos], axis=-1)


def _mm(x, w_ref):
    # bf16 MXU inputs, f32 accumulation.
    return jnp.dot(x.astype(jnp.bfloat16), w_ref[...],
                   preferred_element_type=jnp.float32)


def _attend(q, k, v):
    # (B, Nq, D) x (B, Nk, D) -> (B, Nq, D).  Softmax scale is folded into the q weights.
    s = jnp.einsum('bqd,bkd->bqk', q.astype(jnp.bfloat16), k.astype(jnp.bfloat16),
                   preferred_element_type=jnp.float32)
    m = jnp.max(s, axis=-1, keepdims=True)
    e = jnp.exp(s - m)
    p = e * pl.reciprocal(jnp.sum(e, axis=-1, keepdims=True), approx=True)
    return jnp.einsum('bqk,bkd->bqd', p.astype(jnp.bfloat16), v.astype(jnp.bfloat16),
                      preferred_element_type=jnp.float32)


def _bias(bias_ref, name):
    # Static, 128-aligned ref-level lane slice of the packed (1, BIAS_WIDTH) bias row.
    off = _B_OFF[name]
    return bias_ref[:, off:off + _B_W[name]]


# ---------------------------------------------------------------------------
# One-time parameter packing: LN-affine + softmax-scale folds, RoPE column
# permutation, qkv fusion, lane-packed bias row, RoPE tables.
# ---------------------------------------------------------------------------
def pack_params(params):
    perm = np.concatenate([np.arange(0, D_MODEL, 2), np.arange(1, D_MODEL, 2)])
    scale = 1.0 / math.sqrt(D_MODEL)       # head_dim == d_model (num_heads=1); exact pow2

    def fold_ln(w, b, g, be):
        # (x_hat * g + be) @ W + b  ==  x_hat @ (g[:,None] * W)  +  (be @ W + b)
        return g.reshape(-1, 1) * w, be @ w + b

    def pm_w(a):
        return a[:, perm]

    def pm_b(a):
        return a[:, perm]

    def bf(a):
        return a.astype(jnp.bfloat16)

    g1, be1 = params["g1"][0], params["be1"][0]
    g2, be2 = params["g2"][0], params["be2"][0]
    g3, be3 = params["g3"][0], params["be3"][0]

    # --- self attention: fold LN1 into q/k/v, softmax scale into q, fuse into one matmul ---
    wq, bq = fold_ln(params["wq_s"], params["bq_s"], g1, be1)
    wk, bk = fold_ln(params["wk_s"], params["bk_s"], g1, be1)
    wv, bv = fold_ln(params["wv_s"], params["bv_s"], g1, be1)
    wqkv_s = jnp.concatenate([pm_w(wq) * scale, pm_w(wk), wv], axis=1)        # (256, 768)
    bqkv_s = jnp.concatenate([pm_b(bq) * scale, pm_b(bk), bv], axis=1)        # (1, 768)

    # --- cross attention: fold LN2 + scale into the q projection; k/v act on memory ---
    wqc, bqc = fold_ln(params["wq_c"], params["bq_c"], g2, be2)
    wq_c = pm_w(wqc) * scale
    bq_c = pm_b(bqc) * scale
    wk_c, bk_c = pm_w(params["wk_c"]), pm_b(params["bk_c"])
    wv_c, bv_c = params["wv_c"], params["bv_c"]

    # --- feed-forward: fold LN3 into linear1 ---
    w1, b1 = fold_ln(params["w1"], params["b1f"], g3, be3)

    bias_parts = {
        "bqkv_s": bqkv_s, "bo_s": params["bo_s"], "bq_c": bq_c, "bk_c": bk_c,
        "bv_c": bv_c, "bo_c": params["bo_c"], "b1": b1, "b2": params["b2f"],
    }
    bias = jnp.concatenate([bias_parts[n] for n, _ in _BIAS_LAYOUT],
                           axis=1).astype(jnp.float32)                        # (1, 2816)
    assert bias.shape == (1, BIAS_WIDTH)

    side = int(round(math.sqrt(N_Q)))
    cos_q, sin_q = axial_rope_tables(D_MODEL, end_x=side, end_y=side)
    cos_k, sin_k = axial_rope_tables(D_MODEL, end_x=side, end_y=side, repeat=N_K // N_Q)
    rope_q = jnp.concatenate([cos_q, sin_q], axis=-1)                         # (N_Q, 256)
    rope_k = jnp.concatenate([cos_k, sin_k], axis=-1)                         # (N_K, 256)

    return {
        "wqkv_s": bf(wqkv_s), "wo_s": bf(params["wo_s"]),
        "wq_c": bf(wq_c), "wk_c": bf(wk_c), "wv_c": bf(wv_c), "wo_c": bf(params["wo_c"]),
        "w1": bf(w1), "w2": bf(params["w2"]),
        "bias": bias, "rope_q": rope_q, "rope_k": rope_k,
    }


# ---------------------------------------------------------------------------
# Wrapper: batch-folded single-step grid, full-array BlockSpecs, pallas_call.
# ---------------------------------------------------------------------------
def _full_spec(a):
    return pl.BlockSpec(a.shape, lambda i, _n=a.ndim: (0,) * _n)


def memory_attention_layer(kp, tgt, memory, pos):
    B, n_q, d = tgt.shape
    n_k = memory.shape[1]
    assert d == D_MODEL and memory.shape[-1] == KV_DIM and pos.shape == memory.shape

    # Batch folded into the row (sublane) axis for all projections / LayerNorms.
    tgt_f = tgt.reshape(B * n_q, d)
    mem_f = memory.reshape(B * n_k, KV_DIM)
    pos_f = pos.reshape(B * n_k, KV_DIM)

    def kernel(tgt_ref, mem_ref, pos_ref, rq_ref, rk_ref,
               wqkv_s_ref, wo_s_ref, wq_c_ref, wk_c_ref, wv_c_ref, wo_c_ref,
               w1_ref, w2_ref, bias_ref, out_ref):
        x = tgt_ref[...]                      # (B*n_q, 256) f32
        rq = rq_ref[...]                      # (n_q, 256)  [cos|sin]
        rk = rk_ref[...]                      # (n_k, 256)  [cos|sin]

        def b(name):
            return _bias(bias_ref, name)

        # ---- self attention (pos_enc_at_attn=False, dropout1 = identity) ----
        xh = _ln(x)
        qkv = _mm(xh, wqkv_s_ref) + b("bqkv_s")                  # (B*n_q, 768), one MXU pass
        q = _rope(qkv[:, :D_MODEL].reshape(B, n_q, D_MODEL), rq)
        k = _rope(qkv[:, D_MODEL:2 * D_MODEL].reshape(B, n_q, D_MODEL), rq)
        v = qkv[:, 2 * D_MODEL:].reshape(B, n_q, D_MODEL)
        o = _attend(q, k, v).reshape(B * n_q, D_MODEL)
        x = x + _mm(o, wo_s_ref) + b("bo_s")

        # ---- cross attention (queries without pos enc, keys = memory + pos) ----
        xh = _ln(x)
        q = _rope((_mm(xh, wq_c_ref) + b("bq_c")).reshape(B, n_q, D_MODEL), rq)
        kin = mem_ref[...] + pos_ref[...]                        # formed in-kernel, no HBM pack
        k = _rope((_mm(kin, wk_c_ref) + b("bk_c")).reshape(B, n_k, D_MODEL), rk)
        v = (_mm(mem_ref[...], wv_c_ref) + b("bv_c")).reshape(B, n_k, D_MODEL)
        o = _attend(q, k, v).reshape(B * n_q, D_MODEL)
        x = x + _mm(o, wo_c_ref) + b("bo_c")

        # ---- feed-forward (ReLU, dropout = identity; LN3 affine folded into w1/b1) ----
        xh = _ln(x)
        h = jnp.maximum(_mm(xh, w1_ref) + b("b1"), 0.0)
        x = x + _mm(h, w2_ref) + b("b2")

        out_ref[...] = x

    operands = [tgt_f, mem_f, pos_f, kp["rope_q"], kp["rope_k"],
                kp["wqkv_s"], kp["wo_s"], kp["wq_c"], kp["wk_c"], kp["wv_c"],
                kp["wo_c"], kp["w1"], kp["w2"], kp["bias"]]

    flops = (
        2 * (B * n_q) * D_MODEL * 3 * D_MODEL          # fused self qkv
        + 2 * 2 * B * n_q * n_q * D_MODEL              # self attn logits + pv
        + 2 * (B * n_q) * D_MODEL * D_MODEL            # self out proj
        + 2 * (B * n_q) * D_MODEL * D_MODEL            # cross q proj
        + 2 * 2 * (B * n_k) * KV_DIM * D_MODEL         # cross k + v proj
        + 2 * 2 * B * n_q * n_k * D_MODEL              # cross attn logits + pv
        + 2 * (B * n_q) * D_MODEL * D_MODEL            # cross out proj
        + 2 * 2 * (B * n_q) * D_MODEL * D_FF           # ffn
    )
    bytes_accessed = int(sum(int(a.size) * a.dtype.itemsize for a in operands)
                         + B * n_q * D_MODEL * 4)
    cost = pl.CostEstimate(flops=int(flops),
                           transcendentals=int(B * n_q * (n_q + n_k) + 3 * B * n_q),
                           bytes_accessed=bytes_accessed)

    out = pl.pallas_call(
        kernel,
        out_shape=jax.ShapeDtypeStruct((B * n_q, D_MODEL), jnp.float32),
        grid_spec=pltpu.PrefetchScalarGridSpec(
            num_scalar_prefetch=0,
            grid=(1,),
            in_specs=[_full_spec(a) for a in operands],
            out_specs=pl.BlockSpec((B * n_q, D_MODEL), lambda i: (0, 0)),
        ),
        compiler_params=pltpu.CompilerParams(dimension_semantics=("arbitrary",)),
        cost_estimate=cost,
    )(*operands)
    return out.reshape(B, n_q, D_MODEL)


# ---------------------------------------------------------------------------
# Parameters (deterministic synthetic init; shapes match the PyTorch module).
# Linear weights stored as (in, out); biases / LN params as (1, out).
# ---------------------------------------------------------------------------
def init_params(key):
    keys = jax.random.split(key, 26)
    ki = iter(keys)

    def dense(din, dout):
        w = jax.random.normal(next(ki), (din, dout), jnp.float32) / float(np.sqrt(din))
        b = 0.01 * jax.random.normal(next(ki), (1, dout), jnp.float32)
        return w, b

    def lnorm(dim):
        g = 1.0 + 0.05 * jax.random.normal(next(ki), (1, dim), jnp.float32)
        b = 0.05 * jax.random.normal(next(ki), (1, dim), jnp.float32)
        return g, b

    p = {}
    p["wq_s"], p["bq_s"] = dense(D_MODEL, D_MODEL)   # self_attn q/k/v/out projections
    p["wk_s"], p["bk_s"] = dense(D_MODEL, D_MODEL)
    p["wv_s"], p["bv_s"] = dense(D_MODEL, D_MODEL)
    p["wo_s"], p["bo_s"] = dense(D_MODEL, D_MODEL)
    p["wq_c"], p["bq_c"] = dense(D_MODEL, D_MODEL)   # cross_attn_image projections
    p["wk_c"], p["bk_c"] = dense(KV_DIM, D_MODEL)
    p["wv_c"], p["bv_c"] = dense(KV_DIM, D_MODEL)
    p["wo_c"], p["bo_c"] = dense(D_MODEL, D_MODEL)
    p["w1"], p["b1f"] = dense(D_MODEL, D_FF)         # linear1 / linear2
    p["w2"], p["b2f"] = dense(D_FF, D_MODEL)
    p["g1"], p["be1"] = lnorm(D_MODEL)               # norm1 / norm2 / norm3
    p["g2"], p["be2"] = lnorm(D_MODEL)
    p["g3"], p["be3"] = lnorm(D_MODEL)
    return p


# ---------------------------------------------------------------------------
# Pure-JAX f32 reference in the ORIGINAL (interleaved-pair) RoPE formulation, using
# unpermuted / unfused / unfolded weights — checks the kernel AND every pack-time
# fold (LN affine, softmax scale, column permutation, qkv fusion).
# ---------------------------------------------------------------------------
def reference_forward(params, tgt, memory, pos, cos_q, sin_q, cos_k, sin_k):
    def ln(x, g, b):
        mu = jnp.mean(x, -1, keepdims=True)
        var = jnp.mean(jnp.square(x - mu), -1, keepdims=True)
        return (x - mu) / jnp.sqrt(var + LN_EPS) * g + b

    def rope_interleaved(x, cos, sin):
        xe, xo = x[..., 0::2], x[..., 1::2]
        oe = xe * cos - xo * sin
        oo = xe * sin + xo * cos
        return jnp.stack([oe, oo], axis=-1).reshape(x.shape)

    def attn(q, k, v):
        logits = q @ k.T / math.sqrt(D_MODEL)
        return jax.nn.softmax(logits, axis=-1) @ v

    def one(x, mem, posk):
        t2 = ln(x, params["g1"], params["be1"])
        q = rope_interleaved(t2 @ params["wq_s"] + params["bq_s"], cos_q, sin_q)
        k = rope_interleaved(t2 @ params["wk_s"] + params["bk_s"], cos_q, sin_q)
        v = t2 @ params["wv_s"] + params["bv_s"]
        x = x + (attn(q, k, v) @ params["wo_s"] + params["bo_s"])

        t2 = ln(x, params["g2"], params["be2"])
        kin = mem + posk
        q = rope_interleaved(t2 @ params["wq_c"] + params["bq_c"], cos_q, sin_q)
        k = rope_interleaved(kin @ params["wk_c"] + params["bk_c"], cos_k, sin_k)
        v = mem @ params["wv_c"] + params["bv_c"]
        x = x + (attn(q, k, v) @ params["wo_c"] + params["bo_c"])

        t2 = ln(x, params["g3"], params["be3"])
        h = jax.nn.relu(t2 @ params["w1"] + params["b1f"])
        return x + (h @ params["w2"] + params["b2f"])

    return jax.vmap(one)(tgt, memory, pos)


if __name__ == "__main__":
    key = jax.random.PRNGKey(0)
    k_par, k_tgt, k_mem, k_pos, k_qpos = jax.random.split(key, 5)
    params = init_params(k_par)
    kernel_params = pack_params(params)          # one-time: fold / permute / fuse / pack

    tgt = jax.random.normal(k_tgt, (BATCH, N_Q, D_MODEL), jnp.float32)
    memory = jax.random.normal(k_mem, (BATCH, N_K, KV_DIM), jnp.float32)
    pos = jax.random.normal(k_pos, (BATCH, N_K, KV_DIM), jnp.float32)
    # query_pos is unused with the module's default flags (pos_enc_at_attn=False,
    # pos_enc_at_cross_attn_queries=False); built only for interface fidelity.
    query_pos = jax.random.normal(k_qpos, (BATCH, N_Q, D_MODEL), jnp.float32)

    out = memory_attention_layer(kernel_params, tgt, memory, pos)
    out = jax.block_until_ready(out)
    assert out.shape == (BATCH, N_Q, D_MODEL)

    side = int(round(math.sqrt(N_Q)))
    cos_q, sin_q = axial_rope_tables(D_MODEL, end_x=side, end_y=side)
    cos_k, sin_k = axial_rope_tables(D_MODEL, end_x=side, end_y=side, repeat=N_K // N_Q)
    ref = jax.block_until_ready(
        reference_forward(params, tgt, memory, pos, cos_q, sin_q, cos_k, sin_k))

    # Tolerance covers bf16 MXU inputs (f32 accumulation) vs the f32 reference.
    if not np.allclose(np.asarray(out), np.asarray(ref), rtol=4e-2, atol=4e-2):
        raise AssertionError("Pallas kernel does not match reference")
    print("KERNEL_OK")
</pallas_src>

<mosaic_0001>
module attributes {stable_mosaic.version = 11 : i64} {
  func.func @kernel(%arg0: i32, %arg1: memref<32x256xf32, #tpu.memory_space<vmem>>, %arg2: memref<128x64xf32, #tpu.memory_space<vmem>>, %arg3: memref<128x64xf32, #tpu.memory_space<vmem>>, %arg4: memref<16x256xf32, #tpu.memory_space<vmem>>, %arg5: memref<64x256xf32, #tpu.memory_space<vmem>>, %arg6: memref<256x768xbf16, #tpu.memory_space<vmem>>, %arg7: memref<256x256xbf16, #tpu.memory_space<vmem>>, %arg8: memref<256x256xbf16, #tpu.memory_space<vmem>>, %arg9: memref<64x256xbf16, #tpu.memory_space<vmem>>, %arg10: memref<64x256xbf16, #tpu.memory_space<vmem>>, %arg11: memref<256x256xbf16, #tpu.memory_space<vmem>>, %arg12: memref<256x512xbf16, #tpu.memory_space<vmem>>, %arg13: memref<512x256xbf16, #tpu.memory_space<vmem>>, %arg14: memref<1x2816xf32, #tpu.memory_space<vmem>>, %arg15: memref<32x256xf32, #tpu.memory_space<vmem>>) attributes {dimension_semantics = [#tpu.dimension_semantics<arbitrary>], iteration_bounds = array<i64: 1>, scalar_prefetch = 0 : i64, scratch_operands = 0 : i64, tpu.core_type = #tpu.core_type<tc>, window_params = [{pipeline_mode = #tpu.pipeline_mode<synchronous>, transform_indices = @transform_0, window_bounds = array<i64: 32, 256>}, {pipeline_mode = #tpu.pipeline_mode<synchronous>, transform_indices = @transform_1, window_bounds = array<i64: 128, 64>}, {pipeline_mode = #tpu.pipeline_mode<synchronous>, transform_indices = @transform_2, window_bounds = array<i64: 128, 64>}, {pipeline_mode = #tpu.pipeline_mode<synchronous>, transform_indices = @transform_3, window_bounds = array<i64: 16, 256>}, {pipeline_mode = #tpu.pipeline_mode<synchronous>, transform_indices = @transform_4, window_bounds = array<i64: 64, 256>}, {pipeline_mode = #tpu.pipeline_mode<synchronous>, transform_indices = @transform_5, window_bounds = array<i64: 256, 768>}, {pipeline_mode = #tpu.pipeline_mode<synchronous>, transform_indices = @transform_6, window_bounds = array<i64: 256, 256>}, {pipeline_mode = #tpu.pipeline_mode<synchronous>, transform_indices = @transform_7, window_bounds = array<i64: 256, 256>}, {pipeline_mode = #tpu.pipeline_mode<synchronous>, transform_indices = @transform_8, window_bounds = array<i64: 64, 256>}, {pipeline_mode = #tpu.pipeline_mode<synchronous>, transform_indices = @transform_9, window_bounds = array<i64: 64, 256>}, {pipeline_mode = #tpu.pipeline_mode<synchronous>, transform_indices = @transform_10, window_bounds = array<i64: 256, 256>}, {pipeline_mode = #tpu.pipeline_mode<synchronous>, transform_indices = @transform_11, window_bounds = array<i64: 256, 512>}, {pipeline_mode = #tpu.pipeline_mode<synchronous>, transform_indices = @transform_12, window_bounds = array<i64: 512, 256>}, {pipeline_mode = #tpu.pipeline_mode<synchronous>, transform_indices = @transform_13, window_bounds = array<i64: 1, 2816>}, {pipeline_mode = #tpu.pipeline_mode<synchronous>, transform_indices = @transform_14, window_bounds = array<i64: 32, 256>}]} {
    %c0 = arith.constant 0 : index
    %c0_0 = arith.constant 0 : index
    %0 = vector.load %arg1[%c0, %c0_0] : memref<32x256xf32, #tpu.memory_space<vmem>>, vector<32x256xf32>
    %c0_1 = arith.constant 0 : index
    %c0_2 = arith.constant 0 : index
    %1 = vector.load %arg4[%c0_1, %c0_2] : memref<16x256xf32, #tpu.memory_space<vmem>>, vector<16x256xf32>
    %c0_3 = arith.constant 0 : index
    %c0_4 = arith.constant 0 : index
    %2 = vector.load %arg5[%c0_3, %c0_4] : memref<64x256xf32, #tpu.memory_space<vmem>>, vector<64x256xf32>
    %cst = arith.constant dense<0.000000e+00> : vector<32xf32>
    %3 = vector.multi_reduction <add>, %0, %cst [1] : vector<32x256xf32> to vector<32xf32>
    %4 = vector.shape_cast %3 : vector<32xf32> to vector<32x1xf32>
    %cst_5 = arith.constant 2.560000e+02 : f32
    %5 = vector.broadcast %cst_5 : f32 to vector<32x1xf32>
    %6 = arith.divf %4, %5 : vector<32x1xf32>
    %7 = vector.broadcast %6 : vector<32x1xf32> to vector<32x256xf32>
    %8 = arith.subf %0, %7 : vector<32x256xf32>
    %9 = arith.mulf %8, %8 : vector<32x256xf32>
    %cst_6 = arith.constant dense<0.000000e+00> : vector<32xf32>
    %10 = vector.multi_reduction <add>, %9, %cst_6 [1] : vector<32x256xf32> to vector<32xf32>
    %11 = vector.shape_cast %10 : vector<32xf32> to vector<32x1xf32>
    %cst_7 = arith.constant 2.560000e+02 : f32
    %12 = vector.broadcast %cst_7 : f32 to vector<32x1xf32>
    %13 = arith.divf %11, %12 : vector<32x1xf32>
    %14 = vector.broadcast %6 : vector<32x1xf32> to vector<32x256xf32>
    %15 = arith.subf %0, %14 : vector<32x256xf32>
    %cst_8 = arith.constant 9.99999974E-6 : f32
    %16 = vector.broadcast %cst_8 : f32 to vector<32x1xf32>
    %17 = arith.addf %13, %16 : vector<32x1xf32>
    %18 = math.rsqrt %17 : vector<32x1xf32>
    %19 = vector.broadcast %18 : vector<32x1xf32> to vector<32x256xf32>
    %20 = arith.mulf %15, %19 : vector<32x256xf32>
    %21 = arith.truncf %20 : vector<32x256xf32> to vector<32x256xbf16>
    %c0_9 = arith.constant 0 : index
    %c0_10 = arith.constant 0 : index
    %22 = vector.load %arg6[%c0_9, %c0_10] : memref<256x768xbf16, #tpu.memory_space<vmem>>, vector<256x768xbf16>
    %cst_11 = arith.constant dense<0.000000e+00> : vector<32x768xf32>
    %23 = tpu.matmul %21, %22, %cst_11 {dimension_numbers = #tpu.dot_dimension_numbers<[1], [0], [0], [1], [0, 0, 1, 1], [], []>} : vector<32x256xbf16>, vector<256x768xbf16>, vector<32x768xf32> -> vector<32x768xf32>
    %c0_12 = arith.constant 0 : index
    %c0_13 = arith.constant 0 : index
    %24 = vector.load %arg14[%c0_12, %c0_13] : memref<1x2816xf32, #tpu.memory_space<vmem>>, vector<1x768xf32>
    %25 = vector.broadcast %24 : vector<1x768xf32> to vector<32x768xf32>
    %26 = arith.addf %23, %25 : vector<32x768xf32>
    %27 = vector.extract_strided_slice %26 {offsets = [0, 0], sizes = [32, 256], strides = [1, 1]} : vector<32x768xf32> to vector<32x256xf32>
    %28 = vector.shape_cast %27 : vector<32x256xf32> to vector<2x16x256xf32>
    %29 = vector.extract_strided_slice %1 {offsets = [0, 0], sizes = [16, 128], strides = [1, 1]} : vector<16x256xf32> to vector<16x128xf32>
    %30 = vector.extract_strided_slice %1 {offsets = [0, 128], sizes = [16, 128], strides = [1, 1]} : vector<16x256xf32> to vector<16x128xf32>
    %31 = vector.extract_strided_slice %28 {offsets = [0, 0, 0], sizes = [2, 16, 128], strides = [1, 1, 1]} : vector<2x16x256xf32> to vector<2x16x128xf32>
    %32 = vector.extract_strided_slice %28 {offsets = [0, 0, 128], sizes = [2, 16, 128], strides = [1, 1, 1]} : vector<2x16x256xf32> to vector<2x16x128xf32>
    %33 = vector.shape_cast %29 : vector<16x128xf32> to vector<1x16x128xf32>
    %34 = vector.broadcast %33 : vector<1x16x128xf32> to vector<2x16x128xf32>
    %35 = arith.mulf %31, %34 : vector<2x16x128xf32>
    %36 = vector.shape_cast %30 : vector<16x128xf32> to vector<1x16x128xf32>
    %37 = vector.broadcast %36 : vector<1x16x128xf32> to vector<2x16x128xf32>
    %38 = arith.mulf %32, %37 : vector<2x16x128xf32>
    %39 = arith.subf %35, %38 : vector<2x16x128xf32>
    %40 = vector.shape_cast %30 : vector<16x128xf32> to vector<1x16x128xf32>
    %41 = vector.broadcast %40 : vector<1x16x128xf32> to vector<2x16x128xf32>
    %42 = arith.mulf %31, %41 : vector<2x16x128xf32>
    %43 = vector.shape_cast %29 : vector<16x128xf32> to vector<1x16x128xf32>
    %44 = vector.broadcast %43 : vector<1x16x128xf32> to vector<2x16x128xf32>
    %45 = arith.mulf %32, %44 : vector<2x16x128xf32>
    %46 = arith.addf %42, %45 : vector<2x16x128xf32>
    %47 = tpu.concatenate %39, %46 in 2 : vector<2x16x128xf32>, vector<2x16x128xf32> -> vector<2x16x256xf32>
    %48 = vector.extract_strided_slice %26 {offsets = [0, 256], sizes = [32, 256], strides = [1, 1]} : vector<32x768xf32> to vector<32x256xf32>
    %49 = vector.shape_cast %48 : vector<32x256xf32> to vector<2x16x256xf32>
    %50 = vector.extract_strided_slice %1 {offsets = [0, 0], sizes = [16, 128], strides = [1, 1]} : vector<16x256xf32> to vector<16x128xf32>
    %51 = vector.extract_strided_slice %1 {offsets = [0, 128], sizes = [16, 128], strides = [1, 1]} : vector<16x256xf32> to vector<16x128xf32>
    %52 = vector.extract_strided_slice %49 {offsets = [0, 0, 0], sizes = [2, 16, 128], strides = [1, 1, 1]} : vector<2x16x256xf32> to vector<2x16x128xf32>
    %53 = vector.extract_strided_slice %49 {offsets = [0, 0, 128], sizes = [2, 16, 128], strides = [1, 1, 1]} : vector<2x16x256xf32> to vector<2x16x128xf32>
    %54 = vector.shape_cast %50 : vector<16x128xf32> to vector<1x16x128xf32>
    %55 = vector.broadcast %54 : vector<1x16x128xf32> to vector<2x16x128xf32>
    %56 = arith.mulf %52, %55 : vector<2x16x128xf32>
    %57 = vector.shape_cast %51 : vector<16x128xf32> to vector<1x16x128xf32>
    %58 = vector.broadcast %57 : vector<1x16x128xf32> to vector<2x16x128xf32>
    %59 = arith.mulf %53, %58 : vector<2x16x128xf32>
    %60 = arith.subf %56, %59 : vector<2x16x128xf32>
    %61 = vector.shape_cast %51 : vector<16x128xf32> to vector<1x16x128xf32>
    %62 = vector.broadcast %61 : vector<1x16x128xf32> to vector<2x16x128xf32>
    %63 = arith.mulf %52, %62 : vector<2x16x128xf32>
    %64 = vector.shape_cast %50 : vector<16x128xf32> to vector<1x16x128xf32>
    %65 = vector.broadcast %64 : vector<1x16x128xf32> to vector<2x16x128xf32>
    %66 = arith.mulf %53, %65 : vector<2x16x128xf32>
    %67 = arith.addf %63, %66 : vector<2x16x128xf32>
    %68 = tpu.concatenate %60, %67 in 2 : vector<2x16x128xf32>, vector<2x16x128xf32> -> vector<2x16x256xf32>
    %69 = vector.extract_strided_slice %26 {offsets = [0, 512], sizes = [32, 256], strides = [1, 1]} : vector<32x768xf32> to vector<32x256xf32>
    %70 = vector.shape_cast %69 : vector<32x256xf32> to vector<2x16x256xf32>
    %71 = arith.truncf %47 : vector<2x16x256xf32> to vector<2x16x256xbf16>
    %72 = arith.truncf %68 : vector<2x16x256xf32> to vector<2x16x256xbf16>
    "tpu.trace_start"() <{level = 10 : i32, message = "bqd,bkd->bqk"}> : () -> ()
    %cst_14 = arith.constant dense<0.000000e+00> : vector<2x16x16xf32>
    %73 = tpu.matmul %71, %72, %cst_14 {dimension_numbers = #tpu.dot_dimension_numbers<[2], [2], [1], [1], [0, 0, 0, 1, 1, 1], [0], [0]>} : vector<2x16x256xbf16>, vector<2x16x256xbf16>, vector<2x16x16xf32> -> vector<2x16x16xf32>
    "tpu.trace_stop"() : () -> ()
    %cst_15 = arith.constant dense<0xFF800000> : vector<2x16xf32>
    %74 = vector.multi_reduction <maximumf>, %73, %cst_15 [2] : vector<2x16x16xf32> to vector<2x16xf32>
    %75 = vector.shape_cast %74 : vector<2x16xf32> to vector<2x16x1xf32>
    %76 = vector.broadcast %75 : vector<2x16x1xf32> to vector<2x16x16xf32>
    %77 = arith.subf %73, %76 : vector<2x16x16xf32>
    %78 = math.exp %77 : vector<2x16x16xf32>
    %cst_16 = arith.constant dense<0.000000e+00> : vector<2x16xf32>
    %79 = vector.multi_reduction <add>, %78, %cst_16 [2] : vector<2x16x16xf32> to vector<2x16xf32>
    %80 = vector.shape_cast %79 : vector<2x16xf32> to vector<2x16x1xf32>
    %81 = tpu.reciprocal %80 {approx = true} : vector<2x16x1xf32> -> vector<2x16x1xf32>
    %82 = vector.broadcast %81 : vector<2x16x1xf32> to vector<2x16x16xf32>
    %83 = arith.mulf %78, %82 : vector<2x16x16xf32>
    %84 = arith.truncf %83 : vector<2x16x16xf32> to vector<2x16x16xbf16>
    %85 = arith.truncf %70 : vector<2x16x256xf32> to vector<2x16x256xbf16>
    "tpu.trace_start"() <{level = 10 : i32, message = "bqk,bkd->bqd"}> : () -> ()
    %cst_17 = arith.constant dense<0.000000e+00> : vector<2x16x256xf32>
    %86 = tpu.matmul %84, %85, %cst_17 {dimension_numbers = #tpu.dot_dimension_numbers<[2], [1], [1], [2], [0, 0, 0, 1, 1, 2], [0], [0]>} : vector<2x16x16xbf16>, vector<2x16x256xbf16>, vector<2x16x256xf32> -> vector<2x16x256xf32>
    "tpu.trace_stop"() : () -> ()
    %87 = vector.shape_cast %86 : vector<2x16x256xf32> to vector<32x256xf32>
    %88 = arith.truncf %87 : vector<32x256xf32> to vector<32x256xbf16>
    %c0_18 = arith.constant 0 : index
    %c0_19 = arith.constant 0 : index
    %89 = vector.load %arg7[%c0_18, %c0_19] : memref<256x256xbf16, #tpu.memory_space<vmem>>, vector<256x256xbf16>
    %cst_20 = arith.constant dense<0.000000e+00> : vector<32x256xf32>
    %90 = tpu.matmul %88, %89, %cst_20 {dimension_numbers = #tpu.dot_dimension_numbers<[1], [0], [0], [1], [0, 0, 1, 1], [], []>} : vector<32x256xbf16>, vector<256x256xbf16>, vector<32x256xf32> -> vector<32x256xf32>
    %91 = arith.addf %0, %90 : vector<32x256xf32>
    %c0_21 = arith.constant 0 : index
    %c768 = arith.constant 768 : index
    %92 = vector.load %arg14[%c0_21, %c768] : memref<1x2816xf32, #tpu.memory_space<vmem>>, vector<1x256xf32>
    %93 = vector.broadcast %92 : vector<1x256xf32> to vector<32x256xf32>
    %94 = arith.addf %91, %93 : vector<32x256xf32>
    %cst_22 = arith.constant dense<0.000000e+00> : vector<32xf32>
    %95 = vector.multi_reduction <add>, %94, %cst_22 [1] : vector<32x256xf32> to vector<32xf32>
    %96 = vector.shape_cast %95 : vector<32xf32> to vector<32x1xf32>
    %cst_23 = arith.constant 2.560000e+02 : f32
    %97 = vector.broadcast %cst_23 : f32 to vector<32x1xf32>
    %98 = arith.divf %96, %97 : vector<32x1xf32>
    %99 = vector.broadcast %98 : vector<32x1xf32> to vector<32x256xf32>
    %100 = arith.subf %94, %99 : vector<32x256xf32>
    %101 = arith.mulf %100, %100 : vector<32x256xf32>
    %cst_24 = arith.constant dense<0.000000e+00> : vector<32xf32>
    %102 = vector.multi_reduction <add>, %101, %cst_24 [1] : vector<32x256xf32> to vector<32xf32>
    %103 = vector.shape_cast %102 : vector<32xf32> to vector<32x1xf32>
    %cst_25 = arith.constant 2.560000e+02 : f32
    %104 = vector.broadcast %cst_25 : f32 to vector<32x1xf32>
    %105 = arith.divf %103, %104 : vector<32x1xf32>
    %106 = vector.broadcast %98 : vector<32x1xf32> to vector<32x256xf32>
    %107 = arith.subf %94, %106 : vector<32x256xf32>
    %cst_26 = arith.constant 9.99999974E-6 : f32
    %108 = vector.broadcast %cst_26 : f32 to vector<32x1xf32>
    %109 = arith.addf %105, %108 : vector<32x1xf32>
    %110 = math.rsqrt %109 : vector<32x1xf32>
    %111 = vector.broadcast %110 : vector<32x1xf32> to vector<32x256xf32>
    %112 = arith.mulf %107, %111 : vector<32x256xf32>
    %113 = arith.truncf %112 : vector<32x256xf32> to vector<32x256xbf16>
    %c0_27 = arith.constant 0 : index
    %c0_28 = arith.constant 0 : index
    %114 = vector.load %arg8[%c0_27, %c0_28] : memref<256x256xbf16, #tpu.memory_space<vmem>>, vector<256x256xbf16>
    %cst_29 = arith.constant dense<0.000000e+00> : vector<32x256xf32>
    %115 = tpu.matmul %113, %114, %cst_29 {dimension_numbers = #tpu.dot_dimension_numbers<[1], [0], [0], [1], [0, 0, 1, 1], [], []>} : vector<32x256xbf16>, vector<256x256xbf16>, vector<32x256xf32> -> vector<32x256xf32>
    %c0_30 = arith.constant 0 : index
    %c1024 = arith.constant 1024 : index
    %116 = vector.load %arg14[%c0_30, %c1024] : memref<1x2816xf32, #tpu.memory_space<vmem>>, vector<1x256xf32>
    %117 = vector.broadcast %116 : vector<1x256xf32> to vector<32x256xf32>
    %118 = arith.addf %115, %117 : vector<32x256xf32>
    %119 = vector.shape_cast %118 : vector<32x256xf32> to vector<2x16x256xf32>
    %120 = vector.extract_strided_slice %1 {offsets = [0, 0], sizes = [16, 128], strides = [1, 1]} : vector<16x256xf32> to vector<16x128xf32>
    %121 = vector.extract_strided_slice %1 {offsets = [0, 128], sizes = [16, 128], strides = [1, 1]} : vector<16x256xf32> to vector<16x128xf32>
    %122 = vector.extract_strided_slice %119 {offsets = [0, 0, 0], sizes = [2, 16, 128], strides = [1, 1, 1]} : vector<2x16x256xf32> to vector<2x16x128xf32>
    %123 = vector.extract_strided_slice %119 {offsets = [0, 0, 128], sizes = [2, 16, 128], strides = [1, 1, 1]} : vector<2x16x256xf32> to vector<2x16x128xf32>
    %124 = vector.shape_cast %120 : vector<16x128xf32> to vector<1x16x128xf32>
    %125 = vector.broadcast %124 : vector<1x16x128xf32> to vector<2x16x128xf32>
    %126 = arith.mulf %122, %125 : vector<2x16x128xf32>
    %127 = vector.shape_cast %121 : vector<16x128xf32> to vector<1x16x128xf32>
    %128 = vector.broadcast %127 : vector<1x16x128xf32> to vector<2x16x128xf32>
    %129 = arith.mulf %123, %128 : vector<2x16x128xf32>
    %130 = arith.subf %126, %129 : vector<2x16x128xf32>
    %131 = vector.shape_cast %121 : vector<16x128xf32> to vector<1x16x128xf32>
    %132 = vector.broadcast %131 : vector<1x16x128xf32> to vector<2x16x128xf32>
    %133 = arith.mulf %122, %132 : vector<2x16x128xf32>
    %134 = vector.shape_cast %120 : vector<16x128xf32> to vector<1x16x128xf32>
    %135 = vector.broadcast %134 : vector<1x16x128xf32> to vector<2x16x128xf32>
    %136 = arith.mulf %123, %135 : vector<2x16x128xf32>
    %137 = arith.addf %133, %136 : vector<2x16x128xf32>
    %138 = tpu.concatenate %130, %137 in 2 : vector<2x16x128xf32>, vector<2x16x128xf32> -> vector<2x16x256xf32>
    %c0_31 = arith.constant 0 : index
    %c0_32 = arith.constant 0 : index
    %139 = vector.load %arg2[%c0_31, %c0_32] : memref<128x64xf32, #tpu.memory_space<vmem>>, vector<128x64xf32>
    %c0_33 = arith.constant 0 : index
    %c0_34 = arith.constant 0 : index
    %140 = vector.load %arg3[%c0_33, %c0_34] : memref<128x64xf32, #tpu.memory_space<vmem>>, vector<128x64xf32>
    %141 = arith.addf %139, %140 : vector<128x64xf32>
    %142 = arith.truncf %141 : vector<128x64xf32> to vector<128x64xbf16>
    %c0_35 = arith.constant 0 : index
    %c0_36 = arith.constant 0 : index
    %143 = vector.load %arg9[%c0_35, %c0_36] : memref<64x256xbf16, #tpu.memory_space<vmem>>, vector<64x256xbf16>
    %cst_37 = arith.constant dense<0.000000e+00> : vector<128x256xf32>
    %144 = tpu.matmul %142, %143, %cst_37 {dimension_numbers = #tpu.dot_dimension_numbers<[1], [0], [0], [1], [0, 0, 1, 1], [], []>} : vector<128x64xbf16>, vector<64x256xbf16>, vector<128x256xf32> -> vector<128x256xf32>
    %c0_38 = arith.constant 0 : index
    %c1280 = arith.constant 1280 : index
    %145 = vector.load %arg14[%c0_38, %c1280] : memref<1x2816xf32, #tpu.memory_space<vmem>>, vector<1x256xf32>
    %146 = vector.broadcast %145 : vector<1x256xf32> to vector<128x256xf32>
    %147 = arith.addf %144, %146 : vector<128x256xf32>
    %148 = vector.shape_cast %147 : vector<128x256xf32> to vector<2x64x256xf32>
    %149 = vector.extract_strided_slice %2 {offsets = [0, 0], sizes = [64, 128], strides = [1, 1]} : vector<64x256xf32> to vector<64x128xf32>
    %150 = vector.extract_strided_slice %2 {offsets = [0, 128], sizes = [64, 128], strides = [1, 1]} : vector<64x256xf32> to vector<64x128xf32>
    %151 = vector.extract_strided_slice %148 {offsets = [0, 0, 0], sizes = [2, 64, 128], strides = [1, 1, 1]} : vector<2x64x256xf32> to vector<2x64x128xf32>
    %152 = vector.extract_strided_slice %148 {offsets = [0, 0, 128], sizes = [2, 64, 128], strides = [1, 1, 1]} : vector<2x64x256xf32> to vector<2x64x128xf32>
    %153 = vector.shape_cast %149 : vector<64x128xf32> to vector<1x64x128xf32>
    %154 = vector.broadcast %153 : vector<1x64x128xf32> to vector<2x64x128xf32>
    %155 = arith.mulf %151, %154 : vector<2x64x128xf32>
    %156 = vector.shape_cast %150 : vector<64x128xf32> to vector<1x64x128xf32>
    %157 = vector.broadcast %156 : vector<1x64x128xf32> to vector<2x64x128xf32>
    %158 = arith.mulf %152, %157 : vector<2x64x128xf32>
    %159 = arith.subf %155, %158 : vector<2x64x128xf32>
    %160 = vector.shape_cast %150 : vector<64x128xf32> to vector<1x64x128xf32>
    %161 = vector.broadcast %160 : vector<1x64x128xf32> to vector<2x64x128xf32>
    %162 = arith.mulf %151, %161 : vector<2x64x128xf32>
    %163 = vector.shape_cast %149 : vector<64x128xf32> to vector<1x64x128xf32>
    %164 = vector.broadcast %163 : vector<1x64x128xf32> to vector<2x64x128xf32>
    %165 = arith.mulf %152, %164 : vector<2x64x128xf32>
    %166 = arith.addf %162, %165 : vector<2x64x128xf32>
    %167 = tpu.concatenate %159, %166 in 2 : vector<2x64x128xf32>, vector<2x64x128xf32> -> vector<2x64x256xf32>
    %c0_39 = arith.constant 0 : index
    %c0_40 = arith.constant 0 : index
    %168 = vector.load %arg2[%c0_39, %c0_40] : memref<128x64xf32, #tpu.memory_space<vmem>>, vector<128x64xf32>
    %169 = arith.truncf %168 : vector<128x64xf32> to vector<128x64xbf16>
    %c0_41 = arith.constant 0 : index
    %c0_42 = arith.constant 0 : index
    %170 = vector.load %arg10[%c0_41, %c0_42] : memref<64x256xbf16, #tpu.memory_space<vmem>>, vector<64x256xbf16>
    %cst_43 = arith.constant dense<0.000000e+00> : vector<128x256xf32>
    %171 = tpu.matmul %169, %170, %cst_43 {dimension_numbers = #tpu.dot_dimension_numbers<[1], [0], [0], [1], [0, 0, 1, 1], [], []>} : vector<128x64xbf16>, vector<64x256xbf16>, vector<128x256xf32> -> vector<128x256xf32>
    %c0_44 = arith.constant 0 : index
    %c1536 = arith.constant 1536 : index
    %172 = vector.load %arg14[%c0_44, %c1536] : memref<1x2816xf32, #tpu.memory_space<vmem>>, vector<1x256xf32>
    %173 = vector.broadcast %172 : vector<1x256xf32> to vector<128x256xf32>
    %174 = arith.addf %171, %173 : vector<128x256xf32>
    %175 = vector.shape_cast %174 : vector<128x256xf32> to vector<2x64x256xf32>
    %176 = arith.truncf %138 : vector<2x16x256xf32> to vector<2x16x256xbf16>
    %177 = arith.truncf %167 : vector<2x64x256xf32> to vector<2x64x256xbf16>
    "tpu.trace_start"() <{level = 10 : i32, message = "bqd,bkd->bqk"}> : () -> ()
    %cst_45 = arith.constant dense<0.000000e+00> : vector<2x16x64xf32>
    %178 = tpu.matmul %176, %177, %cst_45 {dimension_numbers = #tpu.dot_dimension_numbers<[2], [2], [1], [1], [0, 0, 0, 1, 1, 1], [0], [0]>} : vector<2x16x256xbf16>, vector<2x64x256xbf16>, vector<2x16x64xf32> -> vector<2x16x64xf32>
    "tpu.trace_stop"() : () -> ()
    %cst_46 = arith.constant dense<0xFF800000> : vector<2x16xf32>
    %179 = vector.multi_reduction <maximumf>, %178, %cst_46 [2] : vector<2x16x64xf32> to vector<2x16xf32>
    %180 = vector.shape_cast %179 : vector<2x16xf32> to vector<2x16x1xf32>
    %181 = vector.broadcast %180 : vector<2x16x1xf32> to vector<2x16x64xf32>
    %182 = arith.subf %178, %181 : vector<2x16x64xf32>
    %183 = math.exp %182 : vector<2x16x64xf32>
    %cst_47 = arith.constant dense<0.000000e+00> : vector<2x16xf32>
    %184 = vector.multi_reduction <add>, %183, %cst_47 [2] : vector<2x16x64xf32> to vector<2x16xf32>
    %185 = vector.shape_cast %184 : vector<2x16xf32> to vector<2x16x1xf32>
    %186 = tpu.reciprocal %185 {approx = true} : vector<2x16x1xf32> -> vector<2x16x1xf32>
    %187 = vector.broadcast %186 : vector<2x16x1xf32> to vector<2x16x64xf32>
    %188 = arith.mulf %183, %187 : vector<2x16x64xf32>
    %189 = arith.truncf %188 : vector<2x16x64xf32> to vector<2x16x64xbf16>
    %190 = arith.truncf %175 : vector<2x64x256xf32> to vector<2x64x256xbf16>
    "tpu.trace_start"() <{level = 10 : i32, message = "bqk,bkd->bqd"}> : () -> ()
    %cst_48 = arith.constant dense<0.000000e+00> : vector<2x16x256xf32>
    %191 = tpu.matmul %189, %190, %cst_48 {dimension_numbers = #tpu.dot_dimension_numbers<[2], [1], [1], [2], [0, 0, 0, 1, 1, 2], [0], [0]>} : vector<2x16x64xbf16>, vector<2x64x256xbf16>, vector<2x16x256xf32> -> vector<2x16x256xf32>
    "tpu.trace_stop"() : () -> ()
    %192 = vector.shape_cast %191 : vector<2x16x256xf32> to vector<32x256xf32>
    %193 = arith.truncf %192 : vector<32x256xf32> to vector<32x256xbf16>
    %c0_49 = arith.constant 0 : index
    %c0_50 = arith.constant 0 : index
    %194 = vector.load %arg11[%c0_49, %c0_50] : memref<256x256xbf16, #tpu.memory_space<vmem>>, vector<256x256xbf16>
    %cst_51 = arith.constant dense<0.000000e+00> : vector<32x256xf32>
    %195 = tpu.matmul %193, %194, %cst_51 {dimension_numbers = #tpu.dot_dimension_numbers<[1], [0], [0], [1], [0, 0, 1, 1], [], []>} : vector<32x256xbf16>, vector<256x256xbf16>, vector<32x256xf32> -> vector<32x256xf32>
    %196 = arith.addf %94, %195 : vector<32x256xf32>
    %c0_52 = arith.constant 0 : index
    %c1792 = arith.constant 1792 : index
    %197 = vector.load %arg14[%c0_52, %c1792] : memref<1x2816xf32, #tpu.memory_space<vmem>>, vector<1x256xf32>
    %198 = vector.broadcast %197 : vector<1x256xf32> to vector<32x256xf32>
    %199 = arith.addf %196, %198 : vector<32x256xf32>
    %cst_53 = arith.constant dense<0.000000e+00> : vector<32xf32>
    %200 = vector.multi_reduction <add>, %199, %cst_53 [1] : vector<32x256xf32> to vector<32xf32>
    %201 = vector.shape_cast %200 : vector<32xf32> to vector<32x1xf32>
    %cst_54 = arith.constant 2.560000e+02 : f32
    %202 = vector.broadcast %cst_54 : f32 to vector<32x1xf32>
    %203 = arith.divf %201, %202 : vector<32x1xf32>
    %204 = vector.broadcast %203 : vector<32x1xf32> to vector<32x256xf32>
    %205 = arith.subf %199, %204 : vector<32x256xf32>
    %206 = arith.mulf %205, %205 : vector<32x256xf32>
    %cst_55 = arith.constant dense<0.000000e+00> : vector<32xf32>
    %207 = vector.multi_reduction <add>, %206, %cst_55 [1] : vector<32x256xf32> to vector<32xf32>
    %208 = vector.shape_cast %207 : vector<32xf32> to vector<32x1xf32>
    %cst_56 = arith.constant 2.560000e+02 : f32
    %209 = vector.broadcast %cst_56 : f32 to vector<32x1xf32>
    %210 = arith.divf %208, %209 : vector<32x1xf32>
    %211 = vector.broadcast %203 : vector<32x1xf32> to vector<32x256xf32>
    %212 = arith.subf %199, %211 : vector<32x256xf32>
    %cst_57 = arith.constant 9.99999974E-6 : f32
    %213 = vector.broadcast %cst_57 : f32 to vector<32x1xf32>
    %214 = arith.addf %210, %213 : vector<32x1xf32>
    %215 = math.rsqrt %214 : vector<32x1xf32>
    %216 = vector.broadcast %215 : vector<32x1xf32> to vector<32x256xf32>
    %217 = arith.mulf %212, %216 : vector<32x256xf32>
    %218 = arith.truncf %217 : vector<32x256xf32> to vector<32x256xbf16>
    %c0_58 = arith.constant 0 : index
    %c0_59 = arith.constant 0 : index
    %219 = vector.load %arg12[%c0_58, %c0_59] : memref<256x512xbf16, #tpu.memory_space<vmem>>, vector<256x512xbf16>
    %cst_60 = arith.constant dense<0.000000e+00> : vector<32x512xf32>
    %220 = tpu.matmul %218, %219, %cst_60 {dimension_numbers = #tpu.dot_dimension_numbers<[1], [0], [0], [1], [0, 0, 1, 1], [], []>} : vector<32x256xbf16>, vector<256x512xbf16>, vector<32x512xf32> -> vector<32x512xf32>
    %c0_61 = arith.constant 0 : index
    %c2048 = arith.constant 2048 : index
    %221 = vector.load %arg14[%c0_61, %c2048] : memref<1x2816xf32, #tpu.memory_space<vmem>>, vector<1x512xf32>
    %222 = vector.broadcast %221 : vector<1x512xf32> to vector<32x512xf32>
    %223 = arith.addf %220, %222 : vector<32x512xf32>
    %cst_62 = arith.constant 0.000000e+00 : f32
    %224 = vector.broadcast %cst_62 : f32 to vector<32x512xf32>
    %225 = arith.maximumf %223, %224 : vector<32x512xf32>
    %226 = arith.truncf %225 : vector<32x512xf32> to vector<32x512xbf16>
    %c0_63 = arith.constant 0 : index
    %c0_64 = arith.constant 0 : index
    %227 = vector.load %arg13[%c0_63, %c0_64] : memref<512x256xbf16, #tpu.memory_space<vmem>>, vector<512x256xbf16>
    %cst_65 = arith.constant dense<0.000000e+00> : vector<32x256xf32>
    %228 = tpu.matmul %226, %227, %cst_65 {dimension_numbers = #tpu.dot_dimension_numbers<[1], [0], [0], [1], [0, 0, 1, 1], [], []>} : vector<32x512xbf16>, vector<512x256xbf16>, vector<32x256xf32> -> vector<32x256xf32>
    %229 = arith.addf %199, %228 : vector<32x256xf32>
    %c0_66 = arith.constant 0 : index
    %c2560 = arith.constant 2560 : index
    %230 = vector.load %arg14[%c0_66, %c2560] : memref<1x2816xf32, #tpu.memory_space<vmem>>, vector<1x256xf32>
    %231 = vector.broadcast %230 : vector<1x256xf32> to vector<32x256xf32>
    %232 = arith.addf %229, %231 : vector<32x256xf32>
    %c0_67 = arith.constant 0 : index
    %c0_68 = arith.constant 0 : index
    %233 = vector.load %arg15[%c0_67, %c0_68] : memref<32x256xf32, #tpu.memory_space<vmem>>, vector<32x256xf32>
    tpu.vector_store %arg15[%c0_67, %c0_68], %232 {strides = array<i32>} : memref<32x256xf32, #tpu.memory_space<vmem>>, vector<32x256xf32>,
    return
  }
  func.func @transform_0(%arg0: i32) -> (i32, i32) {
    %c0_i32 = arith.constant 0 : i32
    %c0_i32_0 = arith.constant 0 : i32
    %c0_i32_1 = arith.constant 0 : i32
    return %c0_i32, %c0_i32_0 : i32, i32
  }
  func.func @transform_1(%arg0: i32) -> (i32, i32) {
    %c0_i32 = arith.constant 0 : i32
    %c0_i32_0 = arith.constant 0 : i32
    %c0_i32_1 = arith.constant 0 : i32
    return %c0_i32, %c0_i32_0 : i32, i32
  }
  func.func @transform_2(%arg0: i32) -> (i32, i32) {
    %c0_i32 = arith.constant 0 : i32
    %c0_i32_0 = arith.constant 0 : i32
    %c0_i32_1 = arith.constant 0 : i32
    return %c0_i32, %c0_i32_0 : i32, i32
  }
  func.func @transform_3(%arg0: i32) -> (i32, i32) {
    %c0_i32 = arith.constant 0 : i32
    %c0_i32_0 = arith.constant 0 : i32
    %c0_i32_1 = arith.constant 0 : i32
    return %c0_i32, %c0_i32_0 : i32, i32
  }
  func.func @transform_4(%arg0: i32) -> (i32, i32) {
    %c0_i32 = arith.constant 0 : i32
    %c0_i32_0 = arith.constant 0 : i32
    %c0_i32_1 = arith.constant 0 : i32
    return %c0_i32, %c0_i32_0 : i32, i32
  }
  func.func @transform_5(%arg0: i32) -> (i32, i32) {
    %c0_i32 = arith.constant 0 : i32
    %c0_i32_0 = arith.constant 0 : i32
    %c0_i32_1 = arith.constant 0 : i32
    return %c0_i32, %c0_i32_0 : i32, i32
  }
  func.func @transform_6(%arg0: i32) -> (i32, i32) {
    %c0_i32 = arith.constant 0 : i32
    %c0_i32_0 = arith.constant 0 : i32
    %c0_i32_1 = arith.constant 0 : i32
    return %c0_i32, %c0_i32_0 : i32, i32
  }
  func.func @transform_7(%arg0: i32) -> (i32, i32) {
    %c0_i32 = arith.constant 0 : i32
    %c0_i32_0 = arith.constant 0 : i32
    %c0_i32_1 = arith.constant 0 : i32
    return %c0_i32, %c0_i32_0 : i32, i32
  }
  func.func @transform_8(%arg0: i32) -> (i32, i32) {
    %c0_i32 = arith.constant 0 : i32
    %c0_i32_0 = arith.constant 0 : i32
    %c0_i32_1 = arith.constant 0 : i32
    return %c0_i32, %c0_i32_0 : i32, i32
  }
  func.func @transform_9(%arg0: i32) -> (i32, i32) {
    %c0_i32 = arith.constant 0 : i32
    %c0_i32_0 = arith.constant 0 : i32
    %c0_i32_1 = arith.constant 0 : i32
    return %c0_i32, %c0_i32_0 : i32, i32
  }
  func.func @transform_10(%arg0: i32) -> (i32, i32) {
    %c0_i32 = arith.constant 0 : i32
    %c0_i32_0 = arith.constant 0 : i32
    %c0_i32_1 = arith.constant 0 : i32
    return %c0_i32, %c0_i32_0 : i32, i32
  }
  func.func @transform_11(%arg0: i32) -> (i32, i32) {
    %c0_i32 = arith.constant 0 : i32
    %c0_i32_0 = arith.constant 0 : i32
    %c0_i32_1 = arith.constant 0 : i32
    return %c0_i32, %c0_i32_0 : i32, i32
  }
  func.func @transform_12(%arg0: i32) -> (i32, i32) {
    %c0_i32 = arith.constant 0 : i32
    %c0_i32_0 = arith.constant 0 : i32
    %c0_i32_1 = arith.constant 0 : i32
    return %c0_i32, %c0_i32_0 : i32, i32
  }
  func.func @transform_13(%arg0: i32) -> (i32, i32) {
    %c0_i32 = arith.constant 0 : i32
    %c0_i32_0 = arith.constant 0 : i32
    %c0_i32_1 = arith.constant 0 : i32
    return %c0_i32, %c0_i32_0 : i32, i32
  }
  func.func @transform_14(%arg0: i32) -> (i32, i32) {
    %c0_i32 = arith.constant 0 : i32
    %c0_i32_0 = arith.constant 0 : i32
    %c0_i32_1 = arith.constant 0 : i32
    return %c0_i32, %c0_i32_0 : i32, i32
  }
}

</mosaic_0001>

<llo_original>
// kernel: tpu_custom_call.1
$region0: #{tpu_custom_call.1}
  #allocation0 [shape = 'u32[]', space=smem, size = 0x4, offset = 0x4, fixed_abs, tag = 'smem constant byte address 0x4 - core index']
  #allocation1 [shape = 'u32[144,128]{1,0:T(1,128)}', space=vmem, size = 0x12000, scoped, tag = 'internal scratch']
  %s0 = inlined_call_operand.hbm [shape: f32[32,256], index: 0, kind: input, shape index: {}]
  %s1 = inlined_call_operand.vmem [shape: f32[128,64], index: 1, kind: input, shape index: {}]
  %s2 = inlined_call_operand.vmem [shape: f32[128,64], index: 2, kind: input, shape index: {}]
  %s3 = inlined_call_operand.hbm [shape: f32[16,256], index: 3, kind: input, shape index: {}]
  %s4 = inlined_call_operand.vmem [shape: f32[64,256], index: 4, kind: input, shape index: {}]
  %s5 = inlined_call_operand.hbm [shape: bf16[256,768], index: 5, kind: input, shape index: {}]
  %s6 = inlined_call_operand.vmem [shape: bf16[256,256], index: 6, kind: input, shape index: {}]
  %s7 = inlined_call_operand.hbm [shape: bf16[256,256], index: 7, kind: input, shape index: {}]
  %s8 = inlined_call_operand.hbm [shape: bf16[64,256], index: 8, kind: input, shape index: {}]
  %s9 = inlined_call_operand.hbm [shape: bf16[64,256], index: 9, kind: input, shape index: {}]
  %s10 = inlined_call_operand.hbm [shape: bf16[256,256], index: 10, kind: input, shape index: {}]
  %s11 = inlined_call_operand.hbm [shape: bf16[256,512], index: 11, kind: input, shape index: {}]
  %s12 = inlined_call_operand.hbm [shape: bf16[512,256], index: 12, kind: input, shape index: {}]
  %s13 = inlined_call_operand.hbm [shape: f32[1,2816], index: 13, kind: input, shape index: {}]
  %s14 = inlined_call_operand.hbm [shape: f32[32,256], index: 14, kind: output, shape index: {}]
  %s15 = sld [smem:[#allocation0]]
  $region106: #{tpu_custom_call.1} parent=0
    _
  %s17 = ssub.s32 1, %s15
  %s18 = scalar_select 0, %s17, %s15
  $region1: #{tpu_custom_call.1} parent=0
    #allocation2 [shape = 'u8[32768]{0}', space=vmem, size = 0x8000, scoped, tag = 'input window, operand 0, single buffered']
    #allocation3 [shape = 's32[1]{0}', space=sflag, size = 0x4, scoped, tag = 'scoped memory for tpu_custom_call.1']
    #allocation4 [shape = 's32[1]{0}', space=sflag, size = 0x4, scoped, tag = 'scoped memory for tpu_custom_call.1']
    #allocation5 [shape = 'u8[16384]{0}', space=vmem, size = 0x4000, scoped, tag = 'input window, operand 3, single buffered']
    #allocation6 [shape = 's32[1]{0}', space=sflag, size = 0x4, scoped, tag = 'scoped memory for tpu_custom_call.1']
    #allocation7 [shape = 'u8[393216]{0}', space=vmem, size = 0x60000, scoped, tag = 'input window, operand 5, single buffered']
    #allocation8 [shape = 'u8[131072]{0}', space=vmem, size = 0x20000, scoped, tag = 'input window, operand 7, single buffered']
    #allocation9 [shape = 's32[1]{0}', space=sflag, size = 0x4, scoped, tag = 'scoped memory for tpu_custom_call.1']
    #allocation10 [shape = 'u8[32768]{0}', space=vmem, size = 0x8000, scoped, tag = 'input window, operand 8, single buffered']
    #allocation11 [shape = 'u8[32768]{0}', space=vmem, size = 0x8000, scoped, tag = 'input window, operand 9, single buffered']
    #allocation12 [shape = 's32[1]{0}', space=sflag, size = 0x4, scoped, tag = 'scoped memory for tpu_custom_call.1']
    #allocation13 [shape = 'u8[131072]{0}', space=vmem, size = 0x20000, scoped, tag = 'input window, operand 10, single buffered']
    #allocation14 [shape = 'u8[262144]{0}', space=vmem, size = 0x40000, scoped, tag = 'input window, operand 11, single buffered']
    #allocation15 [shape = 's32[1]{0}', space=sflag, size = 0x4, scoped, tag = 'scoped memory for tpu_custom_call.1']
    #allocation16 [shape = 'u8[262144]{0}', space=vmem, size = 0x40000, scoped, tag = 'input window, operand 12, single buffered']
    #allocation17 [shape = 'u8[11264]{0}', space=vmem, size = 0x2c00, scoped, tag = 'input window, operand 13, single buffered']
    #allocation18 [shape = 's32[1]{0}', space=sflag, size = 0x4, scoped, tag = 'scoped memory for tpu_custom_call.1']
    #allocation19 [shape = 'u8[32768]{0}', space=vmem, size = 0x8000, scoped, tag = 'output window, operand 0, single buffered']
    %19 = vsyncpa [#allocation3], 0
    %20 = vsyncpa [#allocation6], 0
    %21 = vsyncpa [#allocation9], 0
    %22 = vsyncpa [#allocation12], 0
    %23 = vsyncpa [#allocation15], 0
    %24 = vsyncpa [#allocation18], 0
    %25 = vsyncpa [#allocation4], 0
    // Predicated region
    $region2: #{tpu_custom_call.1} parent=1 // pred_check
      _
    $region3: #{tpu_custom_call.1} parent=1 // pred_check_branch
      %27 = sbr.rel (0) target = $region5
    $region4: #{tpu_custom_call.1} parent=1 // pred_region
      %s29 = ssub.s32 1024, 1024
      %30 = vsyncadd [#allocation3], %s29
      %s31 = sshll.u32 [#allocation2], 4
      %s32 = int_to_ptr.vmem [resolvable:$true] %s31
      %37 = dma.hbm_to_vmem [thread:$0]  %s0, 1024, %s32, [#allocation3], 256, 256, 16
    $region5: #{tpu_custom_call.1} parent=1 // pred_fallthru
      _
    // Predicated region
    $region6: #{tpu_custom_call.1} parent=1 // pred_check
      _
    $region7: #{tpu_custom_call.1} parent=1 // pred_check_branch
      %39 = sbr.rel (0) target = $region9
    $region8: #{tpu_custom_call.1} parent=1 // pred_region
      _
    $region9: #{tpu_custom_call.1} parent=1 // pred_fallthru
      _
    // Predicated region
    $region10: #{tpu_custom_call.1} parent=1 // pred_check
      _
    $region11: #{tpu_custom_call.1} parent=1 // pred_check_branch
      %41 = sbr.rel (0) target = $region13
    $region12: #{tpu_custom_call.1} parent=1 // pred_region
      _
    $region13: #{tpu_custom_call.1} parent=1 // pred_fallthru
      _
    // Predicated region
    $region14: #{tpu_custom_call.1} parent=1 // pred_check
      _
    $region15: #{tpu_custom_call.1} parent=1 // pred_check_branch
      %43 = sbr.rel (0) target = $region17
    $region16: #{tpu_custom_call.1} parent=1 // pred_region
      %s45 = ssub.s32 512, 512
      %46 = vsyncadd [#allocation6], %s45
      %s47 = sshll.u32 [#allocation5], 4
      %s48 = int_to_ptr.vmem [resolvable:$true] %s47
      %53 = dma.hbm_to_vmem [thread:$0]  %s3, 512, %s48, [#allocation6], 256, 256, 16
    $region17: #{tpu_custom_call.1} parent=1 // pred_fallthru
      _
    // Predicated region
    $region18: #{tpu_custom_call.1} parent=1 // pred_check
      _
    $region19: #{tpu_custom_call.1} parent=1 // pred_check_branch
      %55 = sbr.rel (0) target = $region21
    $region20: #{tpu_custom_call.1} parent=1 // pred_region
      _
    $region21: #{tpu_custom_call.1} parent=1 // pred_fallthru
      _
    // Predicated region
    $region22: #{tpu_custom_call.1} parent=1 // pred_check
      _
    $region23: #{tpu_custom_call.1} parent=1 // pred_check_branch
      %57 = sbr.rel (0) target = $region25
    $region24: #{tpu_custom_call.1} parent=1 // pred_region
      %s59 = ssub.s32 12288, 12288
      %60 = vsyncadd [#allocation6], %s59
      %s61 = sshll.u32 [#allocation7], 4
      %s62 = int_to_ptr.vmem [resolvable:$true] %s61
      %67 = dma.hbm_to_vmem [thread:$0]  %s5, 12288, %s62, [#allocation6], 384, 384, 24
    $region25: #{tpu_custom_call.1} parent=1 // pred_fallthru
      _
    // Predicated region
    $region26: #{tpu_custom_call.1} parent=1 // pred_check
      _
    $region27: #{tpu_custom_call.1} parent=1 // pred_check_branch
      %69 = sbr.rel (0) target = $region29
    $region28: #{tpu_custom_call.1} parent=1 // pred_region
      _
    $region29: #{tpu_custom_call.1} parent=1 // pred_fallthru
      _
    // Predicated region
    $region30: #{tpu_custom_call.1} parent=1 // pred_check
      _
    $region31: #{tpu_custom_call.1} parent=1 // pred_check_branch
      %71 = sbr.rel (0) target = $region33
    $region32: #{tpu_custom_call.1} parent=1 // pred_region
      %s73 = ssub.s32 4096, 4096
      %74 = vsyncadd [#allocation9], %s73
      %s75 = sshll.u32 [#allocation8], 4
      %s76 = int_to_ptr.vmem [resolvable:$true] %s75
      %81 = dma.hbm_to_vmem [thread:$0]  %s7, 4096, %s76, [#allocation9], 128, 128, 8
    $region33: #{tpu_custom_call.1} parent=1 // pred_fallthru
      _
    // Predicated region
    $region34: #{tpu_custom_call.1} parent=1 // pred_check
      _
    $region35: #{tpu_custom_call.1} parent=1 // pred_check_branch
      %83 = sbr.rel (0) target = $region37
    $region36: #{tpu_custom_call.1} parent=1 // pred_region
      %s85 = ssub.s32 1024, 1024
      %86 = vsyncadd [#allocation9], %s85
      %s87 = sshll.u32 [#allocation10], 4
      %s88 = int_to_ptr.vmem [resolvable:$true] %s87
      %93 = dma.hbm_to_vmem [thread:$0]  %s8, 1024, %s88, [#allocation9], 128, 128, 8
    $region37: #{tpu_custom_call.1} parent=1 // pred_fallthru
      _
    // Predicated region
    $region38: #{tpu_custom_call.1} parent=1 // pred_check
      _
    $region39: #{tpu_custom_call.1} parent=1 // pred_check_branch
      %95 = sbr.rel (0) target = $region41
    $region40: #{tpu_custom_call.1} parent=1 // pred_region
      %s97 = ssub.s32 1024, 1024
      %98 = vsyncadd [#allocation12], %s97
      %s99 = sshll.u32 [#allocation11], 4
      %s100 = int_to_ptr.vmem [resolvable:$true] %s99
      %105 = dma.hbm_to_vmem [thread:$0]  %s9, 1024, %s100, [#allocation12], 128, 128, 8
    $region41: #{tpu_custom_call.1} parent=1 // pred_fallthru
      _
    // Predicated region
    $region42: #{tpu_custom_call.1} parent=1 // pred_check
      _
    $region43: #{tpu_custom_call.1} parent=1 // pred_check_branch
      %107 = sbr.rel (0) target = $region45
    $region44: #{tpu_custom_call.1} parent=1 // pred_region
      %s109 = ssub.s32 4096, 4096
      %110 = vsyncadd [#allocation12], %s109
      %s111 = sshll.u32 [#allocation13], 4
      %s112 = int_to_ptr.vmem [resolvable:$true] %s111
      %117 = dma.hbm_to_vmem [thread:$0]  %s10, 4096, %s112, [#allocation12], 128, 128, 8
    $region45: #{tpu_custom_call.1} parent=1 // pred_fallthru
      _
    // Predicated region
    $region46: #{tpu_custom_call.1} parent=1 // pred_check
      _
    $region47: #{tpu_custom_call.1} parent=1 // pred_check_branch
      %119 = sbr.rel (0) target = $region49
    $region48: #{tpu_custom_call.1} parent=1 // pred_region
      %s121 = ssub.s32 8192, 8192
      %122 = vsyncadd [#allocation15], %s121
      %s123 = sshll.u32 [#allocation14], 4
      %s124 = int_to_ptr.vmem [resolvable:$true] %s123
      %129 = dma.hbm_to_vmem [thread:$0]  %s11, 8192, %s124, [#allocation15], 256, 256, 16
    $region49: #{tpu_custom_call.1} parent=1 // pred_fallthru
      _
    // Predicated region
    $region50: #{tpu_custom_call.1} parent=1 // pred_check
      _
    $region51: #{tpu_custom_call.1} parent=1 // pred_check_branch
      %131 = sbr.rel (0) target = $region53
    $region52: #{tpu_custom_call.1} parent=1 // pred_region
      %s133 = ssub.s32 8192, 8192
      %134 = vsyncadd [#allocation15], %s133
      %s135 = sshll.u32 [#allocation16], 4
      %s136 = int_to_ptr.vmem [resolvable:$true] %s135
      %141 = dma.hbm_to_vmem [thread:$0]  %s12, 8192, %s136, [#allocation15], 128, 128, 8
    $region53: #{tpu_custom_call.1} parent=1 // pred_fallthru
      _
    // Predicated region
    $region54: #{tpu_custom_call.1} parent=1 // pred_check
      _
    $region55: #{tpu_custom_call.1} parent=1 // pred_check_branch
      %143 = sbr.rel (0) target = $region57
    $region56: #{tpu_custom_call.1} parent=1 // pred_region
      %s145 = ssub.s32 352, 352
      %146 = vsyncadd [#allocation18], %s145
      %s148 = sshll.u32 [#allocation17], 4
      %s149 = int_to_ptr.vmem [resolvable:$true] %s148
      %151 = dma.hbm_to_vmem [thread:$0]  %s13, 352, %s149, [#allocation18]
    $region57: #{tpu_custom_call.1} parent=1 // pred_fallthru
      _
    // Predicated region
    $region58: #{tpu_custom_call.1} parent=1 // pred_check
      _
    $region59: #{tpu_custom_call.1} parent=1 // pred_check_branch
      %153 = sbr.rel (0) target = $region61
    $region60: #{tpu_custom_call.1} parent=1 // pred_region
      %154 = dma.done [#allocation3], 1024
    $region61: #{tpu_custom_call.1} parent=1 // pred_fallthru
      _
    // Predicated region
    $region62: #{tpu_custom_call.1} parent=1 // pred_check
      _
    $region63: #{tpu_custom_call.1} parent=1 // pred_check_branch
      %156 = sbr.rel (0) target = $region65
    $region64: #{tpu_custom_call.1} parent=1 // pred_region
      %157 = dma.done [#allocation6], 512
    $region65: #{tpu_custom_call.1} parent=1 // pred_fallthru
      _
    // Predicated region
    $region66: #{tpu_custom_call.1} parent=1 // pred_check
      _
    $region67: #{tpu_custom_call.1} parent=1 // pred_check_branch
      %159 = sbr.rel (0) target = $region69
    $region68: #{tpu_custom_call.1} parent=1 // pred_region
      %160 = dma.done [#allocation6], 12288
    $region69: #{tpu_custom_call.1} parent=1 // pred_fallthru
      _
    // Predicated region
    $region70: #{tpu_custom_call.1} parent=1 // pred_check
      _
    $region71: #{tpu_custom_call.1} parent=1 // pred_check_branch
      %162 = sbr.rel (0) target = $region73
    $region72: #{tpu_custom_call.1} parent=1 // pred_region
      %163 = dma.done [#allocation9], 4096
    $region73: #{tpu_custom_call.1} parent=1 // pred_fallthru
      _
    // Predicated region
    $region74: #{tpu_custom_call.1} parent=1 // pred_check
      _
    $region75: #{tpu_custom_call.1} parent=1 // pred_check_branch
      %165 = sbr.rel (0) target = $region77
    $region76: #{tpu_custom_call.1} parent=1 // pred_region
      %166 = dma.done [#allocation9], 1024
    $region77: #{tpu_custom_call.1} parent=1 // pred_fallthru
      _
    // Predicated region
    $region78: #{tpu_custom_call.1} parent=1 // pred_check
      _
    $region79: #{tpu_custom_call.1} parent=1 // pred_check_branch
      %168 = sbr.rel (0) target = $region81
    $region80: #{tpu_custom_call.1} parent=1 // pred_region
      %169 = dma.done [#allocation12], 1024
    $region81: #{tpu_custom_call.1} parent=1 // pred_fallthru
      _
    // Predicated region
    $region82: #{tpu_custom_call.1} parent=1 // pred_check
      _
    $region83: #{tpu_custom_call.1} parent=1 // pred_check_branch
      %171 = sbr.rel (0) target = $region85
    $region84: #{tpu_custom_call.1} parent=1 // pred_region
      %172 = dma.done [#allocation12], 4096
    $region85: #{tpu_custom_call.1} parent=1 // pred_fallthru
      _
    // Predicated region
    $region86: #{tpu_custom_call.1} parent=1 // pred_check
      _
    $region87: #{tpu_custom_call.1} parent=1 // pred_check_branch
      %174 = sbr.rel (0) target = $region89
    $region88: #{tpu_custom_call.1} parent=1 // pred_region
      %175 = dma.done [#allocation15], 8192
    $region89: #{tpu_custom_call.1} parent=1 // pred_fallthru
      _
    // Predicated region
    $region90: #{tpu_custom_call.1} parent=1 // pred_check
      _
    $region91: #{tpu_custom_call.1} parent=1 // pred_check_branch
      %177 = sbr.rel (0) target = $region93
    $region92: #{tpu_custom_call.1} parent=1 // pred_region
      %178 = dma.done [#allocation15], 8192
    $region93: #{tpu_custom_call.1} parent=1 // pred_fallthru
      _
    // Predicated region
    $region94: #{tpu_custom_call.1} parent=1 // pred_check
      _
    $region95: #{tpu_custom_call.1} parent=1 // pred_check_branch
      %180 = sbr.rel (0) target = $region97
    $region96: #{tpu_custom_call.1} parent=1 // pred_region
      %181 = dma.done [#allocation18], 352
    $region97: #{tpu_custom_call.1} parent=1 // pred_fallthru
      _
    %v183 = vld [vmem:[#allocation2] sm:$0xff]
    %v184 = vld [vmem:[#allocation2 + $0x8] sm:$0xff]
    %v185 = vld [vmem:[#allocation2 + $0x10] sm:$0xff]
    %v186 = vld [vmem:[#allocation2 + $0x18] sm:$0xff]
    %v187 = vld [vmem:[#allocation2 + $0x20] sm:$0xff]
    %v188 = vld [vmem:[#allocation2 + $0x28] sm:$0xff]
    %v189 = vld [vmem:[#allocation2 + $0x30] sm:$0xff]
    %v190 = vld [vmem:[#allocation2 + $0x38] sm:$0xff]
    %v191 = vld [vmem:[#allocation5] sm:$0xff]
    %v192 = vld [vmem:[#allocation5 + $0x8] sm:$0xff]
    %v193 = vld [vmem:[#allocation5 + $0x10] sm:$0xff]
    %v194 = vld [vmem:[#allocation5 + $0x18] sm:$0xff]
    %v195 = vld [vmem:[%s4] sm:$0xff]
    %v196 = vld [vmem:[%s4 + $0x8] sm:$0xff]
    %v197 = vld [vmem:[%s4 + $0x10] sm:$0xff]
    %v198 = vld [vmem:[%s4 + $0x18] sm:$0xff]
    %v199 = vld [vmem:[%s4 + $0x20] sm:$0xff]
    %v200 = vld [vmem:[%s4 + $0x28] sm:$0xff]
    %v201 = vld [vmem:[%s4 + $0x30] sm:$0xff]
    %v202 = vld [vmem:[%s4 + $0x38] sm:$0xff]
    %v203 = vld [vmem:[%s4 + $0x40] sm:$0xff]
    %v204 = vld [vmem:[%s4 + $0x48] sm:$0xff]
    %v205 = vld [vmem:[%s4 + $0x50] sm:$0xff]
    %v206 = vld [vmem:[%s4 + $0x58] sm:$0xff]
    %v207 = vld [vmem:[%s4 + $0x60] sm:$0xff]
    %v208 = vld [vmem:[%s4 + $0x68] sm:$0xff]
    %v209 = vld [vmem:[%s4 + $0x70] sm:$0xff]
    %v210 = vld [vmem:[%s4 + $0x78] sm:$0xff]
    %v211 = vadd.f32 %v183, %v184
    %212 = vadd.xlane.f32.xlu0 %v211
    %v213 = vpop.xlane.xlu0 %212
    %v214 = vadd.f32 %v185, %v186
    %215 = vadd.xlane.f32.xlu0 %v214
    %v216 = vpop.xlane.xlu0 %215
    %v217 = vadd.f32 %v187, %v188
    %218 = vadd.xlane.f32.xlu0 %v217
    %v219 = vpop.xlane.xlu0 %218
    %v220 = vadd.f32 %v189, %v190
    %221 = vadd.xlane.f32.xlu0 %v220
    %v222 = vpop.xlane.xlu0 %221
    %v223 = vrcp.pop 256.0
    %v224 = vmul.f32 %v213, %v223
    %v225 = vmul.f32 %v216, %v223
    %v226 = vmul.f32 %v219, %v223
    %v227 = vmul.f32 %v222, %v223
    %v228 = vsub.f32 %v183, %v224
    %v229 = vsub.f32 %v184, %v224
    %v230 = vsub.f32 %v185, %v225
    %v231 = vsub.f32 %v186, %v225
    %v232 = vsub.f32 %v187, %v226
    %v233 = vsub.f32 %v188, %v226
    %v234 = vsub.f32 %v189, %v227
    %v235 = vsub.f32 %v190, %v227
    %v236 = vmul.f32 %v228, %v228
    %v237 = vmul.f32 %v229, %v229
    %v238 = vmul.f32 %v230, %v230
    %v239 = vmul.f32 %v231, %v231
    %v240 = vmul.f32 %v232, %v232
    %v241 = vmul.f32 %v233, %v233
    %v242 = vmul.f32 %v234, %v234
    %v243 = vmul.f32 %v235, %v235
    %v244 = vadd.f32 %v236, %v237
    %245 = vadd.xlane.f32.xlu0 %v244
    %v246 = vpop.xlane.xlu0 %245
    %v247 = vadd.f32 %v238, %v239
    %248 = vadd.xlane.f32.xlu0 %v247
    %v249 = vpop.xlane.xlu0 %248
    %v250 = vadd.f32 %v240, %v241
    %251 = vadd.xlane.f32.xlu0 %v250
    %v252 = vpop.xlane.xlu0 %251
    %v253 = vadd.f32 %v242, %v243
    %254 = vadd.xlane.f32.xlu0 %v253
    %v255 = vpop.xlane.xlu0 %254
    %v256 = vmul.f32 %v246, %v223
    %v257 = vmul.f32 %v249, %v223
    %v258 = vmul.f32 %v252, %v223
    %v259 = vmul.f32 %v255, %v223
    %v260 = vadd.f32 %v256, 1e-05
    %v261 = vadd.f32 %v257, 1e-05
    %v262 = vadd.f32 %v258, 1e-05
    %v263 = vadd.f32 %v259, 1e-05
    %v264 = vrsqrt.pop %v260
    %v265 = vrsqrt.pop %v261
    %v266 = vrsqrt.pop %v262
    %v267 = vrsqrt.pop %v263
    %v268 = vmul.f32 %v228, %v264
    %v269 = vmul.f32 %v229, %v264
    %v270 = vmul.f32 %v230, %v265
    %v271 = vmul.f32 %v231, %v265
    %v272 = vmul.f32 %v232, %v266
    %v273 = vmul.f32 %v233, %v266
    %v274 = vmul.f32 %v234, %v267
    %v275 = vmul.f32 %v235, %v267
    %v276 = vpack.c.bf16 %v270, %v268
    %v277 = vpack.c.bf16 %v271, %v269
    %v278 = vpack.c.bf16 %v274, %v272
    %v279 = vpack.c.bf16 %v275, %v273
    %v280 = vld [vmem:[#allocation7] sm:$0xff]
    %v281 = vld [vmem:[#allocation7 + $0x8] sm:$0xff]
    %v282 = vld [vmem:[#allocation7 + $0x10] sm:$0xff]
    %v283 = vld [vmem:[#allocation7 + $0x18] sm:$0xff]
    %v284 = vld [vmem:[#allocation7 + $0x20] sm:$0xff]
    %v285 = vld [vmem:[#allocation7 + $0x28] sm:$0xff]
    %v286 = vld [vmem:[#allocation7 + $0x30] sm:$0xff]
    %v287 = vld [vmem:[#allocation7 + $0x38] sm:$0xff]
    %v288 = vld [vmem:[#allocation7 + $0x40] sm:$0xff]
    %v289 = vld [vmem:[#allocation7 + $0x48] sm:$0xff]
    %v290 = vld [vmem:[#allocation7 + $0x50] sm:$0xff]
    %v291 = vld [vmem:[#allocation7 + $0x58] sm:$0xff]
    %v292 = vld [vmem:[#allocation7 + $0x60] sm:$0xff]
    %v293 = vld [vmem:[#allocation7 + $0x68] sm:$0xff]
    %v294 = vld [vmem:[#allocation7 + $0x70] sm:$0xff]
    %v295 = vld [vmem:[#allocation7 + $0x78] sm:$0xff]
    %v296 = vld [vmem:[#allocation7 + $0x80] sm:$0xff]
    %v297 = vld [vmem:[#allocation7 + $0x88] sm:$0xff]
    %v298 = vld [vmem:[#allocation7 + $0x90] sm:$0xff]
    %v299 = vld [vmem:[#allocation7 + $0x98] sm:$0xff]
    %v300 = vld [vmem:[#allocation7 + $0xa0] sm:$0xff]
    %v301 = vld [vmem:[#allocation7 + $0xa8] sm:$0xff]
    %v302 = vld [vmem:[#allocation7 + $0xb0] sm:$0xff]
    %v303 = vld [vmem:[#allocation7 + $0xb8] sm:$0xff]
    %v304 = vld [vmem:[#allocation7 + $0xc0] sm:$0xff]
    %v305 = vld [vmem:[#allocation7 + $0xc8] sm:$0xff]
    %v306 = vld [vmem:[#allocation7 + $0xd0] sm:$0xff]
    %v307 = vld [vmem:[#allocation7 + $0xd8] sm:$0xff]
    %v308 = vld [vmem:[#allocation7 + $0xe0] sm:$0xff]
    %v309 = vld [vmem:[#allocation7 + $0xe8] sm:$0xff]
    %v310 = vld [vmem:[#allocation7 + $0xf0] sm:$0xff]
    %v311 = vld [vmem:[#allocation7 + $0xf8] sm:$0xff]
    %v312 = vld [vmem:[#allocation7 + $0x100] sm:$0xff]
    %v313 = vld [vmem:[#allocation7 + $0x108] sm:$0xff]
    %v314 = vld [vmem:[#allocation7 + $0x110] sm:$0xff]
    %v315 = vld [vmem:[#allocation7 + $0x118] sm:$0xff]
    %v316 = vld [vmem:[#allocation7 + $0x120] sm:$0xff]
    %v317 = vld [vmem:[#allocation7 + $0x128] sm:$0xff]
    %v318 = vld [vmem:[#allocation7 + $0x130] sm:$0xff]
    %v319 = vld [vmem:[#allocation7 + $0x138] sm:$0xff]
    %v320 = vld [vmem:[#allocation7 + $0x140] sm:$0xff]
    %v321 = vld [vmem:[#allocation7 + $0x148] sm:$0xff]
    %v322 = vld [vmem:[#allocation7 + $0x150] sm:$0xff]
    %v323 = vld [vmem:[#allocation7 + $0x158] sm:$0xff]
    %v324 = vld [vmem:[#allocation7 + $0x160] sm:$0xff]
    %v325 = vld [vmem:[#allocation7 + $0x168] sm:$0xff]
    %v326 = vld [vmem:[#allocation7 + $0x170] sm:$0xff]
    %v327 = vld [vmem:[#allocation7 + $0x178] sm:$0xff]
    %v328 = vld [vmem:[#allocation7 + $0x180] sm:$0xff]
    %v329 = vld [vmem:[#allocation7 + $0x188] sm:$0xff]
    %v330 = vld [vmem:[#allocation7 + $0x190] sm:$0xff]
    %v331 = vld [vmem:[#allocation7 + $0x198] sm:$0xff]
    %v332 = vld [vmem:[#allocation7 + $0x1a0] sm:$0xff]
    %v333 = vld [vmem:[#allocation7 + $0x1a8] sm:$0xff]
    %v334 = vld [vmem:[#allocation7 + $0x1b0] sm:$0xff]
    %v335 = vld [vmem:[#allocation7 + $0x1b8] sm:$0xff]
    %v336 = vld [vmem:[#allocation7 + $0x1c0] sm:$0xff]
    %v337 = vld [vmem:[#allocation7 + $0x1c8] sm:$0xff]
    %v338 = vld [vmem:[#allocation7 + $0x1d0] sm:$0xff]
    %v339 = vld [vmem:[#allocation7 + $0x1d8] sm:$0xff]
    %v340 = vld [vmem:[#allocation7 + $0x1e0] sm:$0xff]
    %v341 = vld [vmem:[#allocation7 + $0x1e8] sm:$0xff]
    %v342 = vld [vmem:[#allocation7 + $0x1f0] sm:$0xff]
    %v343 = vld [vmem:[#allocation7 + $0x1f8] sm:$0xff]
    %v344 = vld [vmem:[#allocation7 + $0x200] sm:$0xff]
    %v345 = vld [vmem:[#allocation7 + $0x208] sm:$0xff]
    %v346 = vld [vmem:[#allocation7 + $0x210] sm:$0xff]
    %v347 = vld [vmem:[#allocation7 + $0x218] sm:$0xff]
    %v348 = vld [vmem:[#allocation7 + $0x220] sm:$0xff]
    %v349 = vld [vmem:[#allocation7 + $0x228] sm:$0xff]
    %v350 = vld [vmem:[#allocation7 + $0x230] sm:$0xff]
    %v351 = vld [vmem:[#allocation7 + $0x238] sm:$0xff]
    %v352 = vld [vmem:[#allocation7 + $0x240] sm:$0xff]
    %v353 = vld [vmem:[#allocation7 + $0x248] sm:$0xff]
    %v354 = vld [vmem:[#allocation7 + $0x250] sm:$0xff]
    %v355 = vld [vmem:[#allocation7 + $0x258] sm:$0xff]
    %v356 = vld [vmem:[#allocation7 + $0x260] sm:$0xff]
    %v357 = vld [vmem:[#allocation7 + $0x268] sm:$0xff]
    %v358 = vld [vmem:[#allocation7 + $0x270] sm:$0xff]
    %v359 = vld [vmem:[#allocation7 + $0x278] sm:$0xff]
    %v360 = vld [vmem:[#allocation7 + $0x280] sm:$0xff]
    %v361 = vld [vmem:[#allocation7 + $0x288] sm:$0xff]
    %v362 = vld [vmem:[#allocation7 + $0x290] sm:$0xff]
    %v363 = vld [vmem:[#allocation7 + $0x298] sm:$0xff]
    %v364 = vld [vmem:[#allocation7 + $0x2a0] sm:$0xff]
    %v365 = vld [vmem:[#allocation7 + $0x2a8] sm:$0xff]
    %v366 = vld [vmem:[#allocation7 + $0x2b0] sm:$0xff]
    %v367 = vld [vmem:[#allocation7 + $0x2b8] sm:$0xff]
    %v368 = vld [vmem:[#allocation7 + $0x2c0] sm:$0xff]
    %v369 = vld [vmem:[#allocation7 + $0x2c8] sm:$0xff]
    %v370 = vld [vmem:[#allocation7 + $0x2d0] sm:$0xff]
    %v371 = vld [vmem:[#allocation7 + $0x2d8] sm:$0xff]
    %v372 = vld [vmem:[#allocation7 + $0x2e0] sm:$0xff]
    %v373 = vld [vmem:[#allocation7 + $0x2e8] sm:$0xff]
    %v374 = vld [vmem:[#allocation7 + $0x2f0] sm:$0xff]
    %v375 = vld [vmem:[#allocation7 + $0x2f8] sm:$0xff]
    %v376 = vld [vmem:[#allocation17] sm:$0x3f]
    %v378 = vlaneseq
    %v379 = vshrl.u32 %v378, 7
    %v380 = vsub.s32 0, %v379
    %v381 = vrot.slane %v376, %v380
    %v382 = vlaneseq
    %v383 = vshrl.u32 %v382, 7
    %v384 = vsub.s32 1, %v383
    %v385 = vrot.slane %v376, %v384
    %v386 = vlaneseq
    %v387 = vshrl.u32 %v386, 7
    %v388 = vsub.s32 2, %v387
    %v389 = vrot.slane %v376, %v388
    %v390 = vlaneseq
    %v391 = vshrl.u32 %v390, 7
    %v392 = vsub.s32 3, %v391
    %v393 = vrot.slane %v376, %v392
    %v394 = vlaneseq
    %v395 = vshrl.u32 %v394, 7
    %v396 = vsub.s32 4, %v395
    %v397 = vrot.slane %v376, %v396
    %v398 = vlaneseq
    %v399 = vshrl.u32 %v398, 7
    %v400 = vsub.s32 5, %v399
    %v401 = vrot.slane %v376, %v400
    %v504 = vunpack.c.l.b16 %v280
    %v505 = vunpack.c.h.b16 %v280
    %v506 = vunpack.c.l.b16 %v281
    %v507 = vunpack.c.h.b16 %v281
    %v508 = vunpack.c.l.b16 %v282
    %v509 = vunpack.c.h.b16 %v282
    %v510 = vunpack.c.l.b16 %v283
    %v511 = vunpack.c.h.b16 %v283
    %v512 = vunpack.c.l.b16 %v284
    %v513 = vunpack.c.h.b16 %v284
    %v514 = vunpack.c.l.b16 %v285
    %v515 = vunpack.c.h.b16 %v285
    %v516 = vunpack.c.l.b16 %v286
    %v517 = vunpack.c.h.b16 %v286
    %v518 = vunpack.c.l.b16 %v287
    %v519 = vunpack.c.h.b16 %v287
    %v520 = vunpack.c.l.b16 %v288
    %v521 = vunpack.c.h.b16 %v288
    %v522 = vunpack.c.l.b16 %v289
    %v523 = vunpack.c.h.b16 %v289
    %v524 = vunpack.c.l.b16 %v290
    %v525 = vunpack.c.h.b16 %v290
    %v526 = vunpack.c.l.b16 %v291
    %v527 = vunpack.c.h.b16 %v291
    %v528 = vunpack.c.l.b16 %v292
    %v529 = vunpack.c.h.b16 %v292
    %v530 = vunpack.c.l.b16 %v293
    %v531 = vunpack.c.h.b16 %v293
    %v532 = vunpack.c.l.b16 %v294
    %v533 = vunpack.c.h.b16 %v294
    %v534 = vunpack.c.l.b16 %v295
    %v535 = vunpack.c.h.b16 %v295
    %v536 = vunpack.c.l.b16 %v296
    %v537 = vunpack.c.h.b16 %v296
    %v538 = vunpack.c.l.b16 %v297
    %v539 = vunpack.c.h.b16 %v297
    %v540 = vunpack.c.l.b16 %v298
    %v541 = vunpack.c.h.b16 %v298
    %v542 = vunpack.c.l.b16 %v299
    %v543 = vunpack.c.h.b16 %v299
    %v544 = vunpack.c.l.b16 %v300
    %v545 = vunpack.c.h.b16 %v300
    %v546 = vunpack.c.l.b16 %v301
    %v547 = vunpack.c.h.b16 %v301
    %v548 = vunpack.c.l.b16 %v302
    %v549 = vunpack.c.h.b16 %v302
    %v550 = vunpack.c.l.b16 %v303
    %v551 = vunpack.c.h.b16 %v303
    %v552 = vunpack.c.l.b16 %v304
    %v553 = vunpack.c.h.b16 %v304
    %v554 = vunpack.c.l.b16 %v305
    %v555 = vunpack.c.h.b16 %v305
    %v556 = vunpack.c.l.b16 %v306
    %v557 = vunpack.c.h.b16 %v306
    %v558 = vunpack.c.l.b16 %v307
    %v559 = vunpack.c.h.b16 %v307
    %v560 = vunpack.c.l.b16 %v308
    %v561 = vunpack.c.h.b16 %v308
    %v562 = vunpack.c.l.b16 %v309
    %v563 = vunpack.c.h.b16 %v309
    %v564 = vunpack.c.l.b16 %v310
    %v565 = vunpack.c.h.b16 %v310
    %v566 = vunpack.c.l.b16 %v311
    %v567 = vunpack.c.h.b16 %v311
    %v568 = vunpack.c.l.b16 %v312
    %v569 = vunpack.c.h.b16 %v312
    %v570 = vunpack.c.l.b16 %v313
    %v571 = vunpack.c.h.b16 %v313
    %v572 = vunpack.c.l.b16 %v314
    %v573 = vunpack.c.h.b16 %v314
    %v574 = vunpack.c.l.b16 %v315
    %v575 = vunpack.c.h.b16 %v315
    %v576 = vunpack.c.l.b16 %v316
    %v577 = vunpack.c.h.b16 %v316
    %v578 = vunpack.c.l.b16 %v317
    %v579 = vunpack.c.h.b16 %v317
    %v580 = vunpack.c.l.b16 %v318
    %v581 = vunpack.c.h.b16 %v318
    %v582 = vunpack.c.l.b16 %v319
    %v583 = vunpack.c.h.b16 %v319
    %v584 = vunpack.c.l.b16 %v320
    %v585 = vunpack.c.h.b16 %v320
    %v586 = vunpack.c.l.b16 %v321
    %v587 = vunpack.c.h.b16 %v321
    %v588 = vunpack.c.l.b16 %v322
    %v589 = vunpack.c.h.b16 %v322
    %v590 = vunpack.c.l.b16 %v323
    %v591 = vunpack.c.h.b16 %v323
    %v592 = vunpack.c.l.b16 %v324
    %v593 = vunpack.c.h.b16 %v324
    %v594 = vunpack.c.l.b16 %v325
    %v595 = vunpack.c.h.b16 %v325
    %v596 = vunpack.c.l.b16 %v326
    %v597 = vunpack.c.h.b16 %v326
    %v598 = vunpack.c.l.b16 %v327
    %v599 = vunpack.c.h.b16 %v327
    %v600 = vunpack.c.l.b16 %v328
    %v601 = vunpack.c.h.b16 %v328
    %v602 = vunpack.c.l.b16 %v329
    %v603 = vunpack.c.h.b16 %v329
    %v604 = vunpack.c.l.b16 %v330
    %v605 = vunpack.c.h.b16 %v330
    %v606 = vunpack.c.l.b16 %v331
    %v607 = vunpack.c.h.b16 %v331
    %v608 = vunpack.c.l.b16 %v332
    %v609 = vunpack.c.h.b16 %v332
    %v610 = vunpack.c.l.b16 %v333
    %v611 = vunpack.c.h.b16 %v333
    %v612 = vunpack.c.l.b16 %v334
    %v613 = vunpack.c.h.b16 %v334
    %v614 = vunpack.c.l.b16 %v335
    %v615 = vunpack.c.h.b16 %v335
    %v616 = vunpack.c.l.b16 %v336
    %v617 = vunpack.c.h.b16 %v336
    %v618 = vunpack.c.l.b16 %v337
    %v619 = vunpack.c.h.b16 %v337
    %v620 = vunpack.c.l.b16 %v338
    %v621 = vunpack.c.h.b16 %v338
    %v622 = vunpack.c.l.b16 %v339
    %v623 = vunpack.c.h.b16 %v339
    %v624 = vunpack.c.l.b16 %v340
    %v625 = vunpack.c.h.b16 %v340
    %v626 = vunpack.c.l.b16 %v341
    %v627 = vunpack.c.h.b16 %v341
    %v628 = vunpack.c.l.b16 %v342
    %v629 = vunpack.c.h.b16 %v342
    %v630 = vunpack.c.l.b16 %v343
    %v631 = vunpack.c.h.b16 %v343
    %v632 = vunpack.c.l.b16 %v344
    %v633 = vunpack.c.h.b16 %v344
    %v634 = vunpack.c.l.b16 %v345
    %v635 = vunpack.c.h.b16 %v345
    %v636 = vunpack.c.l.b16 %v346
    %v637 = vunpack.c.h.b16 %v346
    %v638 = vunpack.c.l.b16 %v347
    %v639 = vunpack.c.h.b16 %v347
    %v640 = vunpack.c.l.b16 %v348
    %v641 = vunpack.c.h.b16 %v348
    %v642 = vunpack.c.l.b16 %v349
    %v643 = vunpack.c.h.b16 %v349
    %v644 = vunpack.c.l.b16 %v350
    %v645 = vunpack.c.h.b16 %v350
    %v646 = vunpack.c.l.b16 %v351
    %v647 = vunpack.c.h.b16 %v351
    %v648 = vunpack.c.l.b16 %v352
    %v649 = vunpack.c.h.b16 %v352
    %v650 = vunpack.c.l.b16 %v353
    %v651 = vunpack.c.h.b16 %v353
    %v652 = vunpack.c.l.b16 %v354
    %v653 = vunpack.c.h.b16 %v354
    %v654 = vunpack.c.l.b16 %v355
    %v655 = vunpack.c.h.b16 %v355
    %v656 = vunpack.c.l.b16 %v356
    %v657 = vunpack.c.h.b16 %v356
    %v658 = vunpack.c.l.b16 %v357
    %v659 = vunpack.c.h.b16 %v357
    %v660 = vunpack.c.l.b16 %v358
    %v661 = vunpack.c.h.b16 %v358
    %v662 = vunpack.c.l.b16 %v359
    %v663 = vunpack.c.h.b16 %v359
    %v664 = vunpack.c.l.b16 %v360
    %v665 = vunpack.c.h.b16 %v360
    %v666 = vunpack.c.l.b16 %v361
    %v667 = vunpack.c.h.b16 %v361
    %v668 = vunpack.c.l.b16 %v362
    %v669 = vunpack.c.h.b16 %v362
    %v670 = vunpack.c.l.b16 %v363
    %v671 = vunpack.c.h.b16 %v363
    %v672 = vunpack.c.l.b16 %v364
    %v673 = vunpack.c.h.b16 %v364
    %v674 = vunpack.c.l.b16 %v365
    %v675 = vunpack.c.h.b16 %v365
    %v676 = vunpack.c.l.b16 %v366
    %v677 = vunpack.c.h.b16 %v366
    %v678 = vunpack.c.l.b16 %v367
    %v679 = vunpack.c.h.b16 %v367
    %v680 = vunpack.c.l.b16 %v368
    %v681 = vunpack.c.h.b16 %v368
    %v682 = vunpack.c.l.b16 %v369
    %v683 = vunpack.c.h.b16 %v369
    %v684 = vunpack.c.l.b16 %v370
    %v685 = vunpack.c.h.b16 %v370
    %v686 = vunpack.c.l.b16 %v371
    %v687 = vunpack.c.h.b16 %v371
    %v688 = vunpack.c.l.b16 %v372
    %v689 = vunpack.c.h.b16 %v372
    %v690 = vunpack.c.l.b16 %v373
    %v691 = vunpack.c.h.b16 %v373
    %v692 = vunpack.c.l.b16 %v374
    %v693 = vunpack.c.h.b16 %v374
    %v694 = vunpack.c.l.b16 %v375
    %v695 = vunpack.c.h.b16 %v375
    %v696 = vpack.c.b16 %v510, %v504
    %v697 = vpack.c.b16 %v511, %v505
    %v698 = vpack.c.b16 %v512, %v506
    %v699 = vpack.c.b16 %v513, %v507
    %v700 = vpack.c.b16 %v514, %v508
    %v701 = vpack.c.b16 %v515, %v509
    %v702 = vpack.c.b16 %v522, %v516
    %v703 = vpack.c.b16 %v523, %v517
    %v704 = vpack.c.b16 %v524, %v518
    %v705 = vpack.c.b16 %v525, %v519
    %v706 = vpack.c.b16 %v526, %v520
    %v707 = vpack.c.b16 %v527, %v521
    %v708 = vpack.c.b16 %v534, %v528
    %v709 = vpack.c.b16 %v535, %v529
    %v710 = vpack.c.b16 %v536, %v530
    %v711 = vpack.c.b16 %v537, %v531
    %v712 = vpack.c.b16 %v538, %v532
    %v713 = vpack.c.b16 %v539, %v533
    %v714 = vpack.c.b16 %v546, %v540
    %v715 = vpack.c.b16 %v547, %v541
    %v716 = vpack.c.b16 %v548, %v542
    %v717 = vpack.c.b16 %v549, %v543
    %v718 = vpack.c.b16 %v550, %v544
    %v719 = vpack.c.b16 %v551, %v545
    %v720 = vpack.c.b16 %v558, %v552
    %v721 = vpack.c.b16 %v559, %v553
    %v722 = vpack.c.b16 %v560, %v554
    %v723 = vpack.c.b16 %v561, %v555
    %v724 = vpack.c.b16 %v562, %v556
    %v725 = vpack.c.b16 %v563, %v557
    %v726 = vpack.c.b16 %v570, %v564
    %v727 = vpack.c.b16 %v571, %v565
    %v728 = vpack.c.b16 %v572, %v566
    %v729 = vpack.c.b16 %v573, %v567
    %v730 = vpack.c.b16 %v574, %v568
    %v731 = vpack.c.b16 %v575, %v569
    %v732 = vpack.c.b16 %v582, %v576
    %v733 = vpack.c.b16 %v583, %v577
    %v734 = vpack.c.b16 %v584, %v578
    %v735 = vpack.c.b16 %v585, %v579
    %v736 = vpack.c.b16 %v586, %v580
    %v737 = vpack.c.b16 %v587, %v581
    %v738 = vpack.c.b16 %v594, %v588
    %v739 = vpack.c.b16 %v595, %v589
    %v740 = vpack.c.b16 %v596, %v590
    %v741 = vpack.c.b16 %v597, %v591
    %v742 = vpack.c.b16 %v598, %v592
    %v743 = vpack.c.b16 %v599, %v593
    %v744 = vpack.c.b16 %v606, %v600
    %v745 = vpack.c.b16 %v607, %v601
    %v746 = vpack.c.b16 %v608, %v602
    %v747 = vpack.c.b16 %v609, %v603
    %v748 = vpack.c.b16 %v610, %v604
    %v749 = vpack.c.b16 %v611, %v605
    %v750 = vpack.c.b16 %v618, %v612
    %v751 = vpack.c.b16 %v619, %v613
    %v752 = vpack.c.b16 %v620, %v614
    %v753 = vpack.c.b16 %v621, %v615
    %v754 = vpack.c.b16 %v622, %v616
    %v755 = vpack.c.b16 %v623, %v617
    %v756 = vpack.c.b16 %v630, %v624
    %v757 = vpack.c.b16 %v631, %v625
    %v758 = vpack.c.b16 %v632, %v626
    %v759 = vpack.c.b16 %v633, %v627
    %v760 = vpack.c.b16 %v634, %v628
    %v761 = vpack.c.b16 %v635, %v629
    %v762 = vpack.c.b16 %v642, %v636
    %v763 = vpack.c.b16 %v643, %v637
    %v764 = vpack.c.b16 %v644, %v638
    %v765 = vpack.c.b16 %v645, %v639
    %v766 = vpack.c.b16 %v646, %v640
    %v767 = vpack.c.b16 %v647, %v641
    %v768 = vpack.c.b16 %v654, %v648
    %v769 = vpack.c.b16 %v655, %v649
    %v770 = vpack.c.b16 %v656, %v650
    %v771 = vpack.c.b16 %v657, %v651
    %v772 = vpack.c.b16 %v658, %v652
    %v773 = vpack.c.b16 %v659, %v653
    %v774 = vpack.c.b16 %v666, %v660
    %v775 = vpack.c.b16 %v667, %v661
    %v776 = vpack.c.b16 %v668, %v662
    %v777 = vpack.c.b16 %v669, %v663
    %v778 = vpack.c.b16 %v670, %v664
    %v779 = vpack.c.b16 %v671, %v665
    %v780 = vpack.c.b16 %v678, %v672
    %v781 = vpack.c.b16 %v679, %v673
    %v782 = vpack.c.b16 %v680, %v674
    %v783 = vpack.c.b16 %v681, %v675
    %v784 = vpack.c.b16 %v682, %v676
    %v785 = vpack.c.b16 %v683, %v677
    %v786 = vpack.c.b16 %v690, %v684
    %v787 = vpack.c.b16 %v691, %v685
    %v788 = vpack.c.b16 %v692, %v686
    %v789 = vpack.c.b16 %v693, %v687
    %v790 = vpack.c.b16 %v694, %v688
    %v791 = vpack.c.b16 %v695, %v689
    %888 = vmatprep.subr.bf16.mxu0 %v739
    %889 = vmatpush1.bf16.msra.mxu0 %v738
    %890 = vmatprep.subr.bf16.mxu0 %v733
    %891 = vmatpush1.bf16.msra.mxu0 %v732
    %892 = vmatprep.subr.bf16.mxu0 %v727
    %893 = vmatpush1.bf16.msra.mxu0 %v726
    %894 = vmatprep.subr.bf16.mxu0 %v721
    %895 = vmatpush1.bf16.msra.mxu0 %v720
    %896 = vmatprep.subr.bf16.mxu0 %v715
    %897 = vmatpush1.bf16.msra.mxu0 %v714
    %898 = vmatprep.subr.bf16.mxu0 %v709
    %899 = vmatpush1.bf16.msra.mxu0 %v708
    %900 = vmatprep.subr.bf16.mxu0 %v703
    %901 = vmatpush1.bf16.msra.mxu0 %v702
    %902 = vmatprep.subr.bf16.mxu0 %v697
    %903 = vmatpush1.bf16.msra.mxu0 %v696
    %904 = vmatprep.subr.bf16.mxu0 %v787
    %905 = vmatpush2.bf16.msra.mxu0 %v786
    %906 = vmatprep.subr.bf16.mxu0 %v781
    %907 = vmatpush2.bf16.msra.mxu0 %v780
    %908 = vmatprep.subr.bf16.mxu0 %v775
    %909 = vmatpush2.bf16.msra.mxu0 %v774
    %910 = vmatprep.subr.bf16.mxu0 %v769
    %911 = vmatpush2.bf16.msra.mxu0 %v768
    %912 = vmatprep.subr.bf16.mxu0 %v763
    %913 = vmatpush2.bf16.msra.mxu0 %v762
    %914 = vmatprep.subr.bf16.mxu0 %v757
    %915 = vmatpush2.bf16.msra.mxu0 %v756
    %916 = vmatprep.subr.bf16.mxu0 %v751
    %917 = vmatpush2.bf16.msra.mxu0 %v750
    %918 = vmatprep.subr.bf16.mxu0 %v745
    %919 = vmatpush2.bf16.msra.mxu0 %v744
    %920 = vmatprep.mubr.bf16.mxu0 %v277
    %921 = vmatmul.mubr.bf16.gmra.mxu0 %v276
    %v922 = vpop.f32.mrf.mxu0
    %v923 = vadd.f32 %v381, %v922
    %v924 = vpop.f32.mrf.mxu0
    %v925 = vadd.f32 %v385, %v924
    %v926 = vpop.f32.mrf.mxu0
    %v927 = vadd.f32 %v381, %v926
    %v928 = vpop.f32.mrf.mxu0
    %v929 = vadd.f32 %v385, %v928
    %930 = vmatprep.mubr.bf16.mxu0 %v279
    %931 = vmatmul.mubr.bf16.gmra.mxu0 %v278
    %v932 = vpop.f32.mrf.mxu0
    %v933 = vadd.f32 %v381, %v932
    %v934 = vpop.f32.mrf.mxu0
    %v935 = vadd.f32 %v385, %v934
    %v936 = vpop.f32.mrf.mxu0
    %v937 = vadd.f32 %v381, %v936
    %v938 = vpop.f32.mrf.mxu0
    %v939 = vadd.f32 %v385, %v938
    %940 = vdwg.mxu0
    %941 = vmatprep.subr.bf16.mxu0 %v741
    %942 = vmatpush1.bf16.msra.mxu0 %v740
    %943 = vmatprep.subr.bf16.mxu0 %v735
    %944 = vmatpush1.bf16.msra.mxu0 %v734
    %945 = vmatprep.subr.bf16.mxu0 %v729
    %946 = vmatpush1.bf16.msra.mxu0 %v728
    %947 = vmatprep.subr.bf16.mxu0 %v723
    %948 = vmatpush1.bf16.msra.mxu0 %v722
    %949 = vmatprep.subr.bf16.mxu0 %v717
    %950 = vmatpush1.bf16.msra.mxu0 %v716
    %951 = vmatprep.subr.bf16.mxu0 %v711
    %952 = vmatpush1.bf16.msra.mxu0 %v710
    %953 = vmatprep.subr.bf16.mxu0 %v705
    %954 = vmatpush1.bf16.msra.mxu0 %v704
    %955 = vmatprep.subr.bf16.mxu0 %v699
    %956 = vmatpush1.bf16.msra.mxu0 %v698
    %957 = vmatprep.subr.bf16.mxu0 %v789
    %958 = vmatpush2.bf16.msra.mxu0 %v788
    %959 = vmatprep.subr.bf16.mxu0 %v783
    %960 = vmatpush2.bf16.msra.mxu0 %v782
    %961 = vmatprep.subr.bf16.mxu0 %v777
    %962 = vmatpush2.bf16.msra.mxu0 %v776
    %963 = vmatprep.subr.bf16.mxu0 %v771
    %964 = vmatpush2.bf16.msra.mxu0 %v770
    %965 = vmatprep.subr.bf16.mxu0 %v765
    %966 = vmatpush2.bf16.msra.mxu0 %v764
    %967 = vmatprep.subr.bf16.mxu0 %v759
    %968 = vmatpush2.bf16.msra.mxu0 %v758
    %969 = vmatprep.subr.bf16.mxu0 %v753
    %970 = vmatpush2.bf16.msra.mxu0 %v752
    %971 = vmatprep.subr.bf16.mxu0 %v747
    %972 = vmatpush2.bf16.msra.mxu0 %v746
    %973 = vmatprep.mubr.bf16.mxu0 %v277
    %974 = vmatmul.mubr.bf16.gmra.mxu0 %v276
    %v975 = vpop.f32.mrf.mxu0
    %v976 = vadd.f32 %v389, %v975
    %v977 = vpop.f32.mrf.mxu0
    %v978 = vadd.f32 %v393, %v977
    %v979 = vpop.f32.mrf.mxu0
    %v980 = vadd.f32 %v389, %v979
    %v981 = vpop.f32.mrf.mxu0
    %v982 = vadd.f32 %v393, %v981
    %983 = vmatprep.mubr.bf16.mxu0 %v279
    %984 = vmatmul.mubr.bf16.gmra.mxu0 %v278
    %v985 = vpop.f32.mrf.mxu0
    %v986 = vadd.f32 %v389, %v985
    %v987 = vpop.f32.mrf.mxu0
    %v988 = vadd.f32 %v393, %v987
    %v989 = vpop.f32.mrf.mxu0
    %v990 = vadd.f32 %v389, %v989
    %v991 = vpop.f32.mrf.mxu0
    %v992 = vadd.f32 %v393, %v991
    %993 = vdwg.mxu0
    %994 = vmatprep.subr.bf16.mxu0 %v743
    %995 = vmatpush1.bf16.msra.mxu0 %v742
    %996 = vmatprep.subr.bf16.mxu0 %v737
    %997 = vmatpush1.bf16.msra.mxu0 %v736
    %998 = vmatprep.subr.bf16.mxu0 %v731
    %999 = vmatpush1.bf16.msra.mxu0 %v730
    %1000 = vmatprep.subr.bf16.mxu0 %v725
    %1001 = vmatpush1.bf16.msra.mxu0 %v724
    %1002 = vmatprep.subr.bf16.mxu0 %v719
    %1003 = vmatpush1.bf16.msra.mxu0 %v718
    %1004 = vmatprep.subr.bf16.mxu0 %v713
    %1005 = vmatpush1.bf16.msra.mxu0 %v712
    %1006 = vmatprep.subr.bf16.mxu0 %v707
    %1007 = vmatpush1.bf16.msra.mxu0 %v706
    %1008 = vmatprep.subr.bf16.mxu0 %v701
    %1009 = vmatpush1.bf16.msra.mxu0 %v700
    %1010 = vmatprep.subr.bf16.mxu0 %v791
    %1011 = vmatpush2.bf16.msra.mxu0 %v790
    %1012 = vmatprep.subr.bf16.mxu0 %v785
    %1013 = vmatpush2.bf16.msra.mxu0 %v784
    %1014 = vmatprep.subr.bf16.mxu0 %v779
    %1015 = vmatpush2.bf16.msra.mxu0 %v778
    %1016 = vmatprep.subr.bf16.mxu0 %v773
    %1017 = vmatpush2.bf16.msra.mxu0 %v772
    %1018 = vmatprep.subr.bf16.mxu0 %v767
    %1019 = vmatpush2.bf16.msra.mxu0 %v766
    %1020 = vmatprep.subr.bf16.mxu0 %v761
    %1021 = vmatpush2.bf16.msra.mxu0 %v760
    %1022 = vmatprep.subr.bf16.mxu0 %v755
    %1023 = vmatpush2.bf16.msra.mxu0 %v754
    %1024 = vmatprep.subr.bf16.mxu0 %v749
    %1025 = vmatpush2.bf16.msra.mxu0 %v748
    %1026 = vmatprep.mubr.bf16.mxu0 %v277
    %1027 = vmatmul.mubr.bf16.gmra.mxu0 %v276
    %v1028 = vpop.f32.mrf.mxu0
    %v1029 = vadd.f32 %v397, %v1028
    %v1030 = vpop.f32.mrf.mxu0
    %v1031 = vadd.f32 %v401, %v1030
    %v1032 = vpop.f32.mrf.mxu0
    %v1033 = vadd.f32 %v397, %v1032
    %v1034 = vpop.f32.mrf.mxu0
    %v1035 = vadd.f32 %v401, %v1034
    %1036 = vmatprep.mubr.bf16.mxu0 %v279
    %1037 = vmatmul.mubr.bf16.gmra.mxu0 %v278
    %v1038 = vpop.f32.mrf.mxu0
    %v1039 = vadd.f32 %v397, %v1038
    %v1040 = vpop.f32.mrf.mxu0
    %v1041 = vadd.f32 %v401, %v1040
    %v1042 = vpop.f32.mrf.mxu0
    %v1043 = vadd.f32 %v397, %v1042
    %v1044 = vpop.f32.mrf.mxu0
    %v1045 = vadd.f32 %v401, %v1044
    %1046 = vdwg.mxu0
    %v1047 = vmul.f32 %v923, %v191
    %v1048 = vmul.f32 %v927, %v193
    %v1049 = vmul.f32 %v933, %v191
    %v1050 = vmul.f32 %v937, %v193
    %v1051 = vmul.f32 %v925, %v192
    %v1052 = vmul.f32 %v929, %v194
    %v1053 = vmul.f32 %v935, %v192
    %v1054 = vmul.f32 %v939, %v194
    %v1055 = vsub.f32 %v1047, %v1051
    %v1056 = vsub.f32 %v1048, %v1052
    %v1057 = vsub.f32 %v1049, %v1053
    %v1058 = vsub.f32 %v1050, %v1054
    %v1059 = vmul.f32 %v923, %v192
    %v1060 = vmul.f32 %v927, %v194
    %v1061 = vmul.f32 %v933, %v192
    %v1062 = vmul.f32 %v937, %v194
    %v1063 = vmul.f32 %v925, %v191
    %v1064 = vmul.f32 %v929, %v193
    %v1065 = vmul.f32 %v935, %v191
    %v1066 = vmul.f32 %v939, %v193
    %v1067 = vadd.f32 %v1059, %v1063
    %v1068 = vadd.f32 %v1060, %v1064
    %v1069 = vadd.f32 %v1061, %v1065
    %v1070 = vadd.f32 %v1062, %v1066
    %v1071 = vmul.f32 %v976, %v191
    %v1072 = vmul.f32 %v980, %v193
    %v1073 = vmul.f32 %v986, %v191
    %v1074 = vmul.f32 %v990, %v193
    %v1075 = vmul.f32 %v978, %v192
    %v1076 = vmul.f32 %v982, %v194
    %v1077 = vmul.f32 %v988, %v192
    %v1078 = vmul.f32 %v992, %v194
    %v1079 = vsub.f32 %v1071, %v1075
    %v1080 = vsub.f32 %v1072, %v1076
    %v1081 = vsub.f32 %v1073, %v1077
    %v1082 = vsub.f32 %v1074, %v1078
    %v1083 = vmul.f32 %v976, %v192
    %v1084 = vmul.f32 %v980, %v194
    %v1085 = vmul.f32 %v986, %v192
    %v1086 = vmul.f32 %v990, %v194
    %v1087 = vmul.f32 %v978, %v191
    %v1088 = vmul.f32 %v982, %v193
    %v1089 = vmul.f32 %v988, %v191
    %v1090 = vmul.f32 %v992, %v193
    %v1091 = vadd.f32 %v1083, %v1087
    %v1092 = vadd.f32 %v1084, %v1088
    %v1093 = vadd.f32 %v1085, %v1089
    %v1094 = vadd.f32 %v1086, %v1090
    %v1095 = vpack.c.bf16 %v1056, %v1055
    %v1096 = vpack.c.bf16 %v1068, %v1067
    %v1097 = vpack.c.bf16 %v1058, %v1057
    %v1098 = vpack.c.bf16 %v1070, %v1069
    %v1099 = vpack.c.bf16 %v1080, %v1079
    %v1100 = vpack.c.bf16 %v1092, %v1091
    %v1101 = vpack.c.bf16 %v1082, %v1081
    %v1102 = vpack.c.bf16 %v1094, %v1093
    %1103 = vmatprep.subr.bf16.mxu0 0
    %1104 = vmatpush1.bf16.xpose.msra.mxu0 0
    %1105 = vmatprep.subr.bf16.mxu0 0
    %1106 = vmatpush1.bf16.xpose.msra.mxu0 0
    %1107 = vmatprep.subr.bf16.mxu0 0
    %1108 = vmatpush1.bf16.xpose.msra.mxu0 0
    %1109 = vmatprep.subr.bf16.mxu0 0
    %1110 = vmatpush1.bf16.xpose.msra.mxu0 0
    %1111 = vmatprep.subr.bf16.mxu0 0
    %1112 = vmatpush1.bf16.xpose.msra.mxu0 0
    %1113 = vmatprep.subr.bf16.mxu0 0
    %1114 = vmatpush1.bf16.xpose.msra.mxu0 0
    %1115 = vmatprep.subr.bf16.mxu0 0
    %1116 = vmatpush1.bf16.xpose.msra.mxu0 0
    %1117 = vmatprep.subr.bf16.mxu0 %v1100
    %1118 = vmatpush1.bf16.xpose.msra.mxu0 %v1099
    %1119 = vmatprep.subr.bf16.mxu0 0
    %1120 = vmatpush2.bf16.xpose.msra.mxu0 0
    %1121 = vmatprep.subr.bf16.mxu0 0
    %1122 = vmatpush2.bf16.xpose.msra.mxu0 0
    %1123 = vmatprep.subr.bf16.mxu0 0
    %1124 = vmatpush2.bf16.xpose.msra.mxu0 0
    %1125 = vmatprep.subr.bf16.mxu0 0
    %1126 = vmatpush2.bf16.xpose.msra.mxu0 0
    %1127 = vmatprep.subr.bf16.mxu0 0
    %1128 = vmatpush2.bf16.xpose.msra.mxu0 0
    %1129 = vmatprep.subr.bf16.mxu0 0
    %1130 = vmatpush2.bf16.xpose.msra.mxu0 0
    %1131 = vmatprep.subr.bf16.mxu0 0
    %1132 = vmatpush2.bf16.xpose.msra.mxu0 0
    %1133 = vmatprep.subr.bf16.mxu0 0
    %1134 = vmatpush2.bf16.xpose.msra.mxu0 0
    %1135 = vmatprep.mubr.bf16.mxu0 %v1096
    %1136 = vmatmul.mubr.bf16.gmra.mxu0 %v1095
    %v1137 = vpop.f32.mrf.mxu0
    %v1138 = vadd.f32 0.0, %v1137
    %v1139 = vpop.f32.mrf.mxu0
    %v1140 = vpop.f32.mrf.mxu0
    %v1141 = vadd.f32 0.0, %v1140
    %v1142 = vpop.f32.mrf.mxu0
    %1143 = vdwg.mxu0
    %1144 = vmatprep.subr.bf16.mxu0 0
    %1145 = vmatpush1.bf16.xpose.msra.mxu0 0
    %1146 = vmatprep.subr.bf16.mxu0 0
    %1147 = vmatpush1.bf16.xpose.msra.mxu0 0
    %1148 = vmatprep.subr.bf16.mxu0 0
    %1149 = vmatpush1.bf16.xpose.msra.mxu0 0
    %1150 = vmatprep.subr.bf16.mxu0 0
    %1151 = vmatpush1.bf16.xpose.msra.mxu0 0
    %1152 = vmatprep.subr.bf16.mxu0 0
    %1153 = vmatpush1.bf16.xpose.msra.mxu0 0
    %1154 = vmatprep.subr.bf16.mxu0 0
    %1155 = vmatpush1.bf16.xpose.msra.mxu0 0
    %1156 = vmatprep.subr.bf16.mxu0 0
    %1157 = vmatpush1.bf16.xpose.msra.mxu0 0
    %1158 = vmatprep.subr.bf16.mxu0 %v1102
    %1159 = vmatpush1.bf16.xpose.msra.mxu0 %v1101
    %1160 = vmatprep.subr.bf16.mxu0 0
    %1161 = vmatpush2.bf16.xpose.msra.mxu0 0
    %1162 = vmatprep.subr.bf16.mxu0 0
    %1163 = vmatpush2.bf16.xpose.msra.mxu0 0
    %1164 = vmatprep.subr.bf16.mxu0 0
    %1165 = vmatpush2.bf16.xpose.msra.mxu0 0
    %1166 = vmatprep.subr.bf16.mxu0 0
    %1167 = vmatpush2.bf16.xpose.msra.mxu0 0
    %1168 = vmatprep.subr.bf16.mxu0 0
    %1169 = vmatpush2.bf16.xpose.msra.mxu0 0
    %1170 = vmatprep.subr.bf16.mxu0 0
    %1171 = vmatpush2.bf16.xpose.msra.mxu0 0
    %1172 = vmatprep.subr.bf16.mxu0 0
    %1173 = vmatpush2.bf16.xpose.msra.mxu0 0
    %1174 = vmatprep.subr.bf16.mxu0 0
    %1175 = vmatpush2.bf16.xpose.msra.mxu0 0
    %1176 = vmatprep.mubr.bf16.mxu0 %v1098
    %1177 = vmatmul.mubr.bf16.gmra.mxu0 %v1097
    %v1178 = vpop.f32.mrf.mxu0
    %v1179 = vadd.f32 0.0, %v1178
    %v1180 = vpop.f32.mrf.mxu0
    %v1181 = vpop.f32.mrf.mxu0
    %v1182 = vadd.f32 0.0, %v1181
    %v1183 = vpop.f32.mrf.mxu0
    %1184 = vdwg.mxu0
    %vm1185 = vcmask 130048
    %v1186 = vsel %vm1185, %v1138, -inf
    %1187 = vmax.xlane.f32.xlu0 %v1186
    %v1188 = vpop.xlane.xlu0 %1187
    %v1189 = vsel %vm1185, %v1141, -inf
    %1190 = vmax.xlane.f32.xlu0 %v1189
    %v1191 = vpop.xlane.xlu0 %1190
    %v1192 = vsel %vm1185, %v1179, -inf
    %1193 = vmax.xlane.f32.xlu0 %v1192
    %v1194 = vpop.xlane.xlu0 %1193
    %v1195 = vsel %vm1185, %v1182, -inf
    %1196 = vmax.xlane.f32.xlu0 %v1195
    %v1197 = vpop.xlane.xlu0 %1196
    %v1198 = vsub.f32 %v1138, %v1188
    %v1199 = vsub.f32 %v1141, %v1191
    %v1200 = vsub.f32 %v1179, %v1194
    %v1201 = vsub.f32 %v1182, %v1197
    %v1202 = vmul.f32 %v1198, 1.442695
    %v1203 = vpow.pop %v1202
    %v1204 = vmul.f32 %v1199, 1.442695
    %v1205 = vpow.pop %v1204
    %v1206 = vmul.f32 %v1200, 1.442695
    %v1207 = vpow.pop %v1206
    %v1208 = vmul.f32 %v1201, 1.442695
    %v1209 = vpow.pop %v1208
    %v1210 = vsel %vm1185, %v1203, 0.0
    %1211 = vadd.xlane.f32.xlu0 %v1210
    %v1212 = vpop.xlane.xlu0 %1211
    %v1213 = vsel %vm1185, %v1205, 0.0
    %1214 = vadd.xlane.f32.xlu0 %v1213
    %v1215 = vpop.xlane.xlu0 %1214
    %v1216 = vsel %vm1185, %v1207, 0.0
    %1217 = vadd.xlane.f32.xlu0 %v1216
    %v1218 = vpop.xlane.xlu0 %1217
    %v1219 = vsel %vm1185, %v1209, 0.0
    %1220 = vadd.xlane.f32.xlu0 %v1219
    %v1221 = vpop.xlane.xlu0 %1220
    %v1222 = vrcp.pop %v1212
    %v1223 = vrcp.pop %v1215
    %v1224 = vrcp.pop %v1218
    %v1225 = vrcp.pop %v1221
    %v1226 = vmul.f32 %v1203, %v1222
    %v1227 = vmul.f32 %v1205, %v1223
    %v1228 = vmul.f32 %v1207, %v1224
    %v1229 = vmul.f32 %v1209, %v1225
    %v1230 = vpack.c.bf16 %v1227, %v1226
    %v1231 = vpack.c.bf16 %v1229, %v1228
    %v1232 = vpack.c.bf16 %v1033, %v1029
    %v1233 = vpack.c.bf16 %v1035, %v1031
    %v1234 = vpack.c.bf16 %v1043, %v1039
    %v1235 = vpack.c.bf16 %v1045, %v1041
    %v1237 = vsel %vm1185, %v1230, 0
    %1239 = vmatprep.subr.bf16.mxu0 0
    %1240 = vmatpush1.bf16.msra.mxu0 0
    %1241 = vmatprep.subr.bf16.mxu0 0
    %1242 = vmatpush1.bf16.msra.mxu0 0
    %1243 = vmatprep.subr.bf16.mxu0 0
    %1244 = vmatpush1.bf16.msra.mxu0 0
    %1245 = vmatprep.subr.bf16.mxu0 0
    %1246 = vmatpush1.bf16.msra.mxu0 0
    %1247 = vmatprep.subr.bf16.mxu0 0
    %1248 = vmatpush1.bf16.msra.mxu0 0
    %1249 = vmatprep.subr.bf16.mxu0 0
    %1250 = vmatpush1.bf16.msra.mxu0 0
    %1251 = vmatprep.subr.bf16.mxu0 0
    %1252 = vmatpush1.bf16.msra.mxu0 0
    %1253 = vmatprep.subr.bf16.mxu0 %v1233
    %1254 = vmatpush1.bf16.msra.mxu0 %v1232
    %1255 = vmatprep.subr.bf16.mxu0 0
    %1256 = vmatpush2.bf16.msra.mxu0 0
    %1257 = vmatprep.subr.bf16.mxu0 0
    %1258 = vmatpush2.bf16.msra.mxu0 0
    %1259 = vmatprep.subr.bf16.mxu0 0
    %1260 = vmatpush2.bf16.msra.mxu0 0
    %1261 = vmatprep.subr.bf16.mxu0 0
    %1262 = vmatpush2.bf16.msra.mxu0 0
    %1263 = vmatprep.subr.bf16.mxu0 0
    %1264 = vmatpush2.bf16.msra.mxu0 0
    %1265 = vmatprep.subr.bf16.mxu0 0
    %1266 = vmatpush2.bf16.msra.mxu0 0
    %1267 = vmatprep.subr.bf16.mxu0 0
    %1268 = vmatpush2.bf16.msra.mxu0 0
    %1269 = vmatprep.subr.bf16.mxu0 0
    %1270 = vmatpush2.bf16.msra.mxu0 0
    %1271 = vmatprep.mubr.bf16.mxu0 0
    %1272 = vmatmul.mubr.bf16.gmra.mxu0 %v1237
    %v1273 = vpop.f32.mrf.mxu0
    %v1274 = vadd.f32 0.0, %v1273
    %v1275 = vpop.f32.mrf.mxu0
    %v1276 = vadd.f32 0.0, %v1275
    %v1277 = vpop.f32.mrf.mxu0
    %v1278 = vadd.f32 0.0, %v1277
    %v1279 = vpop.f32.mrf.mxu0
    %v1280 = vadd.f32 0.0, %v1279
    %1281 = vdwg.mxu0
    %v1283 = vsel %vm1185, %v1231, 0
    %1285 = vmatprep.subr.bf16.mxu0 0
    %1286 = vmatpush1.bf16.msra.mxu0 0
    %1287 = vmatprep.subr.bf16.mxu0 0
    %1288 = vmatpush1.bf16.msra.mxu0 0
    %1289 = vmatprep.subr.bf16.mxu0 0
    %1290 = vmatpush1.bf16.msra.mxu0 0
    %1291 = vmatprep.subr.bf16.mxu0 0
    %1292 = vmatpush1.bf16.msra.mxu0 0
    %1293 = vmatprep.subr.bf16.mxu0 0
    %1294 = vmatpush1.bf16.msra.mxu0 0
    %1295 = vmatprep.subr.bf16.mxu0 0
    %1296 = vmatpush1.bf16.msra.mxu0 0
    %1297 = vmatprep.subr.bf16.mxu0 0
    %1298 = vmatpush1.bf16.msra.mxu0 0
    %1299 = vmatprep.subr.bf16.mxu0 %v1235
    %1300 = vmatpush1.bf16.msra.mxu0 %v1234
    %1301 = vmatprep.subr.bf16.mxu0 0
    %1302 = vmatpush2.bf16.msra.mxu0 0
    %1303 = vmatprep.subr.bf16.mxu0 0
    %1304 = vmatpush2.bf16.msra.mxu0 0
    %1305 = vmatprep.subr.bf16.mxu0 0
    %1306 = vmatpush2.bf16.msra.mxu0 0
    %1307 = vmatprep.subr.bf16.mxu0 0
    %1308 = vmatpush2.bf16.msra.mxu0 0
    %1309 = vmatprep.subr.bf16.mxu0 0
    %1310 = vmatpush2.bf16.msra.mxu0 0
    %1311 = vmatprep.subr.bf16.mxu0 0
    %1312 = vmatpush2.bf16.msra.mxu0 0
    %1313 = vmatprep.subr.bf16.mxu0 0
    %1314 = vmatpush2.bf16.msra.mxu0 0
    %1315 = vmatprep.subr.bf16.mxu0 0
    %1316 = vmatpush2.bf16.msra.mxu0 0
    %1317 = vmatprep.mubr.bf16.mxu0 0
    %1318 = vmatmul.mubr.bf16.gmra.mxu0 %v1283
    %v1319 = vpop.f32.mrf.mxu0
    %v1320 = vadd.f32 0.0, %v1319
    %v1321 = vpop.f32.mrf.mxu0
    %v1322 = vadd.f32 0.0, %v1321
    %v1323 = vpop.f32.mrf.mxu0
    %v1324 = vadd.f32 0.0, %v1323
    %v1325 = vpop.f32.mrf.mxu0
    %v1326 = vadd.f32 0.0, %v1325
    %1327 = vdwg.mxu0
    %v1328 = vpack.c.bf16 %v1278, %v1274
    %v1329 = vpack.c.bf16 %v1280, %v1276
    %v1330 = vpack.c.bf16 %v1324, %v1320
    %v1331 = vpack.c.bf16 %v1326, %v1322
    %v1332 = vld [vmem:[%s6] sm:$0xff]
    %v1333 = vld [vmem:[%s6 + $0x8] sm:$0xff]
    %v1334 = vld [vmem:[%s6 + $0x10] sm:$0xff]
    %v1335 = vld [vmem:[%s6 + $0x18] sm:$0xff]
    %v1336 = vld [vmem:[%s6 + $0x20] sm:$0xff]
    %v1337 = vld [vmem:[%s6 + $0x28] sm:$0xff]
    %v1338 = vld [vmem:[%s6 + $0x30] sm:$0xff]
    %v1339 = vld [vmem:[%s6 + $0x38] sm:$0xff]
    %v1340 = vld [vmem:[%s6 + $0x40] sm:$0xff]
    %v1341 = vld [vmem:[%s6 + $0x48] sm:$0xff]
    %v1342 = vld [vmem:[%s6 + $0x50] sm:$0xff]
    %v1343 = vld [vmem:[%s6 + $0x58] sm:$0xff]
    %v1344 = vld [vmem:[%s6 + $0x60] sm:$0xff]
    %v1345 = vld [vmem:[%s6 + $0x68] sm:$0xff]
    %v1346 = vld [vmem:[%s6 + $0x70] sm:$0xff]
    %v1347 = vld [vmem:[%s6 + $0x78] sm:$0xff]
    %v1348 = vld [vmem:[%s6 + $0x80] sm:$0xff]
    %v1349 = vld [vmem:[%s6 + $0x88] sm:$0xff]
    %v1350 = vld [vmem:[%s6 + $0x90] sm:$0xff]
    %v1351 = vld [vmem:[%s6 + $0x98] sm:$0xff]
    %v1352 = vld [vmem:[%s6 + $0xa0] sm:$0xff]
    %v1353 = vld [vmem:[%s6 + $0xa8] sm:$0xff]
    %v1354 = vld [vmem:[%s6 + $0xb0] sm:$0xff]
    %v1355 = vld [vmem:[%s6 + $0xb8] sm:$0xff]
    %v1356 = vld [vmem:[%s6 + $0xc0] sm:$0xff]
    %v1357 = vld [vmem:[%s6 + $0xc8] sm:$0xff]
    %v1358 = vld [vmem:[%s6 + $0xd0] sm:$0xff]
    %v1359 = vld [vmem:[%s6 + $0xd8] sm:$0xff]
    %v1360 = vld [vmem:[%s6 + $0xe0] sm:$0xff]
    %v1361 = vld [vmem:[%s6 + $0xe8] sm:$0xff]
    %v1362 = vld [vmem:[%s6 + $0xf0] sm:$0xff]
    %v1363 = vld [vmem:[%s6 + $0xf8] sm:$0xff]
    %v1396 = vunpack.c.l.b16 %v1332
    %v1397 = vunpack.c.h.b16 %v1332
    %v1398 = vunpack.c.l.b16 %v1333
    %v1399 = vunpack.c.h.b16 %v1333
    %v1400 = vunpack.c.l.b16 %v1334
    %v1401 = vunpack.c.h.b16 %v1334
    %v1402 = vunpack.c.l.b16 %v1335
    %v1403 = vunpack.c.h.b16 %v1335
    %v1404 = vunpack.c.l.b16 %v1336
    %v1405 = vunpack.c.h.b16 %v1336
    %v1406 = vunpack.c.l.b16 %v1337
    %v1407 = vunpack.c.h.b16 %v1337
    %v1408 = vunpack.c.l.b16 %v1338
    %v1409 = vunpack.c.h.b16 %v1338
    %v1410 = vunpack.c.l.b16 %v1339
    %v1411 = vunpack.c.h.b16 %v1339
    %v1412 = vunpack.c.l.b16 %v1340
    %v1413 = vunpack.c.h.b16 %v1340
    %v1414 = vunpack.c.l.b16 %v1341
    %v1415 = vunpack.c.h.b16 %v1341
    %v1416 = vunpack.c.l.b16 %v1342
    %v1417 = vunpack.c.h.b16 %v1342
    %v1418 = vunpack.c.l.b16 %v1343
    %v1419 = vunpack.c.h.b16 %v1343
    %v1420 = vunpack.c.l.b16 %v1344
    %v1421 = vunpack.c.h.b16 %v1344
    %v1422 = vunpack.c.l.b16 %v1345
    %v1423 = vunpack.c.h.b16 %v1345
    %v1424 = vunpack.c.l.b16 %v1346
    %v1425 = vunpack.c.h.b16 %v1346
    %v1426 = vunpack.c.l.b16 %v1347
    %v1427 = vunpack.c.h.b16 %v1347
    %v1428 = vunpack.c.l.b16 %v1348
    %v1429 = vunpack.c.h.b16 %v1348
    %v1430 = vunpack.c.l.b16 %v1349
    %v1431 = vunpack.c.h.b16 %v1349
    %v1432 = vunpack.c.l.b16 %v1350
    %v1433 = vunpack.c.h.b16 %v1350
    %v1434 = vunpack.c.l.b16 %v1351
    %v1435 = vunpack.c.h.b16 %v1351
    %v1436 = vunpack.c.l.b16 %v1352
    %v1437 = vunpack.c.h.b16 %v1352
    %v1438 = vunpack.c.l.b16 %v1353
    %v1439 = vunpack.c.h.b16 %v1353
    %v1440 = vunpack.c.l.b16 %v1354
    %v1441 = vunpack.c.h.b16 %v1354
    %v1442 = vunpack.c.l.b16 %v1355
    %v1443 = vunpack.c.h.b16 %v1355
    %v1444 = vunpack.c.l.b16 %v1356
    %v1445 = vunpack.c.h.b16 %v1356
    %v1446 = vunpack.c.l.b16 %v1357
    %v1447 = vunpack.c.h.b16 %v1357
    %v1448 = vunpack.c.l.b16 %v1358
    %v1449 = vunpack.c.h.b16 %v1358
    %v1450 = vunpack.c.l.b16 %v1359
    %v1451 = vunpack.c.h.b16 %v1359
    %v1452 = vunpack.c.l.b16 %v1360
    %v1453 = vunpack.c.h.b16 %v1360
    %v1454 = vunpack.c.l.b16 %v1361
    %v1455 = vunpack.c.h.b16 %v1361
    %v1456 = vunpack.c.l.b16 %v1362
    %v1457 = vunpack.c.h.b16 %v1362
    %v1458 = vunpack.c.l.b16 %v1363
    %v1459 = vunpack.c.h.b16 %v1363
    %v1460 = vpack.c.b16 %v1398, %v1396
    %v1461 = vpack.c.b16 %v1399, %v1397
    %v1462 = vpack.c.b16 %v1402, %v1400
    %v1463 = vpack.c.b16 %v1403, %v1401
    %v1464 = vpack.c.b16 %v1406, %v1404
    %v1465 = vpack.c.b16 %v1407, %v1405
    %v1466 = vpack.c.b16 %v1410, %v1408
    %v1467 = vpack.c.b16 %v1411, %v1409
    %v1468 = vpack.c.b16 %v1414, %v1412
    %v1469 = vpack.c.b16 %v1415, %v1413
    %v1470 = vpack.c.b16 %v1418, %v1416
    %v1471 = vpack.c.b16 %v1419, %v1417
    %v1472 = vpack.c.b16 %v1422, %v1420
    %v1473 = vpack.c.b16 %v1423, %v1421
    %v1474 = vpack.c.b16 %v1426, %v1424
    %v1475 = vpack.c.b16 %v1427, %v1425
    %v1476 = vpack.c.b16 %v1430, %v1428
    %v1477 = vpack.c.b16 %v1431, %v1429
    %v1478 = vpack.c.b16 %v1434, %v1432
    %v1479 = vpack.c.b16 %v1435, %v1433
    %v1480 = vpack.c.b16 %v1438, %v1436
    %v1481 = vpack.c.b16 %v1439, %v1437
    %v1482 = vpack.c.b16 %v1442, %v1440
    %v1483 = vpack.c.b16 %v1443, %v1441
    %v1484 = vpack.c.b16 %v1446, %v1444
    %v1485 = vpack.c.b16 %v1447, %v1445
    %v1486 = vpack.c.b16 %v1450, %v1448
    %v1487 = vpack.c.b16 %v1451, %v1449
    %v1488 = vpack.c.b16 %v1454, %v1452
    %v1489 = vpack.c.b16 %v1455, %v1453
    %v1490 = vpack.c.b16 %v1458, %v1456
    %v1491 = vpack.c.b16 %v1459, %v1457
    %1524 = vmatprep.subr.bf16.mxu0 %v1475
    %1525 = vmatpush1.bf16.msra.mxu0 %v1474
    %1526 = vmatprep.subr.bf16.mxu0 %v1473
    %1527 = vmatpush1.bf16.msra.mxu0 %v1472
    %1528 = vmatprep.subr.bf16.mxu0 %v1471
    %1529 = vmatpush1.bf16.msra.mxu0 %v1470
    %1530 = vmatprep.subr.bf16.mxu0 %v1469
    %1531 = vmatpush1.bf16.msra.mxu0 %v1468
    %1532 = vmatprep.subr.bf16.mxu0 %v1467
    %1533 = vmatpush1.bf16.msra.mxu0 %v1466
    %1534 = vmatprep.subr.bf16.mxu0 %v1465
    %1535 = vmatpush1.bf16.msra.mxu0 %v1464
    %1536 = vmatprep.subr.bf16.mxu0 %v1463
    %1537 = vmatpush1.bf16.msra.mxu0 %v1462
    %1538 = vmatprep.subr.bf16.mxu0 %v1461
    %1539 = vmatpush1.bf16.msra.mxu0 %v1460
    %1540 = vmatprep.subr.bf16.mxu0 %v1491
    %1541 = vmatpush2.bf16.msra.mxu0 %v1490
    %1542 = vmatprep.subr.bf16.mxu0 %v1489
    %1543 = vmatpush2.bf16.msra.mxu0 %v1488
    %1544 = vmatprep.subr.bf16.mxu0 %v1487
    %1545 = vmatpush2.bf16.msra.mxu0 %v1486
    %1546 = vmatprep.subr.bf16.mxu0 %v1485
    %1547 = vmatpush2.bf16.msra.mxu0 %v1484
    %1548 = vmatprep.subr.bf16.mxu0 %v1483
    %1549 = vmatpush2.bf16.msra.mxu0 %v1482
    %1550 = vmatprep.subr.bf16.mxu0 %v1481
    %1551 = vmatpush2.bf16.msra.mxu0 %v1480
    %1552 = vmatprep.subr.bf16.mxu0 %v1479
    %1553 = vmatpush2.bf16.msra.mxu0 %v1478
    %1554 = vmatprep.subr.bf16.mxu0 %v1477
    %1555 = vmatpush2.bf16.msra.mxu0 %v1476
    %1556 = vmatprep.mubr.bf16.mxu0 %v1329
    %1557 = vmatmul.mubr.bf16.gmra.mxu0 %v1328
    %v1558 = vpop.f32.mrf.mxu0
    %v1559 = vadd.f32 0.0, %v1558
    %v1560 = vpop.f32.mrf.mxu0
    %v1561 = vadd.f32 0.0, %v1560
    %v1562 = vpop.f32.mrf.mxu0
    %v1563 = vadd.f32 0.0, %v1562
    %v1564 = vpop.f32.mrf.mxu0
    %v1565 = vadd.f32 0.0, %v1564
    %1566 = vmatprep.mubr.bf16.mxu0 %v1331
    %1567 = vmatmul.mubr.bf16.gmra.mxu0 %v1330
    %v1568 = vpop.f32.mrf.mxu0
    %v1569 = vadd.f32 0.0, %v1568
    %v1570 = vpop.f32.mrf.mxu0
    %v1571 = vadd.f32 0.0, %v1570
    %v1572 = vpop.f32.mrf.mxu0
    %v1573 = vadd.f32 0.0, %v1572
    %v1574 = vpop.f32.mrf.mxu0
    %v1575 = vadd.f32 0.0, %v1574
    %1576 = vdwg.mxu0
    %v1577 = vadd.f32 %v183, %v1559
    %v1578 = vadd.f32 %v184, %v1561
    %v1579 = vadd.f32 %v185, %v1563
    %v1580 = vadd.f32 %v186, %v1565
    %v1581 = vadd.f32 %v187, %v1569
    %v1582 = vadd.f32 %v188, %v1571
    %v1583 = vadd.f32 %v189, %v1573
    %v1584 = vadd.f32 %v190, %v1575
    %v1585 = vld [vmem:[#allocation17 + $0x6] sm:$0x3]
    %v1587 = vlaneseq
    %v1588 = vshrl.u32 %v1587, 7
    %v1589 = vsub.s32 0, %v1588
    %v1590 = vrot.slane %v1585, %v1589
    %v1591 = vlaneseq
    %v1592 = vshrl.u32 %v1591, 7
    %v1593 = vsub.s32 1, %v1592
    %v1594 = vrot.slane %v1585, %v1593
    %v1597 = vadd.f32 %v1577, %v1590
    %v1598 = vadd.f32 %v1578, %v1594
    %v1599 = vadd.f32 %v1579, %v1590
    %v1600 = vadd.f32 %v1580, %v1594
    %v1601 = vadd.f32 %v1581, %v1590
    %v1602 = vadd.f32 %v1582, %v1594
    %v1603 = vadd.f32 %v1583, %v1590
    %v1604 = vadd.f32 %v1584, %v1594
    %v1605 = vadd.f32 %v1597, %v1598
    %1606 = vadd.xlane.f32.xlu0 %v1605
    %v1607 = vpop.xlane.xlu0 %1606
    %v1608 = vadd.f32 %v1599, %v1600
    %1609 = vadd.xlane.f32.xlu0 %v1608
    %v1610 = vpop.xlane.xlu0 %1609
    %v1611 = vadd.f32 %v1601, %v1602
    %1612 = vadd.xlane.f32.xlu0 %v1611
    %v1613 = vpop.xlane.xlu0 %1612
    %v1614 = vadd.f32 %v1603, %v1604
    %1615 = vadd.xlane.f32.xlu0 %v1614
    %v1616 = vpop.xlane.xlu0 %1615
    %v1617 = vmul.f32 %v1607, %v223
    %v1618 = vmul.f32 %v1610, %v223
    %v1619 = vmul.f32 %v1613, %v223
    %v1620 = vmul.f32 %v1616, %v223
    %v1621 = vsub.f32 %v1597, %v1617
    %v1622 = vsub.f32 %v1598, %v1617
    %v1623 = vsub.f32 %v1599, %v1618
    %v1624 = vsub.f32 %v1600, %v1618
    %v1625 = vsub.f32 %v1601, %v1619
    %v1626 = vsub.f32 %v1602, %v1619
    %v1627 = vsub.f32 %v1603, %v1620
    %v1628 = vsub.f32 %v1604, %v1620
    %v1629 = vmul.f32 %v1621, %v1621
    %v1630 = vmul.f32 %v1622, %v1622
    %v1631 = vmul.f32 %v1623, %v1623
    %v1632 = vmul.f32 %v1624, %v1624
    %v1633 = vmul.f32 %v1625, %v1625
    %v1634 = vmul.f32 %v1626, %v1626
    %v1635 = vmul.f32 %v1627, %v1627
    %v1636 = vmul.f32 %v1628, %v1628
    %v1637 = vadd.f32 %v1629, %v1630
    %1638 = vadd.xlane.f32.xlu0 %v1637
    %v1639 = vpop.xlane.xlu0 %1638
    %v1640 = vadd.f32 %v1631, %v1632
    %1641 = vadd.xlane.f32.xlu0 %v1640
    %v1642 = vpop.xlane.xlu0 %1641
    %v1643 = vadd.f32 %v1633, %v1634
    %1644 = vadd.xlane.f32.xlu0 %v1643
    %v1645 = vpop.xlane.xlu0 %1644
    %v1646 = vadd.f32 %v1635, %v1636
    %1647 = vadd.xlane.f32.xlu0 %v1646
    %v1648 = vpop.xlane.xlu0 %1647
    %v1649 = vmul.f32 %v1639, %v223
    %v1650 = vmul.f32 %v1642, %v223
    %v1651 = vmul.f32 %v1645, %v223
    %v1652 = vmul.f32 %v1648, %v223
    %v1653 = vadd.f32 %v1649, 1e-05
    %v1654 = vadd.f32 %v1650, 1e-05
    %v1655 = vadd.f32 %v1651, 1e-05
    %v1656 = vadd.f32 %v1652, 1e-05
    %v1657 = vrsqrt.pop %v1653
    %v1658 = vrsqrt.pop %v1654
    %v1659 = vrsqrt.pop %v1655
    %v1660 = vrsqrt.pop %v1656
    %v1661 = vmul.f32 %v1621, %v1657
    %v1662 = vmul.f32 %v1622, %v1657
    %v1663 = vmul.f32 %v1623, %v1658
    %v1664 = vmul.f32 %v1624, %v1658
    %v1665 = vmul.f32 %v1625, %v1659
    %v1666 = vmul.f32 %v1626, %v1659
    %v1667 = vmul.f32 %v1627, %v1660
    %v1668 = vmul.f32 %v1628, %v1660
    %v1669 = vpack.c.bf16 %v1663, %v1661
    %v1670 = vpack.c.bf16 %v1664, %v1662
    %v1671 = vpack.c.bf16 %v1667, %v1665
    %v1672 = vpack.c.bf16 %v1668, %v1666
    %v1673 = vld [vmem:[#allocation8] sm:$0xff]
    %v1674 = vld [vmem:[#allocation8 + $0x8] sm:$0xff]
    %v1675 = vld [vmem:[#allocation8 + $0x10] sm:$0xff]
    %v1676 = vld [vmem:[#allocation8 + $0x18] sm:$0xff]
    %v1677 = vld [vmem:[#allocation8 + $0x20] sm:$0xff]
    %v1678 = vld [vmem:[#allocation8 + $0x28] sm:$0xff]
    %v1679 = vld [vmem:[#allocation8 + $0x30] sm:$0xff]
    %v1680 = vld [vmem:[#allocation8 + $0x38] sm:$0xff]
    %v1681 = vld [vmem:[#allocation8 + $0x40] sm:$0xff]
    %v1682 = vld [vmem:[#allocation8 + $0x48] sm:$0xff]
    %v1683 = vld [vmem:[#allocation8 + $0x50] sm:$0xff]
    %v1684 = vld [vmem:[#allocation8 + $0x58] sm:$0xff]
    %v1685 = vld [vmem:[#allocation8 + $0x60] sm:$0xff]
    %v1686 = vld [vmem:[#allocation8 + $0x68] sm:$0xff]
    %v1687 = vld [vmem:[#allocation8 + $0x70] sm:$0xff]
    %v1688 = vld [vmem:[#allocation8 + $0x78] sm:$0xff]
    %v1689 = vld [vmem:[#allocation8 + $0x80] sm:$0xff]
    %v1690 = vld [vmem:[#allocation8 + $0x88] sm:$0xff]
    %v1691 = vld [vmem:[#allocation8 + $0x90] sm:$0xff]
    %v1692 = vld [vmem:[#allocation8 + $0x98] sm:$0xff]
    %v1693 = vld [vmem:[#allocation8 + $0xa0] sm:$0xff]
    %v1694 = vld [vmem:[#allocation8 + $0xa8] sm:$0xff]
    %v1695 = vld [vmem:[#allocation8 + $0xb0] sm:$0xff]
    %v1696 = vld [vmem:[#allocation8 + $0xb8] sm:$0xff]
    %v1697 = vld [vmem:[#allocation8 + $0xc0] sm:$0xff]
    %v1698 = vld [vmem:[#allocation8 + $0xc8] sm:$0xff]
    %v1699 = vld [vmem:[#allocation8 + $0xd0] sm:$0xff]
    %v1700 = vld [vmem:[#allocation8 + $0xd8] sm:$0xff]
    %v1701 = vld [vmem:[#allocation8 + $0xe0] sm:$0xff]
    %v1702 = vld [vmem:[#allocation8 + $0xe8] sm:$0xff]
    %v1703 = vld [vmem:[#allocation8 + $0xf0] sm:$0xff]
    %v1704 = vld [vmem:[#allocation8 + $0xf8] sm:$0xff]
    %v1705 = vld [vmem:[#allocation17 + $0x8] sm:$0x3]
    %v1707 = vlaneseq
    %v1708 = vshrl.u32 %v1707, 7
    %v1709 = vsub.s32 0, %v1708
    %v1710 = vrot.slane %v1705, %v1709
    %v1711 = vlaneseq
    %v1712 = vshrl.u32 %v1711, 7
    %v1713 = vsub.s32 1, %v1712
    %v1714 = vrot.slane %v1705, %v1713
    %v1749 = vunpack.c.l.b16 %v1673
    %v1750 = vunpack.c.h.b16 %v1673
    %v1751 = vunpack.c.l.b16 %v1674
    %v1752 = vunpack.c.h.b16 %v1674
    %v1753 = vunpack.c.l.b16 %v1675
    %v1754 = vunpack.c.h.b16 %v1675
    %v1755 = vunpack.c.l.b16 %v1676
    %v1756 = vunpack.c.h.b16 %v1676
    %v1757 = vunpack.c.l.b16 %v1677
    %v1758 = vunpack.c.h.b16 %v1677
    %v1759 = vunpack.c.l.b16 %v1678
    %v1760 = vunpack.c.h.b16 %v1678
    %v1761 = vunpack.c.l.b16 %v1679
    %v1762 = vunpack.c.h.b16 %v1679
    %v1763 = vunpack.c.l.b16 %v1680
    %v1764 = vunpack.c.h.b16 %v1680
    %v1765 = vunpack.c.l.b16 %v1681
    %v1766 = vunpack.c.h.b16 %v1681
    %v1767 = vunpack.c.l.b16 %v1682
    %v1768 = vunpack.c.h.b16 %v1682
    %v1769 = vunpack.c.l.b16 %v1683
    %v1770 = vunpack.c.h.b16 %v1683
    %v1771 = vunpack.c.l.b16 %v1684
    %v1772 = vunpack.c.h.b16 %v1684
    %v1773 = vunpack.c.l.b16 %v1685
    %v1774 = vunpack.c.h.b16 %v1685
    %v1775 = vunpack.c.l.b16 %v1686
    %v1776 = vunpack.c.h.b16 %v1686
    %v1777 = vunpack.c.l.b16 %v1687
    %v1778 = vunpack.c.h.b16 %v1687
    %v1779 = vunpack.c.l.b16 %v1688
    %v1780 = vunpack.c.h.b16 %v1688
    %v1781 = vunpack.c.l.b16 %v1689
    %v1782 = vunpack.c.h.b16 %v1689
    %v1783 = vunpack.c.l.b16 %v1690
    %v1784 = vunpack.c.h.b16 %v1690
    %v1785 = vunpack.c.l.b16 %v1691
    %v1786 = vunpack.c.h.b16 %v1691
    %v1787 = vunpack.c.l.b16 %v1692
    %v1788 = vunpack.c.h.b16 %v1692
    %v1789 = vunpack.c.l.b16 %v1693
    %v1790 = vunpack.c.h.b16 %v1693
    %v1791 = vunpack.c.l.b16 %v1694
    %v1792 = vunpack.c.h.b16 %v1694
    %v1793 = vunpack.c.l.b16 %v1695
    %v1794 = vunpack.c.h.b16 %v1695
    %v1795 = vunpack.c.l.b16 %v1696
    %v1796 = vunpack.c.h.b16 %v1696
    %v1797 = vunpack.c.l.b16 %v1697
    %v1798 = vunpack.c.h.b16 %v1697
    %v1799 = vunpack.c.l.b16 %v1698
    %v1800 = vunpack.c.h.b16 %v1698
    %v1801 = vunpack.c.l.b16 %v1699
    %v1802 = vunpack.c.h.b16 %v1699
    %v1803 = vunpack.c.l.b16 %v1700
    %v1804 = vunpack.c.h.b16 %v1700
    %v1805 = vunpack.c.l.b16 %v1701
    %v1806 = vunpack.c.h.b16 %v1701
    %v1807 = vunpack.c.l.b16 %v1702
    %v1808 = vunpack.c.h.b16 %v1702
    %v1809 = vunpack.c.l.b16 %v1703
    %v1810 = vunpack.c.h.b16 %v1703
    %v1811 = vunpack.c.l.b16 %v1704
    %v1812 = vunpack.c.h.b16 %v1704
    %v1813 = vpack.c.b16 %v1751, %v1749
    %v1814 = vpack.c.b16 %v1752, %v1750
    %v1815 = vpack.c.b16 %v1755, %v1753
    %v1816 = vpack.c.b16 %v1756, %v1754
    %v1817 = vpack.c.b16 %v1759, %v1757
    %v1818 = vpack.c.b16 %v1760, %v1758
    %v1819 = vpack.c.b16 %v1763, %v1761
    %v1820 = vpack.c.b16 %v1764, %v1762
    %v1821 = vpack.c.b16 %v1767, %v1765
    %v1822 = vpack.c.b16 %v1768, %v1766
    %v1823 = vpack.c.b16 %v1771, %v1769
    %v1824 = vpack.c.b16 %v1772, %v1770
    %v1825 = vpack.c.b16 %v1775, %v1773
    %v1826 = vpack.c.b16 %v1776, %v1774
    %v1827 = vpack.c.b16 %v1779, %v1777
    %v1828 = vpack.c.b16 %v1780, %v1778
    %v1829 = vpack.c.b16 %v1783, %v1781
    %v1830 = vpack.c.b16 %v1784, %v1782
    %v1831 = vpack.c.b16 %v1787, %v1785
    %v1832 = vpack.c.b16 %v1788, %v1786
    %v1833 = vpack.c.b16 %v1791, %v1789
    %v1834 = vpack.c.b16 %v1792, %v1790
    %v1835 = vpack.c.b16 %v1795, %v1793
    %v1836 = vpack.c.b16 %v1796, %v1794
    %v1837 = vpack.c.b16 %v1799, %v1797
    %v1838 = vpack.c.b16 %v1800, %v1798
    %v1839 = vpack.c.b16 %v1803, %v1801
    %v1840 = vpack.c.b16 %v1804, %v1802
    %v1841 = vpack.c.b16 %v1807, %v1805
    %v1842 = vpack.c.b16 %v1808, %v1806
    %v1843 = vpack.c.b16 %v1811, %v1809
    %v1844 = vpack.c.b16 %v1812, %v1810
    %1877 = vmatprep.subr.bf16.mxu0 %v1828
    %1878 = vmatpush1.bf16.msra.mxu0 %v1827
    %1879 = vmatprep.subr.bf16.mxu0 %v1826
    %1880 = vmatpush1.bf16.msra.mxu0 %v1825
    %1881 = vmatprep.subr.bf16.mxu0 %v1824
    %1882 = vmatpush1.bf16.msra.mxu0 %v1823
    %1883 = vmatprep.subr.bf16.mxu0 %v1822
    %1884 = vmatpush1.bf16.msra.mxu0 %v1821
    %1885 = vmatprep.subr.bf16.mxu0 %v1820
    %1886 = vmatpush1.bf16.msra.mxu0 %v1819
    %1887 = vmatprep.subr.bf16.mxu0 %v1818
    %1888 = vmatpush1.bf16.msra.mxu0 %v1817
    %1889 = vmatprep.subr.bf16.mxu0 %v1816
    %1890 = vmatpush1.bf16.msra.mxu0 %v1815
    %1891 = vmatprep.subr.bf16.mxu0 %v1814
    %1892 = vmatpush1.bf16.msra.mxu0 %v1813
    %1893 = vmatprep.subr.bf16.mxu0 %v1844
    %1894 = vmatpush2.bf16.msra.mxu0 %v1843
    %1895 = vmatprep.subr.bf16.mxu0 %v1842
    %1896 = vmatpush2.bf16.msra.mxu0 %v1841
    %1897 = vmatprep.subr.bf16.mxu0 %v1840
    %1898 = vmatpush2.bf16.msra.mxu0 %v1839
    %1899 = vmatprep.subr.bf16.mxu0 %v1838
    %1900 = vmatpush2.bf16.msra.mxu0 %v1837
    %1901 = vmatprep.subr.bf16.mxu0 %v1836
    %1902 = vmatpush2.bf16.msra.mxu0 %v1835
    %1903 = vmatprep.subr.bf16.mxu0 %v1834
    %1904 = vmatpush2.bf16.msra.mxu0 %v1833
    %1905 = vmatprep.subr.bf16.mxu0 %v1832
    %1906 = vmatpush2.bf16.msra.mxu0 %v1831
    %1907 = vmatprep.subr.bf16.mxu0 %v1830
    %1908 = vmatpush2.bf16.msra.mxu0 %v1829
    %1909 = vmatprep.mubr.bf16.mxu0 %v1670
    %1910 = vmatmul.mubr.bf16.gmra.mxu0 %v1669
    %v1911 = vpop.f32.mrf.mxu0
    %v1912 = vadd.f32 %v1710, %v1911
    %v1913 = vpop.f32.mrf.mxu0
    %v1914 = vadd.f32 %v1714, %v1913
    %v1915 = vpop.f32.mrf.mxu0
    %v1916 = vadd.f32 %v1710, %v1915
    %v1917 = vpop.f32.mrf.mxu0
    %v1918 = vadd.f32 %v1714, %v1917
    %1919 = vmatprep.mubr.bf16.mxu0 %v1672
    %1920 = vmatmul.mubr.bf16.gmra.mxu0 %v1671
    %v1921 = vpop.f32.mrf.mxu0
    %v1922 = vadd.f32 %v1710, %v1921
    %v1923 = vpop.f32.mrf.mxu0
    %v1924 = vadd.f32 %v1714, %v1923
    %v1925 = vpop.f32.mrf.mxu0
    %v1926 = vadd.f32 %v1710, %v1925
    %v1927 = vpop.f32.mrf.mxu0
    %v1928 = vadd.f32 %v1714, %v1927
    %1929 = vdwg.mxu0
    %v1930 = vmul.f32 %v1912, %v191
    %v1931 = vmul.f32 %v1916, %v193
    %v1932 = vmul.f32 %v1922, %v191
    %v1933 = vmul.f32 %v1926, %v193
    %v1934 = vmul.f32 %v1914, %v192
    %v1935 = vmul.f32 %v1918, %v194
    %v1936 = vmul.f32 %v1924, %v192
    %v1937 = vmul.f32 %v1928, %v194
    %v1938 = vsub.f32 %v1930, %v1934
    %v1939 = vsub.f32 %v1931, %v1935
    %v1940 = vsub.f32 %v1932, %v1936
    %v1941 = vsub.f32 %v1933, %v1937
    %v1942 = vmul.f32 %v1912, %v192
    %v1943 = vmul.f32 %v1916, %v194
    %v1944 = vmul.f32 %v1922, %v192
    %v1945 = vmul.f32 %v1926, %v194
    %v1946 = vmul.f32 %v1914, %v191
    %v1947 = vmul.f32 %v1918, %v193
    %v1948 = vmul.f32 %v1924, %v191
    %v1949 = vmul.f32 %v1928, %v193
    %v1950 = vadd.f32 %v1942, %v1946
    %v1951 = vadd.f32 %v1943, %v1947
    %v1952 = vadd.f32 %v1944, %v1948
    %v1953 = vadd.f32 %v1945, %v1949
    %v1954 = vld [vmem:[%s1] sm:$0xff]
    %v1955 = vld [vmem:[%s1 + $0x8] sm:$0xff]
    %v1956 = vld [vmem:[%s1 + $0x10] sm:$0xff]
    %v1957 = vld [vmem:[%s1 + $0x18] sm:$0xff]
    %v1958 = vld [vmem:[%s1 + $0x20] sm:$0xff]
    %v1959 = vld [vmem:[%s1 + $0x28] sm:$0xff]
    %v1960 = vld [vmem:[%s1 + $0x30] sm:$0xff]
    %v1961 = vld [vmem:[%s1 + $0x38] sm:$0xff]
    %v1962 = vld [vmem:[%s1 + $0x40] sm:$0xff]
    %v1963 = vld [vmem:[%s1 + $0x48] sm:$0xff]
    %v1964 = vld [vmem:[%s1 + $0x50] sm:$0xff]
    %v1965 = vld [vmem:[%s1 + $0x58] sm:$0xff]
    %v1966 = vld [vmem:[%s1 + $0x60] sm:$0xff]
    %v1967 = vld [vmem:[%s1 + $0x68] sm:$0xff]
    %v1968 = vld [vmem:[%s1 + $0x70] sm:$0xff]
    %v1969 = vld [vmem:[%s1 + $0x78] sm:$0xff]
    %v1970 = vld [vmem:[%s2] sm:$0xff]
    %v1971 = vld [vmem:[%s2 + $0x8] sm:$0xff]
    %v1972 = vld [vmem:[%s2 + $0x10] sm:$0xff]
    %v1973 = vld [vmem:[%s2 + $0x18] sm:$0xff]
    %v1974 = vld [vmem:[%s2 + $0x20] sm:$0xff]
    %v1975 = vld [vmem:[%s2 + $0x28] sm:$0xff]
    %v1976 = vld [vmem:[%s2 + $0x30] sm:$0xff]
    %v1977 = vld [vmem:[%s2 + $0x38] sm:$0xff]
    %v1978 = vld [vmem:[%s2 + $0x40] sm:$0xff]
    %v1979 = vld [vmem:[%s2 + $0x48] sm:$0xff]
    %v1980 = vld [vmem:[%s2 + $0x50] sm:$0xff]
    %v1981 = vld [vmem:[%s2 + $0x58] sm:$0xff]
    %v1982 = vld [vmem:[%s2 + $0x60] sm:$0xff]
    %v1983 = vld [vmem:[%s2 + $0x68] sm:$0xff]
    %v1984 = vld [vmem:[%s2 + $0x70] sm:$0xff]
    %v1985 = vld [vmem:[%s2 + $0x78] sm:$0xff]
    %v1986 = vadd.f32 %v1954, %v1970
    %v1987 = vadd.f32 %v1955, %v1971
    %v1988 = vadd.f32 %v1956, %v1972
    %v1989 = vadd.f32 %v1957, %v1973
    %v1990 = vadd.f32 %v1958, %v1974
    %v1991 = vadd.f32 %v1959, %v1975
    %v1992 = vadd.f32 %v1960, %v1976
    %v1993 = vadd.f32 %v1961, %v1977
    %v1994 = vadd.f32 %v1962, %v1978
    %v1995 = vadd.f32 %v1963, %v1979
    %v1996 = vadd.f32 %v1964, %v1980
    %v1997 = vadd.f32 %v1965, %v1981
    %v1998 = vadd.f32 %v1966, %v1982
    %v1999 = vadd.f32 %v1967, %v1983
    %v2000 = vadd.f32 %v1968, %v1984
    %v2001 = vadd.f32 %v1969, %v1985
    %v2002 = vpack.c.bf16 %v1987, %v1986
    %v2003 = vpack.c.bf16 %v1989, %v1988
    %v2004 = vpack.c.bf16 %v1991, %v1990
    %v2005 = vpack.c.bf16 %v1993, %v1992
    %v2006 = vpack.c.bf16 %v1995, %v1994
    %v2007 = vpack.c.bf16 %v1997, %v1996
    %v2008 = vpack.c.bf16 %v1999, %v1998
    %v2009 = vpack.c.bf16 %v2001, %v2000
    %v2010 = vld [vmem:[#allocation10] sm:$0xff]
    %v2011 = vld [vmem:[#allocation10 + $0x8] sm:$0xff]
    %v2012 = vld [vmem:[#allocation10 + $0x10] sm:$0xff]
    %v2013 = vld [vmem:[#allocation10 + $0x18] sm:$0xff]
    %v2014 = vld [vmem:[#allocation10 + $0x20] sm:$0xff]
    %v2015 = vld [vmem:[#allocation10 + $0x28] sm:$0xff]
    %v2016 = vld [vmem:[#allocation10 + $0x30] sm:$0xff]
    %v2017 = vld [vmem:[#allocation10 + $0x38] sm:$0xff]
    %v2018 = vld [vmem:[#allocation17 + $0xa] sm:$0x3]
    %v2020 = vlaneseq
    %v2021 = vshrl.u32 %v2020, 7
    %v2022 = vsub.s32 0, %v2021
    %v2023 = vrot.slane %v2018, %v2022
    %v2024 = vlaneseq
    %v2025 = vshrl.u32 %v2024, 7
    %v2026 = vsub.s32 1, %v2025
    %v2027 = vrot.slane %v2018, %v2026
    %v2038 = vunpack.c.l.b16 %v2010
    %v2039 = vunpack.c.h.b16 %v2010
    %v2040 = vunpack.c.l.b16 %v2011
    %v2041 = vunpack.c.h.b16 %v2011
    %v2042 = vunpack.c.l.b16 %v2012
    %v2043 = vunpack.c.h.b16 %v2012
    %v2044 = vunpack.c.l.b16 %v2013
    %v2045 = vunpack.c.h.b16 %v2013
    %v2046 = vunpack.c.l.b16 %v2014
    %v2047 = vunpack.c.h.b16 %v2014
    %v2048 = vunpack.c.l.b16 %v2015
    %v2049 = vunpack.c.h.b16 %v2015
    %v2050 = vunpack.c.l.b16 %v2016
    %v2051 = vunpack.c.h.b16 %v2016
    %v2052 = vunpack.c.l.b16 %v2017
    %v2053 = vunpack.c.h.b16 %v2017
    %v2054 = vpack.c.b16 %v2040, %v2038
    %v2055 = vpack.c.b16 %v2041, %v2039
    %v2056 = vpack.c.b16 %v2044, %v2042
    %v2057 = vpack.c.b16 %v2045, %v2043
    %v2058 = vpack.c.b16 %v2048, %v2046
    %v2059 = vpack.c.b16 %v2049, %v2047
    %v2060 = vpack.c.b16 %v2052, %v2050
    %v2061 = vpack.c.b16 %v2053, %v2051
    %vm2070 = vcmask 523264
    %v2072 = vsel %vm2070, %v2002, 0
    %v2075 = vsel %vm2070, %v2003, 0
    %v2078 = vsel %vm2070, %v2004, 0
    %v2081 = vsel %vm2070, %v2005, 0
    %v2084 = vsel %vm2070, %v2006, 0
    %v2087 = vsel %vm2070, %v2007, 0
    %v2090 = vsel %vm2070, %v2008, 0
    %v2093 = vsel %vm2070, %v2009, 0
    %2095 = vmatprep.subr.bf16.mxu0 0
    %2096 = vmatpush1.bf16.msra.mxu0 0
    %2097 = vmatprep.subr.bf16.mxu0 0
    %2098 = vmatpush1.bf16.msra.mxu0 0
    %2099 = vmatprep.subr.bf16.mxu0 0
    %2100 = vmatpush1.bf16.msra.mxu0 0
    %2101 = vmatprep.subr.bf16.mxu0 0
    %2102 = vmatpush1.bf16.msra.mxu0 0
    %2103 = vmatprep.subr.bf16.mxu0 %v2061
    %2104 = vmatpush1.bf16.msra.mxu0 %v2060
    %2105 = vmatprep.subr.bf16.mxu0 %v2059
    %2106 = vmatpush1.bf16.msra.mxu0 %v2058
    %2107 = vmatprep.subr.bf16.mxu0 %v2057
    %2108 = vmatpush1.bf16.msra.mxu0 %v2056
    %2109 = vmatprep.subr.bf16.mxu0 %v2055
    %2110 = vmatpush1.bf16.msra.mxu0 %v2054
    %2111 = vmatprep.subr.bf16.mxu0 0
    %2112 = vmatpush2.bf16.msra.mxu0 0
    %2113 = vmatprep.subr.bf16.mxu0 0
    %2114 = vmatpush2.bf16.msra.mxu0 0
    %2115 = vmatprep.subr.bf16.mxu0 0
    %2116 = vmatpush2.bf16.msra.mxu0 0
    %2117 = vmatprep.subr.bf16.mxu0 0
    %2118 = vmatpush2.bf16.msra.mxu0 0
    %2119 = vmatprep.subr.bf16.mxu0 0
    %2120 = vmatpush2.bf16.msra.mxu0 0
    %2121 = vmatprep.subr.bf16.mxu0 0
    %2122 = vmatpush2.bf16.msra.mxu0 0
    %2123 = vmatprep.subr.bf16.mxu0 0
    %2124 = vmatpush2.bf16.msra.mxu0 0
    %2125 = vmatprep.subr.bf16.mxu0 0
    %2126 = vmatpush2.bf16.msra.mxu0 0
    %2127 = vmatprep.mubr.bf16.mxu0 0
    %2128 = vmatmul.mubr.bf16.gmra.mxu0 %v2072
    %v2129 = vpop.f32.mrf.mxu0
    %v2130 = vadd.f32 %v2023, %v2129
    %v2131 = vpop.f32.mrf.mxu0
    %v2132 = vadd.f32 %v2027, %v2131
    %v2133 = vpop.f32.mrf.mxu0
    %v2134 = vadd.f32 %v2023, %v2133
    %v2135 = vpop.f32.mrf.mxu0
    %v2136 = vadd.f32 %v2027, %v2135
    %2137 = vmatprep.mubr.bf16.mxu0 0
    %2138 = vmatmul.mubr.bf16.gmra.mxu0 %v2075
    %v2139 = vpop.f32.mrf.mxu0
    %v2140 = vadd.f32 %v2023, %v2139
    %v2141 = vpop.f32.mrf.mxu0
    %v2142 = vadd.f32 %v2027, %v2141
    %v2143 = vpop.f32.mrf.mxu0
    %v2144 = vadd.f32 %v2023, %v2143
    %v2145 = vpop.f32.mrf.mxu0
    %v2146 = vadd.f32 %v2027, %v2145
    %2147 = vmatprep.mubr.bf16.mxu0 0
    %2148 = vmatmul.mubr.bf16.gmra.mxu0 %v2078
    %v2149 = vpop.f32.mrf.mxu0
    %v2150 = vadd.f32 %v2023, %v2149
    %v2151 = vpop.f32.mrf.mxu0
    %v2152 = vadd.f32 %v2027, %v2151
    %v2153 = vpop.f32.mrf.mxu0
    %v2154 = vadd.f32 %v2023, %v2153
    %v2155 = vpop.f32.mrf.mxu0
    %v2156 = vadd.f32 %v2027, %v2155
    %2157 = vmatprep.mubr.bf16.mxu0 0
    %2158 = vmatmul.mubr.bf16.gmra.mxu0 %v2081
    %v2159 = vpop.f32.mrf.mxu0
    %v2160 = vadd.f32 %v2023, %v2159
    %v2161 = vpop.f32.mrf.mxu0
    %v2162 = vadd.f32 %v2027, %v2161
    %v2163 = vpop.f32.mrf.mxu0
    %v2164 = vadd.f32 %v2023, %v2163
    %v2165 = vpop.f32.mrf.mxu0
    %v2166 = vadd.f32 %v2027, %v2165
    %2167 = vmatprep.mubr.bf16.mxu0 0
    %2168 = vmatmul.mubr.bf16.gmra.mxu0 %v2084
    %v2169 = vpop.f32.mrf.mxu0
    %v2170 = vadd.f32 %v2023, %v2169
    %v2171 = vpop.f32.mrf.mxu0
    %v2172 = vadd.f32 %v2027, %v2171
    %v2173 = vpop.f32.mrf.mxu0
    %v2174 = vadd.f32 %v2023, %v2173
    %v2175 = vpop.f32.mrf.mxu0
    %v2176 = vadd.f32 %v2027, %v2175
    %2177 = vmatprep.mubr.bf16.mxu0 0
    %2178 = vmatmul.mubr.bf16.gmra.mxu0 %v2087
    %v2179 = vpop.f32.mrf.mxu0
    %v2180 = vadd.f32 %v2023, %v2179
    %v2181 = vpop.f32.mrf.mxu0
    %v2182 = vadd.f32 %v2027, %v2181
    %v2183 = vpop.f32.mrf.mxu0
    %v2184 = vadd.f32 %v2023, %v2183
    %v2185 = vpop.f32.mrf.mxu0
    %v2186 = vadd.f32 %v2027, %v2185
    %2187 = vmatprep.mubr.bf16.mxu0 0
    %2188 = vmatmul.mubr.bf16.gmra.mxu0 %v2090
    %v2189 = vpop.f32.mrf.mxu0
    %v2190 = vadd.f32 %v2023, %v2189
    %v2191 = vpop.f32.mrf.mxu0
    %v2192 = vadd.f32 %v2027, %v2191
    %v2193 = vpop.f32.mrf.mxu0
    %v2194 = vadd.f32 %v2023, %v2193
    %v2195 = vpop.f32.mrf.mxu0
    %v2196 = vadd.f32 %v2027, %v2195
    %2197 = vmatprep.mubr.bf16.mxu0 0
    %2198 = vmatmul.mubr.bf16.gmra.mxu0 %v2093
    %v2199 = vpop.f32.mrf.mxu0
    %v2200 = vadd.f32 %v2023, %v2199
    %v2201 = vpop.f32.mrf.mxu0
    %v2202 = vadd.f32 %v2027, %v2201
    %v2203 = vpop.f32.mrf.mxu0
    %v2204 = vadd.f32 %v2023, %v2203
    %v2205 = vpop.f32.mrf.mxu0
    %v2206 = vadd.f32 %v2027, %v2205
    %2207 = vdwg.mxu0
    %v2208 = vmul.f32 %v2130, %v195
    %v2209 = vmul.f32 %v2134, %v197
    %v2210 = vmul.f32 %v2140, %v199
    %v2211 = vmul.f32 %v2144, %v201
    %v2212 = vmul.f32 %v2150, %v203
    %v2213 = vmul.f32 %v2154, %v205
    %v2214 = vmul.f32 %v2160, %v207
    %v2215 = vmul.f32 %v2164, %v209
    %v2216 = vmul.f32 %v2170, %v195
    %v2217 = vmul.f32 %v2174, %v197
    %v2218 = vmul.f32 %v2180, %v199
    %v2219 = vmul.f32 %v2184, %v201
    %v2220 = vmul.f32 %v2190, %v203
    %v2221 = vmul.f32 %v2194, %v205
    %v2222 = vmul.f32 %v2200, %v207
    %v2223 = vmul.f32 %v2204, %v209
    %v2224 = vmul.f32 %v2132, %v196
    %v2225 = vmul.f32 %v2136, %v198
    %v2226 = vmul.f32 %v2142, %v200
    %v2227 = vmul.f32 %v2146, %v202
    %v2228 = vmul.f32 %v2152, %v204
    %v2229 = vmul.f32 %v2156, %v206
    %v2230 = vmul.f32 %v2162, %v208
    %v2231 = vmul.f32 %v2166, %v210
    %v2232 = vmul.f32 %v2172, %v196
    %v2233 = vmul.f32 %v2176, %v198
    %v2234 = vmul.f32 %v2182, %v200
    %v2235 = vmul.f32 %v2186, %v202
    %v2236 = vmul.f32 %v2192, %v204
    %v2237 = vmul.f32 %v2196, %v206
    %v2238 = vmul.f32 %v2202, %v208
    %v2239 = vmul.f32 %v2206, %v210
    %v2240 = vsub.f32 %v2208, %v2224
    %v2241 = vsub.f32 %v2209, %v2225
    %v2242 = vsub.f32 %v2210, %v2226
    %v2243 = vsub.f32 %v2211, %v2227
    %v2244 = vsub.f32 %v2212, %v2228
    %v2245 = vsub.f32 %v2213, %v2229
    %v2246 = vsub.f32 %v2214, %v2230
    %v2247 = vsub.f32 %v2215, %v2231
    %v2248 = vsub.f32 %v2216, %v2232
    %v2249 = vsub.f32 %v2217, %v2233
    %v2250 = vsub.f32 %v2218, %v2234
    %v2251 = vsub.f32 %v2219, %v2235
    %v2252 = vsub.f32 %v2220, %v2236
    %v2253 = vsub.f32 %v2221, %v2237
    %v2254 = vsub.f32 %v2222, %v2238
    %v2255 = vsub.f32 %v2223, %v2239
    %v2256 = vmul.f32 %v2130, %v196
    %v2257 = vmul.f32 %v2134, %v198
    %v2258 = vmul.f32 %v2140, %v200
    %v2259 = vmul.f32 %v2144, %v202
    %v2260 = vmul.f32 %v2150, %v204
    %v2261 = vmul.f32 %v2154, %v206
    %v2262 = vmul.f32 %v2160, %v208
    %v2263 = vmul.f32 %v2164, %v210
    %v2264 = vmul.f32 %v2170, %v196
    %v2265 = vmul.f32 %v2174, %v198
    %v2266 = vmul.f32 %v2180, %v200
    %v2267 = vmul.f32 %v2184, %v202
    %v2268 = vmul.f32 %v2190, %v204
    %v2269 = vmul.f32 %v2194, %v206
    %v2270 = vmul.f32 %v2200, %v208
    %v2271 = vmul.f32 %v2204, %v210
    %v2272 = vmul.f32 %v2132, %v195
    %v2273 = vmul.f32 %v2136, %v197
    %v2274 = vmul.f32 %v2142, %v199
    %v2275 = vmul.f32 %v2146, %v201
    %v2276 = vmul.f32 %v2152, %v203
    %v2277 = vmul.f32 %v2156, %v205
    %v2278 = vmul.f32 %v2162, %v207
    %v2279 = vmul.f32 %v2166, %v209
    %v2280 = vmul.f32 %v2172, %v195
    %v2281 = vmul.f32 %v2176, %v197
    %v2282 = vmul.f32 %v2182, %v199
    %v2283 = vmul.f32 %v2186, %v201
    %v2284 = vmul.f32 %v2192, %v203
    %v2285 = vmul.f32 %v2196, %v205
    %v2286 = vmul.f32 %v2202, %v207
    %v2287 = vmul.f32 %v2206, %v209
    %v2288 = vadd.f32 %v2256, %v2272
    %v2289 = vadd.f32 %v2257, %v2273
    %v2290 = vadd.f32 %v2258, %v2274
    %v2291 = vadd.f32 %v2259, %v2275
    %v2292 = vadd.f32 %v2260, %v2276
    %v2293 = vadd.f32 %v2261, %v2277
    %v2294 = vadd.f32 %v2262, %v2278
    %v2295 = vadd.f32 %v2263, %v2279
    %v2296 = vadd.f32 %v2264, %v2280
    %v2297 = vadd.f32 %v2265, %v2281
    %v2298 = vadd.f32 %v2266, %v2282
    %v2299 = vadd.f32 %v2267, %v2283
    %v2300 = vadd.f32 %v2268, %v2284
    %v2301 = vadd.f32 %v2269, %v2285
    %v2302 = vadd.f32 %v2270, %v2286
    %v2303 = vadd.f32 %v2271, %v2287
    %v2304 = vpack.c.bf16 %v1955, %v1954
    %v2305 = vpack.c.bf16 %v1957, %v1956
    %v2306 = vpack.c.bf16 %v1959, %v1958
    %v2307 = vpack.c.bf16 %v1961, %v1960
    %v2308 = vpack.c.bf16 %v1963, %v1962
    %v2309 = vpack.c.bf16 %v1965, %v1964
    %v2310 = vpack.c.bf16 %v1967, %v1966
    %v2311 = vpack.c.bf16 %v1969, %v1968
    %v2312 = vld [vmem:[#allocation11] sm:$0xff]
    %v2313 = vld [vmem:[#allocation11 + $0x8] sm:$0xff]
    %v2314 = vld [vmem:[#allocation11 + $0x10] sm:$0xff]
    %v2315 = vld [vmem:[#allocation11 + $0x18] sm:$0xff]
    %v2316 = vld [vmem:[#allocation11 + $0x20] sm:$0xff]
    %v2317 = vld [vmem:[#allocation11 + $0x28] sm:$0xff]
    %v2318 = vld [vmem:[#allocation11 + $0x30] sm:$0xff]
    %v2319 = vld [vmem:[#allocation11 + $0x38] sm:$0xff]
    %v2320 = vld [vmem:[#allocation17 + $0xc] sm:$0x3]
    %v2322 = vlaneseq
    %v2323 = vshrl.u32 %v2322, 7
    %v2324 = vsub.s32 0, %v2323
    %v2325 = vrot.slane %v2320, %v2324
    %v2326 = vlaneseq
    %v2327 = vshrl.u32 %v2326, 7
    %v2328 = vsub.s32 1, %v2327
    %v2329 = vrot.slane %v2320, %v2328
    %v2340 = vunpack.c.l.b16 %v2312
    %v2341 = vunpack.c.h.b16 %v2312
    %v2342 = vunpack.c.l.b16 %v2313
    %v2343 = vunpack.c.h.b16 %v2313
    %v2344 = vunpack.c.l.b16 %v2314
    %v2345 = vunpack.c.h.b16 %v2314
    %v2346 = vunpack.c.l.b16 %v2315
    %v2347 = vunpack.c.h.b16 %v2315
    %v2348 = vunpack.c.l.b16 %v2316
    %v2349 = vunpack.c.h.b16 %v2316
    %v2350 = vunpack.c.l.b16 %v2317
    %v2351 = vunpack.c.h.b16 %v2317
    %v2352 = vunpack.c.l.b16 %v2318
    %v2353 = vunpack.c.h.b16 %v2318
    %v2354 = vunpack.c.l.b16 %v2319
    %v2355 = vunpack.c.h.b16 %v2319
    %v2356 = vpack.c.b16 %v2342, %v2340
    %v2357 = vpack.c.b16 %v2343, %v2341
    %v2358 = vpack.c.b16 %v2346, %v2344
    %v2359 = vpack.c.b16 %v2347, %v2345
    %v2360 = vpack.c.b16 %v2350, %v2348
    %v2361 = vpack.c.b16 %v2351, %v2349
    %v2362 = vpack.c.b16 %v2354, %v2352
    %v2363 = vpack.c.b16 %v2355, %v2353
    %v2373 = vsel %vm2070, %v2304, 0
    %v2376 = vsel %vm2070, %v2305, 0
    %v2379 = vsel %vm2070, %v2306, 0
    %v2382 = vsel %vm2070, %v2307, 0
    %v2385 = vsel %vm2070, %v2308, 0
    %v2388 = vsel %vm2070, %v2309, 0
    %v2391 = vsel %vm2070, %v2310, 0
    %v2394 = vsel %vm2070, %v2311, 0
    %2396 = vmatprep.subr.bf16.mxu0 0
    %2397 = vmatpush1.bf16.msra.mxu0 0
    %2398 = vmatprep.subr.bf16.mxu0 0
    %2399 = vmatpush1.bf16.msra.mxu0 0
    %2400 = vmatprep.subr.bf16.mxu0 0
    %2401 = vmatpush1.bf16.msra.mxu0 0
    %2402 = vmatprep.subr.bf16.mxu0 0
    %2403 = vmatpush1.bf16.msra.mxu0 0
    %2404 = vmatprep.subr.bf16.mxu0 %v2363
    %2405 = vmatpush1.bf16.msra.mxu0 %v2362
    %2406 = vmatprep.subr.bf16.mxu0 %v2361
    %2407 = vmatpush1.bf16.msra.mxu0 %v2360
    %2408 = vmatprep.subr.bf16.mxu0 %v2359
    %2409 = vmatpush1.bf16.msra.mxu0 %v2358
    %2410 = vmatprep.subr.bf16.mxu0 %v2357
    %2411 = vmatpush1.bf16.msra.mxu0 %v2356
    %2412 = vmatprep.subr.bf16.mxu0 0
    %2413 = vmatpush2.bf16.msra.mxu0 0
    %2414 = vmatprep.subr.bf16.mxu0 0
    %2415 = vmatpush2.bf16.msra.mxu0 0
    %2416 = vmatprep.subr.bf16.mxu0 0
    %2417 = vmatpush2.bf16.msra.mxu0 0
    %2418 = vmatprep.subr.bf16.mxu0 0
    %2419 = vmatpush2.bf16.msra.mxu0 0
    %2420 = vmatprep.subr.bf16.mxu0 0
    %2421 = vmatpush2.bf16.msra.mxu0 0
    %2422 = vmatprep.subr.bf16.mxu0 0
    %2423 = vmatpush2.bf16.msra.mxu0 0
    %2424 = vmatprep.subr.bf16.mxu0 0
    %2425 = vmatpush2.bf16.msra.mxu0 0
    %2426 = vmatprep.subr.bf16.mxu0 0
    %2427 = vmatpush2.bf16.msra.mxu0 0
    %2428 = vmatprep.mubr.bf16.mxu0 0
    %2429 = vmatmul.mubr.bf16.gmra.mxu0 %v2373
    %v2430 = vpop.f32.mrf.mxu0
    %v2431 = vadd.f32 %v2325, %v2430
    %v2432 = vpop.f32.mrf.mxu0
    %v2433 = vadd.f32 %v2329, %v2432
    %v2434 = vpop.f32.mrf.mxu0
    %v2435 = vadd.f32 %v2325, %v2434
    %v2436 = vpop.f32.mrf.mxu0
    %v2437 = vadd.f32 %v2329, %v2436
    %2438 = vmatprep.mubr.bf16.mxu0 0
    %2439 = vmatmul.mubr.bf16.gmra.mxu0 %v2376
    %v2440 = vpop.f32.mrf.mxu0
    %v2441 = vadd.f32 %v2325, %v2440
    %v2442 = vpop.f32.mrf.mxu0
    %v2443 = vadd.f32 %v2329, %v2442
    %v2444 = vpop.f32.mrf.mxu0
    %v2445 = vadd.f32 %v2325, %v2444
    %v2446 = vpop.f32.mrf.mxu0
    %v2447 = vadd.f32 %v2329, %v2446
    %2448 = vmatprep.mubr.bf16.mxu0 0
    %2449 = vmatmul.mubr.bf16.gmra.mxu0 %v2379
    %v2450 = vpop.f32.mrf.mxu0
    %v2451 = vadd.f32 %v2325, %v2450
    %v2452 = vpop.f32.mrf.mxu0
    %v2453 = vadd.f32 %v2329, %v2452
    %v2454 = vpop.f32.mrf.mxu0
    %v2455 = vadd.f32 %v2325, %v2454
    %v2456 = vpop.f32.mrf.mxu0
    %v2457 = vadd.f32 %v2329, %v2456
    %2458 = vmatprep.mubr.bf16.mxu0 0
    %2459 = vmatmul.mubr.bf16.gmra.mxu0 %v2382
    %v2460 = vpop.f32.mrf.mxu0
    %v2461 = vadd.f32 %v2325, %v2460
    %v2462 = vpop.f32.mrf.mxu0
    %v2463 = vadd.f32 %v2329, %v2462
    %v2464 = vpop.f32.mrf.mxu0
    %v2465 = vadd.f32 %v2325, %v2464
    %v2466 = vpop.f32.mrf.mxu0
    %v2467 = vadd.f32 %v2329, %v2466
    %2468 = vmatprep.mubr.bf16.mxu0 0
    %2469 = vmatmul.mubr.bf16.gmra.mxu0 %v2385
    %v2470 = vpop.f32.mrf.mxu0
    %v2471 = vadd.f32 %v2325, %v2470
    %v2472 = vpop.f32.mrf.mxu0
    %v2473 = vadd.f32 %v2329, %v2472
    %v2474 = vpop.f32.mrf.mxu0
    %v2475 = vadd.f32 %v2325, %v2474
    %v2476 = vpop.f32.mrf.mxu0
    %v2477 = vadd.f32 %v2329, %v2476
    %2478 = vmatprep.mubr.bf16.mxu0 0
    %2479 = vmatmul.mubr.bf16.gmra.mxu0 %v2388
    %v2480 = vpop.f32.mrf.mxu0
    %v2481 = vadd.f32 %v2325, %v2480
    %v2482 = vpop.f32.mrf.mxu0
    %v2483 = vadd.f32 %v2329, %v2482
    %v2484 = vpop.f32.mrf.mxu0
    %v2485 = vadd.f32 %v2325, %v2484
    %v2486 = vpop.f32.mrf.mxu0
    %v2487 = vadd.f32 %v2329, %v2486
    %2488 = vmatprep.mubr.bf16.mxu0 0
    %2489 = vmatmul.mubr.bf16.gmra.mxu0 %v2391
    %v2490 = vpop.f32.mrf.mxu0
    %v2491 = vadd.f32 %v2325, %v2490
    %v2492 = vpop.f32.mrf.mxu0
    %v2493 = vadd.f32 %v2329, %v2492
    %v2494 = vpop.f32.mrf.mxu0
    %v2495 = vadd.f32 %v2325, %v2494
    %v2496 = vpop.f32.mrf.mxu0
    %v2497 = vadd.f32 %v2329, %v2496
    %2498 = vmatprep.mubr.bf16.mxu0 0
    %2499 = vmatmul.mubr.bf16.gmra.mxu0 %v2394
    %v2500 = vpop.f32.mrf.mxu0
    %v2501 = vadd.f32 %v2325, %v2500
    %v2502 = vpop.f32.mrf.mxu0
    %v2503 = vadd.f32 %v2329, %v2502
    %v2504 = vpop.f32.mrf.mxu0
    %v2505 = vadd.f32 %v2325, %v2504
    %v2506 = vpop.f32.mrf.mxu0
    %v2507 = vadd.f32 %v2329, %v2506
    %2508 = vdwg.mxu0
    %v2509 = vpack.c.bf16 %v1939, %v1938
    %v2510 = vpack.c.bf16 %v1951, %v1950
    %v2511 = vpack.c.bf16 %v1941, %v1940
    %v2512 = vpack.c.bf16 %v1953, %v1952
    %v2513 = vpack.c.bf16 %v2241, %v2240
    %v2514 = vpack.c.bf16 %v2289, %v2288
    %v2515 = vpack.c.bf16 %v2243, %v2242
    %v2516 = vpack.c.bf16 %v2291, %v2290
    %v2517 = vpack.c.bf16 %v2245, %v2244
    %v2518 = vpack.c.bf16 %v2293, %v2292
    %v2519 = vpack.c.bf16 %v2247, %v2246
    %v2520 = vpack.c.bf16 %v2295, %v2294
    %v2521 = vpack.c.bf16 %v2249, %v2248
    %v2522 = vpack.c.bf16 %v2297, %v2296
    %v2523 = vpack.c.bf16 %v2251, %v2250
    %v2524 = vpack.c.bf16 %v2299, %v2298
    %v2525 = vpack.c.bf16 %v2253, %v2252
    %v2526 = vpack.c.bf16 %v2301, %v2300
    %v2527 = vpack.c.bf16 %v2255, %v2254
    %v2528 = vpack.c.bf16 %v2303, %v2302
    %2529 = vmatprep.subr.bf16.mxu0 0
    %2530 = vmatpush1.bf16.xpose.msra.mxu0 0
    %2531 = vmatprep.subr.bf16.mxu0 0
    %2532 = vmatpush1.bf16.xpose.msra.mxu0 0
    %2533 = vmatprep.subr.bf16.mxu0 0
    %2534 = vmatpush1.bf16.xpose.msra.mxu0 0
    %2535 = vmatprep.subr.bf16.mxu0 0
    %2536 = vmatpush1.bf16.xpose.msra.mxu0 0
    %2537 = vmatprep.subr.bf16.mxu0 %v2520
    %2538 = vmatpush1.bf16.xpose.msra.mxu0 %v2519
    %2539 = vmatprep.subr.bf16.mxu0 %v2518
    %2540 = vmatpush1.bf16.xpose.msra.mxu0 %v2517
    %2541 = vmatprep.subr.bf16.mxu0 %v2516
    %2542 = vmatpush1.bf16.xpose.msra.mxu0 %v2515
    %2543 = vmatprep.subr.bf16.mxu0 %v2514
    %2544 = vmatpush1.bf16.xpose.msra.mxu0 %v2513
    %2545 = vmatprep.subr.bf16.mxu0 0
    %2546 = vmatpush2.bf16.xpose.msra.mxu0 0
    %2547 = vmatprep.subr.bf16.mxu0 0
    %2548 = vmatpush2.bf16.xpose.msra.mxu0 0
    %2549 = vmatprep.subr.bf16.mxu0 0
    %2550 = vmatpush2.bf16.xpose.msra.mxu0 0
    %2551 = vmatprep.subr.bf16.mxu0 0
    %2552 = vmatpush2.bf16.xpose.msra.mxu0 0
    %2553 = vmatprep.subr.bf16.mxu0 0
    %2554 = vmatpush2.bf16.xpose.msra.mxu0 0
    %2555 = vmatprep.subr.bf16.mxu0 0
    %2556 = vmatpush2.bf16.xpose.msra.mxu0 0
    %2557 = vmatprep.subr.bf16.mxu0 0
    %2558 = vmatpush2.bf16.xpose.msra.mxu0 0
    %2559 = vmatprep.subr.bf16.mxu0 0
    %2560 = vmatpush2.bf16.xpose.msra.mxu0 0
    %2561 = vmatprep.mubr.bf16.mxu0 %v2510
    %2562 = vmatmul.mubr.bf16.gmra.mxu0 %v2509
    %v2563 = vpop.f32.mrf.mxu0
    %v2564 = vadd.f32 0.0, %v2563
    %v2565 = vpop.f32.mrf.mxu0
    %v2566 = vpop.f32.mrf.mxu0
    %v2567 = vadd.f32 0.0, %v2566
    %v2568 = vpop.f32.mrf.mxu0
    %2569 = vdwg.mxu0
    %2570 = vmatprep.subr.bf16.mxu0 0
    %2571 = vmatpush1.bf16.xpose.msra.mxu0 0
    %2572 = vmatprep.subr.bf16.mxu0 0
    %2573 = vmatpush1.bf16.xpose.msra.mxu0 0
    %2574 = vmatprep.subr.bf16.mxu0 0
    %2575 = vmatpush1.bf16.xpose.msra.mxu0 0
    %2576 = vmatprep.subr.bf16.mxu0 0
    %2577 = vmatpush1.bf16.xpose.msra.mxu0 0
    %2578 = vmatprep.subr.bf16.mxu0 %v2528
    %2579 = vmatpush1.bf16.xpose.msra.mxu0 %v2527
    %2580 = vmatprep.subr.bf16.mxu0 %v2526
    %2581 = vmatpush1.bf16.xpose.msra.mxu0 %v2525
    %2582 = vmatprep.subr.bf16.mxu0 %v2524
    %2583 = vmatpush1.bf16.xpose.msra.mxu0 %v2523
    %2584 = vmatprep.subr.bf16.mxu0 %v2522
    %2585 = vmatpush1.bf16.xpose.msra.mxu0 %v2521
    %2586 = vmatprep.subr.bf16.mxu0 0
    %2587 = vmatpush2.bf16.xpose.msra.mxu0 0
    %2588 = vmatprep.subr.bf16.mxu0 0
    %2589 = vmatpush2.bf16.xpose.msra.mxu0 0
    %2590 = vmatprep.subr.bf16.mxu0 0
    %2591 = vmatpush2.bf16.xpose.msra.mxu0 0
    %2592 = vmatprep.subr.bf16.mxu0 0
    %2593 = vmatpush2.bf16.xpose.msra.mxu0 0
    %2594 = vmatprep.subr.bf16.mxu0 0
    %2595 = vmatpush2.bf16.xpose.msra.mxu0 0
    %2596 = vmatprep.subr.bf16.mxu0 0
    %2597 = vmatpush2.bf16.xpose.msra.mxu0 0
    %2598 = vmatprep.subr.bf16.mxu0 0
    %2599 = vmatpush2.bf16.xpose.msra.mxu0 0
    %2600 = vmatprep.subr.bf16.mxu0 0
    %2601 = vmatpush2.bf16.xpose.msra.mxu0 0
    %2602 = vmatprep.mubr.bf16.mxu0 %v2512
    %2603 = vmatmul.mubr.bf16.gmra.mxu0 %v2511
    %v2604 = vpop.f32.mrf.mxu0
    %v2605 = vadd.f32 0.0, %v2604
    %v2606 = vpop.f32.mrf.mxu0
    %v2607 = vpop.f32.mrf.mxu0
    %v2608 = vadd.f32 0.0, %v2607
    %v2609 = vpop.f32.mrf.mxu0
    %2610 = vdwg.mxu0
    %v2611 = vsel %vm2070, %v2564, -inf
    %2612 = vmax.xlane.f32.xlu0 %v2611
    %v2613 = vpop.xlane.xlu0 %2612
    %v2614 = vsel %vm2070, %v2567, -inf
    %2615 = vmax.xlane.f32.xlu0 %v2614
    %v2616 = vpop.xlane.xlu0 %2615
    %v2617 = vsel %vm2070, %v2605, -inf
    %2618 = vmax.xlane.f32.xlu0 %v2617
    %v2619 = vpop.xlane.xlu0 %2618
    %v2620 = vsel %vm2070, %v2608, -inf
    %2621 = vmax.xlane.f32.xlu0 %v2620
    %v2622 = vpop.xlane.xlu0 %2621
    %v2623 = vsub.f32 %v2564, %v2613
    %v2624 = vsub.f32 %v2567, %v2616
    %v2625 = vsub.f32 %v2605, %v2619
    %v2626 = vsub.f32 %v2608, %v2622
    %v2627 = vmul.f32 %v2623, 1.442695
    %v2628 = vpow.pop %v2627
    %v2629 = vmul.f32 %v2624, 1.442695
    %v2630 = vpow.pop %v2629
    %v2631 = vmul.f32 %v2625, 1.442695
    %v2632 = vpow.pop %v2631
    %v2633 = vmul.f32 %v2626, 1.442695
    %v2634 = vpow.pop %v2633
    %v2635 = vsel %vm2070, %v2628, 0.0
    %2636 = vadd.xlane.f32.xlu0 %v2635
    %v2637 = vpop.xlane.xlu0 %2636
    %v2638 = vsel %vm2070, %v2630, 0.0
    %2639 = vadd.xlane.f32.xlu0 %v2638
    %v2640 = vpop.xlane.xlu0 %2639
    %v2641 = vsel %vm2070, %v2632, 0.0
    %2642 = vadd.xlane.f32.xlu0 %v2641
    %v2643 = vpop.xlane.xlu0 %2642
    %v2644 = vsel %vm2070, %v2634, 0.0
    %2645 = vadd.xlane.f32.xlu0 %v2644
    %v2646 = vpop.xlane.xlu0 %2645
    %v2647 = vrcp.pop %v2637
    %v2648 = vrcp.pop %v2640
    %v2649 = vrcp.pop %v2643
    %v2650 = vrcp.pop %v2646
    %v2651 = vmul.f32 %v2628, %v2647
    %v2652 = vmul.f32 %v2630, %v2648
    %v2653 = vmul.f32 %v2632, %v2649
    %v2654 = vmul.f32 %v2634, %v2650
    %v2655 = vpack.c.bf16 %v2652, %v2651
    %v2656 = vpack.c.bf16 %v2654, %v2653
    %v2657 = vpack.c.bf16 %v2435, %v2431
    %v2658 = vpack.c.bf16 %v2437, %v2433
    %v2659 = vpack.c.bf16 %v2445, %v2441
    %v2660 = vpack.c.bf16 %v2447, %v2443
    %v2661 = vpack.c.bf16 %v2455, %v2451
    %v2662 = vpack.c.bf16 %v2457, %v2453
    %v2663 = vpack.c.bf16 %v2465, %v2461
    %v2664 = vpack.c.bf16 %v2467, %v2463
    %v2665 = vpack.c.bf16 %v2475, %v2471
    %v2666 = vpack.c.bf16 %v2477, %v2473
    %v2667 = vpack.c.bf16 %v2485, %v2481
    %v2668 = vpack.c.bf16 %v2487, %v2483
    %v2669 = vpack.c.bf16 %v2495, %v2491
    %v2670 = vpack.c.bf16 %v2497, %v2493
    %v2671 = vpack.c.bf16 %v2505, %v2501
    %v2672 = vpack.c.bf16 %v2507, %v2503
    %v2674 = vsel %vm2070, %v2655, 0
    %2676 = vmatprep.subr.bf16.mxu0 0
    %2677 = vmatpush1.bf16.msra.mxu0 0
    %2678 = vmatprep.subr.bf16.mxu0 0
    %2679 = vmatpush1.bf16.msra.mxu0 0
    %2680 = vmatprep.subr.bf16.mxu0 0
    %2681 = vmatpush1.bf16.msra.mxu0 0
    %2682 = vmatprep.subr.bf16.mxu0 0
    %2683 = vmatpush1.bf16.msra.mxu0 0
    %2684 = vmatprep.subr.bf16.mxu0 %v2664
    %2685 = vmatpush1.bf16.msra.mxu0 %v2663
    %2686 = vmatprep.subr.bf16.mxu0 %v2662
    %2687 = vmatpush1.bf16.msra.mxu0 %v2661
    %2688 = vmatprep.subr.bf16.mxu0 %v2660
    %2689 = vmatpush1.bf16.msra.mxu0 %v2659
    %2690 = vmatprep.subr.bf16.mxu0 %v2658
    %2691 = vmatpush1.bf16.msra.mxu0 %v2657
    %2692 = vmatprep.subr.bf16.mxu0 0
    %2693 = vmatpush2.bf16.msra.mxu0 0
    %2694 = vmatprep.subr.bf16.mxu0 0
    %2695 = vmatpush2.bf16.msra.mxu0 0
    %2696 = vmatprep.subr.bf16.mxu0 0
    %2697 = vmatpush2.bf16.msra.mxu0 0
    %2698 = vmatprep.subr.bf16.mxu0 0
    %2699 = vmatpush2.bf16.msra.mxu0 0
    %2700 = vmatprep.subr.bf16.mxu0 0
    %2701 = vmatpush2.bf16.msra.mxu0 0
    %2702 = vmatprep.subr.bf16.mxu0 0
    %2703 = vmatpush2.bf16.msra.mxu0 0
    %2704 = vmatprep.subr.bf16.mxu0 0
    %2705 = vmatpush2.bf16.msra.mxu0 0
    %2706 = vmatprep.subr.bf16.mxu0 0
    %2707 = vmatpush2.bf16.msra.mxu0 0
    %2708 = vmatprep.mubr.bf16.mxu0 0
    %2709 = vmatmul.mubr.bf16.gmra.mxu0 %v2674
    %v2710 = vpop.f32.mrf.mxu0
    %v2711 = vadd.f32 0.0, %v2710
    %v2712 = vpop.f32.mrf.mxu0
    %v2713 = vadd.f32 0.0, %v2712
    %v2714 = vpop.f32.mrf.mxu0
    %v2715 = vadd.f32 0.0, %v2714
    %v2716 = vpop.f32.mrf.mxu0
    %v2717 = vadd.f32 0.0, %v2716
    %2718 = vdwg.mxu0
    %v2720 = vsel %vm2070, %v2656, 0
    %2722 = vmatprep.subr.bf16.mxu0 0
    %2723 = vmatpush1.bf16.msra.mxu0 0
    %2724 = vmatprep.subr.bf16.mxu0 0
    %2725 = vmatpush1.bf16.msra.mxu0 0
    %2726 = vmatprep.subr.bf16.mxu0 0
    %2727 = vmatpush1.bf16.msra.mxu0 0
    %2728 = vmatprep.subr.bf16.mxu0 0
    %2729 = vmatpush1.bf16.msra.mxu0 0
    %2730 = vmatprep.subr.bf16.mxu0 %v2672
    %2731 = vmatpush1.bf16.msra.mxu0 %v2671
    %2732 = vmatprep.subr.bf16.mxu0 %v2670
    %2733 = vmatpush1.bf16.msra.mxu0 %v2669
    %2734 = vmatprep.subr.bf16.mxu0 %v2668
    %2735 = vmatpush1.bf16.msra.mxu0 %v2667
    %2736 = vmatprep.subr.bf16.mxu0 %v2666
    %2737 = vmatpush1.bf16.msra.mxu0 %v2665
    %2738 = vmatprep.subr.bf16.mxu0 0
    %2739 = vmatpush2.bf16.msra.mxu0 0
    %2740 = vmatprep.subr.bf16.mxu0 0
    %2741 = vmatpush2.bf16.msra.mxu0 0
    %2742 = vmatprep.subr.bf16.mxu0 0
    %2743 = vmatpush2.bf16.msra.mxu0 0
    %2744 = vmatprep.subr.bf16.mxu0 0
    %2745 = vmatpush2.bf16.msra.mxu0 0
    %2746 = vmatprep.subr.bf16.mxu0 0
    %2747 = vmatpush2.bf16.msra.mxu0 0
    %2748 = vmatprep.subr.bf16.mxu0 0
    %2749 = vmatpush2.bf16.msra.mxu0 0
    %2750 = vmatprep.subr.bf16.mxu0 0
    %2751 = vmatpush2.bf16.msra.mxu0 0
    %2752 = vmatprep.subr.bf16.mxu0 0
    %2753 = vmatpush2.bf16.msra.mxu0 0
    %2754 = vmatprep.mubr.bf16.mxu0 0
    %2755 = vmatmul.mubr.bf16.gmra.mxu0 %v2720
    %v2756 = vpop.f32.mrf.mxu0
    %v2757 = vadd.f32 0.0, %v2756
    %v2758 = vpop.f32.mrf.mxu0
    %v2759 = vadd.f32 0.0, %v2758
    %v2760 = vpop.f32.mrf.mxu0
    %v2761 = vadd.f32 0.0, %v2760
    %v2762 = vpop.f32.mrf.mxu0
    %v2763 = vadd.f32 0.0, %v2762
    %2764 = vdwg.mxu0
    %v2765 = vpack.c.bf16 %v2715, %v2711
    %v2766 = vpack.c.bf16 %v2717, %v2713
    %v2767 = vpack.c.bf16 %v2761, %v2757
    %v2768 = vpack.c.bf16 %v2763, %v2759
    %v2769 = vld [vmem:[#allocation13] sm:$0xff]
    %v2770 = vld [vmem:[#allocation13 + $0x8] sm:$0xff]
    %v2771 = vld [vmem:[#allocation13 + $0x10] sm:$0xff]
    %v2772 = vld [vmem:[#allocation13 + $0x18] sm:$0xff]
    %v2773 = vld [vmem:[#allocation13 + $0x20] sm:$0xff]
    %v2774 = vld [vmem:[#allocation13 + $0x28] sm:$0xff]
    %v2775 = vld [vmem:[#allocation13 + $0x30] sm:$0xff]
    %v2776 = vld [vmem:[#allocation13 + $0x38] sm:$0xff]
    %v2777 = vld [vmem:[#allocation13 + $0x40] sm:$0xff]
    %v2778 = vld [vmem:[#allocation13 + $0x48] sm:$0xff]
    %v2779 = vld [vmem:[#allocation13 + $0x50] sm:$0xff]
    %v2780 = vld [vmem:[#allocation13 + $0x58] sm:$0xff]
    %v2781 = vld [vmem:[#allocation13 + $0x60] sm:$0xff]
    %v2782 = vld [vmem:[#allocation13 + $0x68] sm:$0xff]
    %v2783 = vld [vmem:[#allocation13 + $0x70] sm:$0xff]
    %v2784 = vld [vmem:[#allocation13 + $0x78] sm:$0xff]
    %v2785 = vld [vmem:[#allocation13 + $0x80] sm:$0xff]
    %v2786 = vld [vmem:[#allocation13 + $0x88] sm:$0xff]
    %v2787 = vld [vmem:[#allocation13 + $0x90] sm:$0xff]
    %v2788 = vld [vmem:[#allocation13 + $0x98] sm:$0xff]
    %v2789 = vld [vmem:[#allocation13 + $0xa0] sm:$0xff]
    %v2790 = vld [vmem:[#allocation13 + $0xa8] sm:$0xff]
    %v2791 = vld [vmem:[#allocation13 + $0xb0] sm:$0xff]
    %v2792 = vld [vmem:[#allocation13 + $0xb8] sm:$0xff]
    %v2793 = vld [vmem:[#allocation13 + $0xc0] sm:$0xff]
    %v2794 = vld [vmem:[#allocation13 + $0xc8] sm:$0xff]
    %v2795 = vld [vmem:[#allocation13 + $0xd0] sm:$0xff]
    %v2796 = vld [vmem:[#allocation13 + $0xd8] sm:$0xff]
    %v2797 = vld [vmem:[#allocation13 + $0xe0] sm:$0xff]
    %v2798 = vld [vmem:[#allocation13 + $0xe8] sm:$0xff]
    %v2799 = vld [vmem:[#allocation13 + $0xf0] sm:$0xff]
    %v2800 = vld [vmem:[#allocation13 + $0xf8] sm:$0xff]
    %v2833 = vunpack.c.l.b16 %v2769
    %v2834 = vunpack.c.h.b16 %v2769
    %v2835 = vunpack.c.l.b16 %v2770
    %v2836 = vunpack.c.h.b16 %v2770
    %v2837 = vunpack.c.l.b16 %v2771
    %v2838 = vunpack.c.h.b16 %v2771
    %v2839 = vunpack.c.l.b16 %v2772
    %v2840 = vunpack.c.h.b16 %v2772
    %v2841 = vunpack.c.l.b16 %v2773
    %v2842 = vunpack.c.h.b16 %v2773
    %v2843 = vunpack.c.l.b16 %v2774
    %v2844 = vunpack.c.h.b16 %v2774
    %v2845 = vunpack.c.l.b16 %v2775
    %v2846 = vunpack.c.h.b16 %v2775
    %v2847 = vunpack.c.l.b16 %v2776
    %v2848 = vunpack.c.h.b16 %v2776
    %v2849 = vunpack.c.l.b16 %v2777
    %v2850 = vunpack.c.h.b16 %v2777
    %v2851 = vunpack.c.l.b16 %v2778
    %v2852 = vunpack.c.h.b16 %v2778
    %v2853 = vunpack.c.l.b16 %v2779
    %v2854 = vunpack.c.h.b16 %v2779
    %v2855 = vunpack.c.l.b16 %v2780
    %v2856 = vunpack.c.h.b16 %v2780
    %v2857 = vunpack.c.l.b16 %v2781
    %v2858 = vunpack.c.h.b16 %v2781
    %v2859 = vunpack.c.l.b16 %v2782
    %v2860 = vunpack.c.h.b16 %v2782
    %v2861 = vunpack.c.l.b16 %v2783
    %v2862 = vunpack.c.h.b16 %v2783
    %v2863 = vunpack.c.l.b16 %v2784
    %v2864 = vunpack.c.h.b16 %v2784
    %v2865 = vunpack.c.l.b16 %v2785
    %v2866 = vunpack.c.h.b16 %v2785
    %v2867 = vunpack.c.l.b16 %v2786
    %v2868 = vunpack.c.h.b16 %v2786
    %v2869 = vunpack.c.l.b16 %v2787
    %v2870 = vunpack.c.h.b16 %v2787
    %v2871 = vunpack.c.l.b16 %v2788
    %v2872 = vunpack.c.h.b16 %v2788
    %v2873 = vunpack.c.l.b16 %v2789
    %v2874 = vunpack.c.h.b16 %v2789
    %v2875 = vunpack.c.l.b16 %v2790
    %v2876 = vunpack.c.h.b16 %v2790
    %v2877 = vunpack.c.l.b16 %v2791
    %v2878 = vunpack.c.h.b16 %v2791
    %v2879 = vunpack.c.l.b16 %v2792
    %v2880 = vunpack.c.h.b16 %v2792
    %v2881 = vunpack.c.l.b16 %v2793
    %v2882 = vunpack.c.h.b16 %v2793
    %v2883 = vunpack.c.l.b16 %v2794
    %v2884 = vunpack.c.h.b16 %v2794
    %v2885 = vunpack.c.l.b16 %v2795
    %v2886 = vunpack.c.h.b16 %v2795
    %v2887 = vunpack.c.l.b16 %v2796
    %v2888 = vunpack.c.h.b16 %v2796
    %v2889 = vunpack.c.l.b16 %v2797
    %v2890 = vunpack.c.h.b16 %v2797
    %v2891 = vunpack.c.l.b16 %v2798
    %v2892 = vunpack.c.h.b16 %v2798
    %v2893 = vunpack.c.l.b16 %v2799
    %v2894 = vunpack.c.h.b16 %v2799
    %v2895 = vunpack.c.l.b16 %v2800
    %v2896 = vunpack.c.h.b16 %v2800
    %v2897 = vpack.c.b16 %v2835, %v2833
    %v2898 = vpack.c.b16 %v2836, %v2834
    %v2899 = vpack.c.b16 %v2839, %v2837
    %v2900 = vpack.c.b16 %v2840, %v2838
    %v2901 = vpack.c.b16 %v2843, %v2841
    %v2902 = vpack.c.b16 %v2844, %v2842
    %v2903 = vpack.c.b16 %v2847, %v2845
    %v2904 = vpack.c.b16 %v2848, %v2846
    %v2905 = vpack.c.b16 %v2851, %v2849
    %v2906 = vpack.c.b16 %v2852, %v2850
    %v2907 = vpack.c.b16 %v2855, %v2853
    %v2908 = vpack.c.b16 %v2856, %v2854
    %v2909 = vpack.c.b16 %v2859, %v2857
    %v2910 = vpack.c.b16 %v2860, %v2858
    %v2911 = vpack.c.b16 %v2863, %v2861
    %v2912 = vpack.c.b16 %v2864, %v2862
    %v2913 = vpack.c.b16 %v2867, %v2865
    %v2914 = vpack.c.b16 %v2868, %v2866
    %v2915 = vpack.c.b16 %v2871, %v2869
    %v2916 = vpack.c.b16 %v2872, %v2870
    %v2917 = vpack.c.b16 %v2875, %v2873
    %v2918 = vpack.c.b16 %v2876, %v2874
    %v2919 = vpack.c.b16 %v2879, %v2877
    %v2920 = vpack.c.b16 %v2880, %v2878
    %v2921 = vpack.c.b16 %v2883, %v2881
    %v2922 = vpack.c.b16 %v2884, %v2882
    %v2923 = vpack.c.b16 %v2887, %v2885
    %v2924 = vpack.c.b16 %v2888, %v2886
    %v2925 = vpack.c.b16 %v2891, %v2889
    %v2926 = vpack.c.b16 %v2892, %v2890
    %v2927 = vpack.c.b16 %v2895, %v2893
    %v2928 = vpack.c.b16 %v2896, %v2894
    %2961 = vmatprep.subr.bf16.mxu0 %v2912
    %2962 = vmatpush1.bf16.msra.mxu0 %v2911
    %2963 = vmatprep.subr.bf16.mxu0 %v2910
    %2964 = vmatpush1.bf16.msra.mxu0 %v2909
    %2965 = vmatprep.subr.bf16.mxu0 %v2908
    %2966 = vmatpush1.bf16.msra.mxu0 %v2907
    %2967 = vmatprep.subr.bf16.mxu0 %v2906
    %2968 = vmatpush1.bf16.msra.mxu0 %v2905
    %2969 = vmatprep.subr.bf16.mxu0 %v2904
    %2970 = vmatpush1.bf16.msra.mxu0 %v2903
    %2971 = vmatprep.subr.bf16.mxu0 %v2902
    %2972 = vmatpush1.bf16.msra.mxu0 %v2901
    %2973 = vmatprep.subr.bf16.mxu0 %v2900
    %2974 = vmatpush1.bf16.msra.mxu0 %v2899
    %2975 = vmatprep.subr.bf16.mxu0 %v2898
    %2976 = vmatpush1.bf16.msra.mxu0 %v2897
    %2977 = vmatprep.subr.bf16.mxu0 %v2928
    %2978 = vmatpush2.bf16.msra.mxu0 %v2927
    %2979 = vmatprep.subr.bf16.mxu0 %v2926
    %2980 = vmatpush2.bf16.msra.mxu0 %v2925
    %2981 = vmatprep.subr.bf16.mxu0 %v2924
    %2982 = vmatpush2.bf16.msra.mxu0 %v2923
    %2983 = vmatprep.subr.bf16.mxu0 %v2922
    %2984 = vmatpush2.bf16.msra.mxu0 %v2921
    %2985 = vmatprep.subr.bf16.mxu0 %v2920
    %2986 = vmatpush2.bf16.msra.mxu0 %v2919
    %2987 = vmatprep.subr.bf16.mxu0 %v2918
    %2988 = vmatpush2.bf16.msra.mxu0 %v2917
    %2989 = vmatprep.subr.bf16.mxu0 %v2916
    %2990 = vmatpush2.bf16.msra.mxu0 %v2915
    %2991 = vmatprep.subr.bf16.mxu0 %v2914
    %2992 = vmatpush2.bf16.msra.mxu0 %v2913
    %2993 = vmatprep.mubr.bf16.mxu0 %v2766
    %2994 = vmatmul.mubr.bf16.gmra.mxu0 %v2765
    %v2995 = vpop.f32.mrf.mxu0
    %v2996 = vadd.f32 0.0, %v2995
    %v2997 = vpop.f32.mrf.mxu0
    %v2998 = vadd.f32 0.0, %v2997
    %v2999 = vpop.f32.mrf.mxu0
    %v3000 = vadd.f32 0.0, %v2999
    %v3001 = vpop.f32.mrf.mxu0
    %v3002 = vadd.f32 0.0, %v3001
    %3003 = vmatprep.mubr.bf16.mxu0 %v2768
    %3004 = vmatmul.mubr.bf16.gmra.mxu0 %v2767
    %v3005 = vpop.f32.mrf.mxu0
    %v3006 = vadd.f32 0.0, %v3005
    %v3007 = vpop.f32.mrf.mxu0
    %v3008 = vadd.f32 0.0, %v3007
    %v3009 = vpop.f32.mrf.mxu0
    %v3010 = vadd.f32 0.0, %v3009
    %v3011 = vpop.f32.mrf.mxu0
    %v3012 = vadd.f32 0.0, %v3011
    %3013 = vdwg.mxu0
    %v3014 = vadd.f32 %v1597, %v2996
    %v3015 = vadd.f32 %v1598, %v2998
    %v3016 = vadd.f32 %v1599, %v3000
    %v3017 = vadd.f32 %v1600, %v3002
    %v3018 = vadd.f32 %v1601, %v3006
    %v3019 = vadd.f32 %v1602, %v3008
    %v3020 = vadd.f32 %v1603, %v3010
    %v3021 = vadd.f32 %v1604, %v3012
    %v3022 = vld [vmem:[#allocation17 + $0xe] sm:$0x3]
    %v3024 = vlaneseq
    %v3025 = vshrl.u32 %v3024, 7
    %v3026 = vsub.s32 0, %v3025
    %v3027 = vrot.slane %v3022, %v3026
    %v3028 = vlaneseq
    %v3029 = vshrl.u32 %v3028, 7
    %v3030 = vsub.s32 1, %v3029
    %v3031 = vrot.slane %v3022, %v3030
    %v3034 = vadd.f32 %v3014, %v3027
    %v3035 = vadd.f32 %v3015, %v3031
    %v3036 = vadd.f32 %v3016, %v3027
    %v3037 = vadd.f32 %v3017, %v3031
    %v3038 = vadd.f32 %v3018, %v3027
    %v3039 = vadd.f32 %v3019, %v3031
    %v3040 = vadd.f32 %v3020, %v3027
    %v3041 = vadd.f32 %v3021, %v3031
    %v3042 = vadd.f32 %v3034, %v3035
    %3043 = vadd.xlane.f32.xlu0 %v3042
    %v3044 = vpop.xlane.xlu0 %3043
    %v3045 = vadd.f32 %v3036, %v3037
    %3046 = vadd.xlane.f32.xlu0 %v3045
    %v3047 = vpop.xlane.xlu0 %3046
    %v3048 = vadd.f32 %v3038, %v3039
    %3049 = vadd.xlane.f32.xlu0 %v3048
    %v3050 = vpop.xlane.xlu0 %3049
    %v3051 = vadd.f32 %v3040, %v3041
    %3052 = vadd.xlane.f32.xlu0 %v3051
    %v3053 = vpop.xlane.xlu0 %3052
    %v3054 = vmul.f32 %v3044, %v223
    %v3055 = vmul.f32 %v3047, %v223
    %v3056 = vmul.f32 %v3050, %v223
    %v3057 = vmul.f32 %v3053, %v223
    %v3058 = vsub.f32 %v3034, %v3054
    %v3059 = vsub.f32 %v3035, %v3054
    %v3060 = vsub.f32 %v3036, %v3055
    %v3061 = vsub.f32 %v3037, %v3055
    %v3062 = vsub.f32 %v3038, %v3056
    %v3063 = vsub.f32 %v3039, %v3056
    %v3064 = vsub.f32 %v3040, %v3057
    %v3065 = vsub.f32 %v3041, %v3057
    %v3066 = vmul.f32 %v3058, %v3058
    %v3067 = vmul.f32 %v3059, %v3059
    %v3068 = vmul.f32 %v3060, %v3060
    %v3069 = vmul.f32 %v3061, %v3061
    %v3070 = vmul.f32 %v3062, %v3062
    %v3071 = vmul.f32 %v3063, %v3063
    %v3072 = vmul.f32 %v3064, %v3064
    %v3073 = vmul.f32 %v3065, %v3065
    %v3074 = vadd.f32 %v3066, %v3067
    %3075 = vadd.xlane.f32.xlu0 %v3074
    %v3076 = vpop.xlane.xlu0 %3075
    %v3077 = vadd.f32 %v3068, %v3069
    %3078 = vadd.xlane.f32.xlu0 %v3077
    %v3079 = vpop.xlane.xlu0 %3078
    %v3080 = vadd.f32 %v3070, %v3071
    %3081 = vadd.xlane.f32.xlu0 %v3080
    %v3082 = vpop.xlane.xlu0 %3081
    %v3083 = vadd.f32 %v3072, %v3073
    %3084 = vadd.xlane.f32.xlu0 %v3083
    %v3085 = vpop.xlane.xlu0 %3084
    %v3086 = vmul.f32 %v3076, %v223
    %v3087 = vmul.f32 %v3079, %v223
    %v3088 = vmul.f32 %v3082, %v223
    %v3089 = vmul.f32 %v3085, %v223
    %v3090 = vadd.f32 %v3086, 1e-05
    %v3091 = vadd.f32 %v3087, 1e-05
    %v3092 = vadd.f32 %v3088, 1e-05
    %v3093 = vadd.f32 %v3089, 1e-05
    %v3094 = vrsqrt.pop %v3090
    %v3095 = vrsqrt.pop %v3091
    %v3096 = vrsqrt.pop %v3092
    %v3097 = vrsqrt.pop %v3093
    %v3098 = vmul.f32 %v3058, %v3094
    %v3099 = vmul.f32 %v3059, %v3094
    %v3100 = vmul.f32 %v3060, %v3095
    %v3101 = vmul.f32 %v3061, %v3095
    %v3102 = vmul.f32 %v3062, %v3096
    %v3103 = vmul.f32 %v3063, %v3096
    %v3104 = vmul.f32 %v3064, %v3097
    %v3105 = vmul.f32 %v3065, %v3097
    %v3106 = vpack.c.bf16 %v3100, %v3098
    %v3107 = vpack.c.bf16 %v3101, %v3099
    %v3108 = vpack.c.bf16 %v3104, %v3102
    %v3109 = vpack.c.bf16 %v3105, %v3103
    %v3110 = vld [vmem:[#allocation14] sm:$0xff]
    %v3111 = vld [vmem:[#allocation14 + $0x8] sm:$0xff]
    %v3112 = vld [vmem:[#allocation14 + $0x10] sm:$0xff]
    %v3113 = vld [vmem:[#allocation14 + $0x18] sm:$0xff]
    %v3114 = vld [vmem:[#allocation14 + $0x20] sm:$0xff]
    %v3115 = vld [vmem:[#allocation14 + $0x28] sm:$0xff]
    %v3116 = vld [vmem:[#allocation14 + $0x30] sm:$0xff]
    %v3117 = vld [vmem:[#allocation14 + $0x38] sm:$0xff]
    %v3118 = vld [vmem:[#allocation14 + $0x40] sm:$0xff]
    %v3119 = vld [vmem:[#allocation14 + $0x48] sm:$0xff]
    %v3120 = vld [vmem:[#allocation14 + $0x50] sm:$0xff]
    %v3121 = vld [vmem:[#allocation14 + $0x58] sm:$0xff]
    %v3122 = vld [vmem:[#allocation14 + $0x60] sm:$0xff]
    %v3123 = vld [vmem:[#allocation14 + $0x68] sm:$0xff]
    %v3124 = vld [vmem:[#allocation14 + $0x70] sm:$0xff]
    %v3125 = vld [vmem:[#allocation14 + $0x78] sm:$0xff]
    %v3126 = vld [vmem:[#allocation14 + $0x80] sm:$0xff]
    %v3127 = vld [vmem:[#allocation14 + $0x88] sm:$0xff]
    %v3128 = vld [vmem:[#allocation14 + $0x90] sm:$0xff]
    %v3129 = vld [vmem:[#allocation14 + $0x98] sm:$0xff]
    %v3130 = vld [vmem:[#allocation14 + $0xa0] sm:$0xff]
    %v3131 = vld [vmem:[#allocation14 + $0xa8] sm:$0xff]
    %v3132 = vld [vmem:[#allocation14 + $0xb0] sm:$0xff]
    %v3133 = vld [vmem:[#allocation14 + $0xb8] sm:$0xff]
    %v3134 = vld [vmem:[#allocation14 + $0xc0] sm:$0xff]
    %v3135 = vld [vmem:[#allocation14 + $0xc8] sm:$0xff]
    %v3136 = vld [vmem:[#allocation14 + $0xd0] sm:$0xff]
    %v3137 = vld [vmem:[#allocation14 + $0xd8] sm:$0xff]
    %v3138 = vld [vmem:[#allocation14 + $0xe0] sm:$0xff]
    %v3139 = vld [vmem:[#allocation14 + $0xe8] sm:$0xff]
    %v3140 = vld [vmem:[#allocation14 + $0xf0] sm:$0xff]
    %v3141 = vld [vmem:[#allocation14 + $0xf8] sm:$0xff]
    %v3142 = vld [vmem:[#allocation14 + $0x100] sm:$0xff]
    %v3143 = vld [vmem:[#allocation14 + $0x108] sm:$0xff]
    %v3144 = vld [vmem:[#allocation14 + $0x110] sm:$0xff]
    %v3145 = vld [vmem:[#allocation14 + $0x118] sm:$0xff]
    %v3146 = vld [vmem:[#allocation14 + $0x120] sm:$0xff]
    %v3147 = vld [vmem:[#allocation14 + $0x128] sm:$0xff]
    %v3148 = vld [vmem:[#allocation14 + $0x130] sm:$0xff]
    %v3149 = vld [vmem:[#allocation14 + $0x138] sm:$0xff]
    %v3150 = vld [vmem:[#allocation14 + $0x140] sm:$0xff]
    %v3151 = vld [vmem:[#allocation14 + $0x148] sm:$0xff]
    %v3152 = vld [vmem:[#allocation14 + $0x150] sm:$0xff]
    %v3153 = vld [vmem:[#allocation14 + $0x158] sm:$0xff]
    %v3154 = vld [vmem:[#allocation14 + $0x160] sm:$0xff]
    %v3155 = vld [vmem:[#allocation14 + $0x168] sm:$0xff]
    %v3156 = vld [vmem:[#allocation14 + $0x170] sm:$0xff]
    %v3157 = vld [vmem:[#allocation14 + $0x178] sm:$0xff]
    %v3158 = vld [vmem:[#allocation14 + $0x180] sm:$0xff]
    %v3159 = vld [vmem:[#allocation14 + $0x188] sm:$0xff]
    %v3160 = vld [vmem:[#allocation14 + $0x190] sm:$0xff]
    %v3161 = vld [vmem:[#allocation14 + $0x198] sm:$0xff]
    %v3162 = vld [vmem:[#allocation14 + $0x1a0] sm:$0xff]
    %v3163 = vld [vmem:[#allocation14 + $0x1a8] sm:$0xff]
    %v3164 = vld [vmem:[#allocation14 + $0x1b0] sm:$0xff]
    %v3165 = vld [vmem:[#allocation14 + $0x1b8] sm:$0xff]
    %v3166 = vld [vmem:[#allocation14 + $0x1c0] sm:$0xff]
    %v3167 = vld [vmem:[#allocation14 + $0x1c8] sm:$0xff]
    %v3168 = vld [vmem:[#allocation14 + $0x1d0] sm:$0xff]
    %v3169 = vld [vmem:[#allocation14 + $0x1d8] sm:$0xff]
    %v3170 = vld [vmem:[#allocation14 + $0x1e0] sm:$0xff]
    %v3171 = vld [vmem:[#allocation14 + $0x1e8] sm:$0xff]
    %v3172 = vld [vmem:[#allocation14 + $0x1f0] sm:$0xff]
    %v3173 = vld [vmem:[#allocation14 + $0x1f8] sm:$0xff]
    %v3174 = vld [vmem:[#allocation17 + $0x10] sm:$0xf]
    %v3176 = vlaneseq
    %v3177 = vshrl.u32 %v3176, 7
    %v3178 = vsub.s32 0, %v3177
    %v3179 = vrot.slane %v3174, %v3178
    %v3180 = vlaneseq
    %v3181 = vshrl.u32 %v3180, 7
    %v3182 = vsub.s32 1, %v3181
    %v3183 = vrot.slane %v3174, %v3182
    %v3184 = vlaneseq
    %v3185 = vshrl.u32 %v3184, 7
    %v3186 = vsub.s32 2, %v3185
    %v3187 = vrot.slane %v3174, %v3186
    %v3188 = vlaneseq
    %v3189 = vshrl.u32 %v3188, 7
    %v3190 = vsub.s32 3, %v3189
    %v3191 = vrot.slane %v3174, %v3190
    %v3260 = vunpack.c.l.b16 %v3110
    %v3261 = vunpack.c.h.b16 %v3110
    %v3262 = vunpack.c.l.b16 %v3111
    %v3263 = vunpack.c.h.b16 %v3111
    %v3264 = vunpack.c.l.b16 %v3112
    %v3265 = vunpack.c.h.b16 %v3112
    %v3266 = vunpack.c.l.b16 %v3113
    %v3267 = vunpack.c.h.b16 %v3113
    %v3268 = vunpack.c.l.b16 %v3114
    %v3269 = vunpack.c.h.b16 %v3114
    %v3270 = vunpack.c.l.b16 %v3115
    %v3271 = vunpack.c.h.b16 %v3115
    %v3272 = vunpack.c.l.b16 %v3116
    %v3273 = vunpack.c.h.b16 %v3116
    %v3274 = vunpack.c.l.b16 %v3117
    %v3275 = vunpack.c.h.b16 %v3117
    %v3276 = vunpack.c.l.b16 %v3118
    %v3277 = vunpack.c.h.b16 %v3118
    %v3278 = vunpack.c.l.b16 %v3119
    %v3279 = vunpack.c.h.b16 %v3119
    %v3280 = vunpack.c.l.b16 %v3120
    %v3281 = vunpack.c.h.b16 %v3120
    %v3282 = vunpack.c.l.b16 %v3121
    %v3283 = vunpack.c.h.b16 %v3121
    %v3284 = vunpack.c.l.b16 %v3122
    %v3285 = vunpack.c.h.b16 %v3122
    %v3286 = vunpack.c.l.b16 %v3123
    %v3287 = vunpack.c.h.b16 %v3123
    %v3288 = vunpack.c.l.b16 %v3124
    %v3289 = vunpack.c.h.b16 %v3124
    %v3290 = vunpack.c.l.b16 %v3125
    %v3291 = vunpack.c.h.b16 %v3125
    %v3292 = vunpack.c.l.b16 %v3126
    %v3293 = vunpack.c.h.b16 %v3126
    %v3294 = vunpack.c.l.b16 %v3127
    %v3295 = vunpack.c.h.b16 %v3127
    %v3296 = vunpack.c.l.b16 %v3128
    %v3297 = vunpack.c.h.b16 %v3128
    %v3298 = vunpack.c.l.b16 %v3129
    %v3299 = vunpack.c.h.b16 %v3129
    %v3300 = vunpack.c.l.b16 %v3130
    %v3301 = vunpack.c.h.b16 %v3130
    %v3302 = vunpack.c.l.b16 %v3131
    %v3303 = vunpack.c.h.b16 %v3131
    %v3304 = vunpack.c.l.b16 %v3132
    %v3305 = vunpack.c.h.b16 %v3132
    %v3306 = vunpack.c.l.b16 %v3133
    %v3307 = vunpack.c.h.b16 %v3133
    %v3308 = vunpack.c.l.b16 %v3134
    %v3309 = vunpack.c.h.b16 %v3134
    %v3310 = vunpack.c.l.b16 %v3135
    %v3311 = vunpack.c.h.b16 %v3135
    %v3312 = vunpack.c.l.b16 %v3136
    %v3313 = vunpack.c.h.b16 %v3136
    %v3314 = vunpack.c.l.b16 %v3137
    %v3315 = vunpack.c.h.b16 %v3137
    %v3316 = vunpack.c.l.b16 %v3138
    %v3317 = vunpack.c.h.b16 %v3138
    %v3318 = vunpack.c.l.b16 %v3139
    %v3319 = vunpack.c.h.b16 %v3139
    %v3320 = vunpack.c.l.b16 %v3140
    %v3321 = vunpack.c.h.b16 %v3140
    %v3322 = vunpack.c.l.b16 %v3141
    %v3323 = vunpack.c.h.b16 %v3141
    %v3324 = vunpack.c.l.b16 %v3142
    %v3325 = vunpack.c.h.b16 %v3142
    %v3326 = vunpack.c.l.b16 %v3143
    %v3327 = vunpack.c.h.b16 %v3143
    %v3328 = vunpack.c.l.b16 %v3144
    %v3329 = vunpack.c.h.b16 %v3144
    %v3330 = vunpack.c.l.b16 %v3145
    %v3331 = vunpack.c.h.b16 %v3145
    %v3332 = vunpack.c.l.b16 %v3146
    %v3333 = vunpack.c.h.b16 %v3146
    %v3334 = vunpack.c.l.b16 %v3147
    %v3335 = vunpack.c.h.b16 %v3147
    %v3336 = vunpack.c.l.b16 %v3148
    %v3337 = vunpack.c.h.b16 %v3148
    %v3338 = vunpack.c.l.b16 %v3149
    %v3339 = vunpack.c.h.b16 %v3149
    %v3340 = vunpack.c.l.b16 %v3150
    %v3341 = vunpack.c.h.b16 %v3150
    %v3342 = vunpack.c.l.b16 %v3151
    %v3343 = vunpack.c.h.b16 %v3151
    %v3344 = vunpack.c.l.b16 %v3152
    %v3345 = vunpack.c.h.b16 %v3152
    %v3346 = vunpack.c.l.b16 %v3153
    %v3347 = vunpack.c.h.b16 %v3153
    %v3348 = vunpack.c.l.b16 %v3154
    %v3349 = vunpack.c.h.b16 %v3154
    %v3350 = vunpack.c.l.b16 %v3155
    %v3351 = vunpack.c.h.b16 %v3155
    %v3352 = vunpack.c.l.b16 %v3156
    %v3353 = vunpack.c.h.b16 %v3156
    %v3354 = vunpack.c.l.b16 %v3157
    %v3355 = vunpack.c.h.b16 %v3157
    %v3356 = vunpack.c.l.b16 %v3158
    %v3357 = vunpack.c.h.b16 %v3158
    %v3358 = vunpack.c.l.b16 %v3159
    %v3359 = vunpack.c.h.b16 %v3159
    %v3360 = vunpack.c.l.b16 %v3160
    %v3361 = vunpack.c.h.b16 %v3160
    %v3362 = vunpack.c.l.b16 %v3161
    %v3363 = vunpack.c.h.b16 %v3161
    %v3364 = vunpack.c.l.b16 %v3162
    %v3365 = vunpack.c.h.b16 %v3162
    %v3366 = vunpack.c.l.b16 %v3163
    %v3367 = vunpack.c.h.b16 %v3163
    %v3368 = vunpack.c.l.b16 %v3164
    %v3369 = vunpack.c.h.b16 %v3164
    %v3370 = vunpack.c.l.b16 %v3165
    %v3371 = vunpack.c.h.b16 %v3165
    %v3372 = vunpack.c.l.b16 %v3166
    %v3373 = vunpack.c.h.b16 %v3166
    %v3374 = vunpack.c.l.b16 %v3167
    %v3375 = vunpack.c.h.b16 %v3167
    %v3376 = vunpack.c.l.b16 %v3168
    %v3377 = vunpack.c.h.b16 %v3168
    %v3378 = vunpack.c.l.b16 %v3169
    %v3379 = vunpack.c.h.b16 %v3169
    %v3380 = vunpack.c.l.b16 %v3170
    %v3381 = vunpack.c.h.b16 %v3170
    %v3382 = vunpack.c.l.b16 %v3171
    %v3383 = vunpack.c.h.b16 %v3171
    %v3384 = vunpack.c.l.b16 %v3172
    %v3385 = vunpack.c.h.b16 %v3172
    %v3386 = vunpack.c.l.b16 %v3173
    %v3387 = vunpack.c.h.b16 %v3173
    %v3388 = vpack.c.b16 %v3264, %v3260
    %v3389 = vpack.c.b16 %v3265, %v3261
    %v3390 = vpack.c.b16 %v3266, %v3262
    %v3391 = vpack.c.b16 %v3267, %v3263
    %v3392 = vpack.c.b16 %v3272, %v3268
    %v3393 = vpack.c.b16 %v3273, %v3269
    %v3394 = vpack.c.b16 %v3274, %v3270
    %v3395 = vpack.c.b16 %v3275, %v3271
    %v3396 = vpack.c.b16 %v3280, %v3276
    %v3397 = vpack.c.b16 %v3281, %v3277
    %v3398 = vpack.c.b16 %v3282, %v3278
    %v3399 = vpack.c.b16 %v3283, %v3279
    %v3400 = vpack.c.b16 %v3288, %v3284
    %v3401 = vpack.c.b16 %v3289, %v3285
    %v3402 = vpack.c.b16 %v3290, %v3286
    %v3403 = vpack.c.b16 %v3291, %v3287
    %v3404 = vpack.c.b16 %v3296, %v3292
    %v3405 = vpack.c.b16 %v3297, %v3293
    %v3406 = vpack.c.b16 %v3298, %v3294
    %v3407 = vpack.c.b16 %v3299, %v3295
    %v3408 = vpack.c.b16 %v3304, %v3300
    %v3409 = vpack.c.b16 %v3305, %v3301
    %v3410 = vpack.c.b16 %v3306, %v3302
    %v3411 = vpack.c.b16 %v3307, %v3303
    %v3412 = vpack.c.b16 %v3312, %v3308
    %v3413 = vpack.c.b16 %v3313, %v3309
    %v3414 = vpack.c.b16 %v3314, %v3310
    %v3415 = vpack.c.b16 %v3315, %v3311
    %v3416 = vpack.c.b16 %v3320, %v3316
    %v3417 = vpack.c.b16 %v3321, %v3317
    %v3418 = vpack.c.b16 %v3322, %v3318
    %v3419 = vpack.c.b16 %v3323, %v3319
    %v3420 = vpack.c.b16 %v3328, %v3324
    %v3421 = vpack.c.b16 %v3329, %v3325
    %v3422 = vpack.c.b16 %v3330, %v3326
    %v3423 = vpack.c.b16 %v3331, %v3327
    %v3424 = vpack.c.b16 %v3336, %v3332
    %v3425 = vpack.c.b16 %v3337, %v3333
    %v3426 = vpack.c.b16 %v3338, %v3334
    %v3427 = vpack.c.b16 %v3339, %v3335
    %v3428 = vpack.c.b16 %v3344, %v3340
    %v3429 = vpack.c.b16 %v3345, %v3341
    %v3430 = vpack.c.b16 %v3346, %v3342
    %v3431 = vpack.c.b16 %v3347, %v3343
    %v3432 = vpack.c.b16 %v3352, %v3348
    %v3433 = vpack.c.b16 %v3353, %v3349
    %v3434 = vpack.c.b16 %v3354, %v3350
    %v3435 = vpack.c.b16 %v3355, %v3351
    %v3436 = vpack.c.b16 %v3360, %v3356
    %v3437 = vpack.c.b16 %v3361, %v3357
    %v3438 = vpack.c.b16 %v3362, %v3358
    %v3439 = vpack.c.b16 %v3363, %v3359
    %v3440 = vpack.c.b16 %v3368, %v3364
    %v3441 = vpack.c.b16 %v3369, %v3365
    %v3442 = vpack.c.b16 %v3370, %v3366
    %v3443 = vpack.c.b16 %v3371, %v3367
    %v3444 = vpack.c.b16 %v3376, %v3372
    %v3445 = vpack.c.b16 %v3377, %v3373
    %v3446 = vpack.c.b16 %v3378, %v3374
    %v3447 = vpack.c.b16 %v3379, %v3375
    %v3448 = vpack.c.b16 %v3384, %v3380
    %v3449 = vpack.c.b16 %v3385, %v3381
    %v3450 = vpack.c.b16 %v3386, %v3382
    %v3451 = vpack.c.b16 %v3387, %v3383
    %3516 = vmatprep.subr.bf16.mxu0 %v3417
    %3517 = vmatpush1.bf16.msra.mxu0 %v3416
    %3518 = vmatprep.subr.bf16.mxu0 %v3413
    %3519 = vmatpush1.bf16.msra.mxu0 %v3412
    %3520 = vmatprep.subr.bf16.mxu0 %v3409
    %3521 = vmatpush1.bf16.msra.mxu0 %v3408
    %3522 = vmatprep.subr.bf16.mxu0 %v3405
    %3523 = vmatpush1.bf16.msra.mxu0 %v3404
    %3524 = vmatprep.subr.bf16.mxu0 %v3401
    %3525 = vmatpush1.bf16.msra.mxu0 %v3400
    %3526 = vmatprep.subr.bf16.mxu0 %v3397
    %3527 = vmatpush1.bf16.msra.mxu0 %v3396
    %3528 = vmatprep.subr.bf16.mxu0 %v3393
    %3529 = vmatpush1.bf16.msra.mxu0 %v3392
    %3530 = vmatprep.subr.bf16.mxu0 %v3389
    %3531 = vmatpush1.bf16.msra.mxu0 %v3388
    %3532 = vmatprep.subr.bf16.mxu0 %v3449
    %3533 = vmatpush2.bf16.msra.mxu0 %v3448
    %3534 = vmatprep.subr.bf16.mxu0 %v3445
    %3535 = vmatpush2.bf16.msra.mxu0 %v3444
    %3536 = vmatprep.subr.bf16.mxu0 %v3441
    %3537 = vmatpush2.bf16.msra.mxu0 %v3440
    %3538 = vmatprep.subr.bf16.mxu0 %v3437
    %3539 = vmatpush2.bf16.msra.mxu0 %v3436
    %3540 = vmatprep.subr.bf16.mxu0 %v3433
    %3541 = vmatpush2.bf16.msra.mxu0 %v3432
    %3542 = vmatprep.subr.bf16.mxu0 %v3429
    %3543 = vmatpush2.bf16.msra.mxu0 %v3428
    %3544 = vmatprep.subr.bf16.mxu0 %v3425
    %3545 = vmatpush2.bf16.msra.mxu0 %v3424
    %3546 = vmatprep.subr.bf16.mxu0 %v3421
    %3547 = vmatpush2.bf16.msra.mxu0 %v3420
    %3548 = vmatprep.mubr.bf16.mxu0 %v3107
    %3549 = vmatmul.mubr.bf16.gmra.mxu0 %v3106
    %v3550 = vpop.f32.mrf.mxu0
    %v3551 = vadd.f32 %v3179, %v3550
    %v3552 = vpop.f32.mrf.mxu0
    %v3553 = vadd.f32 %v3183, %v3552
    %v3554 = vpop.f32.mrf.mxu0
    %v3555 = vadd.f32 %v3179, %v3554
    %v3556 = vpop.f32.mrf.mxu0
    %v3557 = vadd.f32 %v3183, %v3556
    %3558 = vmatprep.mubr.bf16.mxu0 %v3109
    %3559 = vmatmul.mubr.bf16.gmra.mxu0 %v3108
    %v3560 = vpop.f32.mrf.mxu0
    %v3561 = vadd.f32 %v3179, %v3560
    %v3562 = vpop.f32.mrf.mxu0
    %v3563 = vadd.f32 %v3183, %v3562
    %v3564 = vpop.f32.mrf.mxu0
    %v3565 = vadd.f32 %v3179, %v3564
    %v3566 = vpop.f32.mrf.mxu0
    %v3567 = vadd.f32 %v3183, %v3566
    %3568 = vdwg.mxu0
    %3569 = vmatprep.subr.bf16.mxu0 %v3419
    %3570 = vmatpush1.bf16.msra.mxu0 %v3418
    %3571 = vmatprep.subr.bf16.mxu0 %v3415
    %3572 = vmatpush1.bf16.msra.mxu0 %v3414
    %3573 = vmatprep.subr.bf16.mxu0 %v3411
    %3574 = vmatpush1.bf16.msra.mxu0 %v3410
    %3575 = vmatprep.subr.bf16.mxu0 %v3407
    %3576 = vmatpush1.bf16.msra.mxu0 %v3406
    %3577 = vmatprep.subr.bf16.mxu0 %v3403
    %3578 = vmatpush1.bf16.msra.mxu0 %v3402
    %3579 = vmatprep.subr.bf16.mxu0 %v3399
    %3580 = vmatpush1.bf16.msra.mxu0 %v3398
    %3581 = vmatprep.subr.bf16.mxu0 %v3395
    %3582 = vmatpush1.bf16.msra.mxu0 %v3394
    %3583 = vmatprep.subr.bf16.mxu0 %v3391
    %3584 = vmatpush1.bf16.msra.mxu0 %v3390
    %3585 = vmatprep.subr.bf16.mxu0 %v3451
    %3586 = vmatpush2.bf16.msra.mxu0 %v3450
    %3587 = vmatprep.subr.bf16.mxu0 %v3447
    %3588 = vmatpush2.bf16.msra.mxu0 %v3446
    %3589 = vmatprep.subr.bf16.mxu0 %v3443
    %3590 = vmatpush2.bf16.msra.mxu0 %v3442
    %3591 = vmatprep.subr.bf16.mxu0 %v3439
    %3592 = vmatpush2.bf16.msra.mxu0 %v3438
    %3593 = vmatprep.subr.bf16.mxu0 %v3435
    %3594 = vmatpush2.bf16.msra.mxu0 %v3434
    %3595 = vmatprep.subr.bf16.mxu0 %v3431
    %3596 = vmatpush2.bf16.msra.mxu0 %v3430
    %3597 = vmatprep.subr.bf16.mxu0 %v3427
    %3598 = vmatpush2.bf16.msra.mxu0 %v3426
    %3599 = vmatprep.subr.bf16.mxu0 %v3423
    %3600 = vmatpush2.bf16.msra.mxu0 %v3422
    %3601 = vmatprep.mubr.bf16.mxu0 %v3107
    %3602 = vmatmul.mubr.bf16.gmra.mxu0 %v3106
    %v3603 = vpop.f32.mrf.mxu0
    %v3604 = vadd.f32 %v3187, %v3603
    %v3605 = vpop.f32.mrf.mxu0
    %v3606 = vadd.f32 %v3191, %v3605
    %v3607 = vpop.f32.mrf.mxu0
    %v3608 = vadd.f32 %v3187, %v3607
    %v3609 = vpop.f32.mrf.mxu0
    %v3610 = vadd.f32 %v3191, %v3609
    %3611 = vmatprep.mubr.bf16.mxu0 %v3109
    %3612 = vmatmul.mubr.bf16.gmra.mxu0 %v3108
    %v3613 = vpop.f32.mrf.mxu0
    %v3614 = vadd.f32 %v3187, %v3613
    %v3615 = vpop.f32.mrf.mxu0
    %v3616 = vadd.f32 %v3191, %v3615
    %v3617 = vpop.f32.mrf.mxu0
    %v3618 = vadd.f32 %v3187, %v3617
    %v3619 = vpop.f32.mrf.mxu0
    %v3620 = vadd.f32 %v3191, %v3619
    %3621 = vdwg.mxu0
    %v3622 = vmax.f32 %v3551, 0.0
    %v3623 = vmax.f32 %v3553, 0.0
    %v3624 = vmax.f32 %v3604, 0.0
    %v3625 = vmax.f32 %v3606, 0.0
    %v3626 = vmax.f32 %v3555, 0.0
    %v3627 = vmax.f32 %v3557, 0.0
    %v3628 = vmax.f32 %v3608, 0.0
    %v3629 = vmax.f32 %v3610, 0.0
    %v3630 = vmax.f32 %v3561, 0.0
    %v3631 = vmax.f32 %v3563, 0.0
    %v3632 = vmax.f32 %v3614, 0.0
    %v3633 = vmax.f32 %v3616, 0.0
    %v3634 = vmax.f32 %v3565, 0.0
    %v3635 = vmax.f32 %v3567, 0.0
    %v3636 = vmax.f32 %v3618, 0.0
    %v3637 = vmax.f32 %v3620, 0.0
    %v3638 = vpack.c.bf16 %v3626, %v3622
    %v3639 = vpack.c.bf16 %v3627, %v3623
    %v3640 = vpack.c.bf16 %v3628, %v3624
    %v3641 = vpack.c.bf16 %v3629, %v3625
    %v3642 = vpack.c.bf16 %v3634, %v3630
    %v3643 = vpack.c.bf16 %v3635, %v3631
    %v3644 = vpack.c.bf16 %v3636, %v3632
    %v3645 = vpack.c.bf16 %v3637, %v3633
    %v3646 = vld [vmem:[#allocation16] sm:$0xff]
    %v3647 = vld [vmem:[#allocation16 + $0x8] sm:$0xff]
    %v3648 = vld [vmem:[#allocation16 + $0x10] sm:$0xff]
    %v3649 = vld [vmem:[#allocation16 + $0x18] sm:$0xff]
    %v3650 = vld [vmem:[#allocation16 + $0x20] sm:$0xff]
    %v3651 = vld [vmem:[#allocation16 + $0x28] sm:$0xff]
    %v3652 = vld [vmem:[#allocation16 + $0x30] sm:$0xff]
    %v3653 = vld [vmem:[#allocation16 + $0x38] sm:$0xff]
    %v3654 = vld [vmem:[#allocation16 + $0x40] sm:$0xff]
    %v3655 = vld [vmem:[#allocation16 + $0x48] sm:$0xff]
    %v3656 = vld [vmem:[#allocation16 + $0x50] sm:$0xff]
    %v3657 = vld [vmem:[#allocation16 + $0x58] sm:$0xff]
    %v3658 = vld [vmem:[#allocation16 + $0x60] sm:$0xff]
    %v3659 = vld [vmem:[#allocation16 + $0x68] sm:$0xff]
    %v3660 = vld [vmem:[#allocation16 + $0x70] sm:$0xff]
    %v3661 = vld [vmem:[#allocation16 + $0x78] sm:$0xff]
    %v3662 = vld [vmem:[#allocation16 + $0x80] sm:$0xff]
    %v3663 = vld [vmem:[#allocation16 + $0x88] sm:$0xff]
    %v3664 = vld [vmem:[#allocation16 + $0x90] sm:$0xff]
    %v3665 = vld [vmem:[#allocation16 + $0x98] sm:$0xff]
    %v3666 = vld [vmem:[#allocation16 + $0xa0] sm:$0xff]
    %v3667 = vld [vmem:[#allocation16 + $0xa8] sm:$0xff]
    %v3668 = vld [vmem:[#allocation16 + $0xb0] sm:$0xff]
    %v3669 = vld [vmem:[#allocation16 + $0xb8] sm:$0xff]
    %v3670 = vld [vmem:[#allocation16 + $0xc0] sm:$0xff]
    %v3671 = vld [vmem:[#allocation16 + $0xc8] sm:$0xff]
    %v3672 = vld [vmem:[#allocation16 + $0xd0] sm:$0xff]
    %v3673 = vld [vmem:[#allocation16 + $0xd8] sm:$0xff]
    %v3674 = vld [vmem:[#allocation16 + $0xe0] sm:$0xff]
    %v3675 = vld [vmem:[#allocation16 + $0xe8] sm:$0xff]
    %v3676 = vld [vmem:[#allocation16 + $0xf0] sm:$0xff]
    %v3677 = vld [vmem:[#allocation16 + $0xf8] sm:$0xff]
    %v3678 = vld [vmem:[#allocation16 + $0x100] sm:$0xff]
    %v3679 = vld [vmem:[#allocation16 + $0x108] sm:$0xff]
    %v3680 = vld [vmem:[#allocation16 + $0x110] sm:$0xff]
    %v3681 = vld [vmem:[#allocation16 + $0x118] sm:$0xff]
    %v3682 = vld [vmem:[#allocation16 + $0x120] sm:$0xff]
    %v3683 = vld [vmem:[#allocation16 + $0x128] sm:$0xff]
    %v3684 = vld [vmem:[#allocation16 + $0x130] sm:$0xff]
    %v3685 = vld [vmem:[#allocation16 + $0x138] sm:$0xff]
    %v3686 = vld [vmem:[#allocation16 + $0x140] sm:$0xff]
    %v3687 = vld [vmem:[#allocation16 + $0x148] sm:$0xff]
    %v3688 = vld [vmem:[#allocation16 + $0x150] sm:$0xff]
    %v3689 = vld [vmem:[#allocation16 + $0x158] sm:$0xff]
    %v3690 = vld [vmem:[#allocation16 + $0x160] sm:$0xff]
    %v3691 = vld [vmem:[#allocation16 + $0x168] sm:$0xff]
    %v3692 = vld [vmem:[#allocation16 + $0x170] sm:$0xff]
    %v3693 = vld [vmem:[#allocation16 + $0x178] sm:$0xff]
    %v3694 = vld [vmem:[#allocation16 + $0x180] sm:$0xff]
    %v3695 = vld [vmem:[#allocation16 + $0x188] sm:$0xff]
    %v3696 = vld [vmem:[#allocation16 + $0x190] sm:$0xff]
    %v3697 = vld [vmem:[#allocation16 + $0x198] sm:$0xff]
    %v3698 = vld [vmem:[#allocation16 + $0x1a0] sm:$0xff]
    %v3699 = vld [vmem:[#allocation16 + $0x1a8] sm:$0xff]
    %v3700 = vld [vmem:[#allocation16 + $0x1b0] sm:$0xff]
    %v3701 = vld [vmem:[#allocation16 + $0x1b8] sm:$0xff]
    %v3702 = vld [vmem:[#allocation16 + $0x1c0] sm:$0xff]
    %v3703 = vld [vmem:[#allocation16 + $0x1c8] sm:$0xff]
    %v3704 = vld [vmem:[#allocation16 + $0x1d0] sm:$0xff]
    %v3705 = vld [vmem:[#allocation16 + $0x1d8] sm:$0xff]
    %v3706 = vld [vmem:[#allocation16 + $0x1e0] sm:$0xff]
    %v3707 = vld [vmem:[#allocation16 + $0x1e8] sm:$0xff]
    %v3708 = vld [vmem:[#allocation16 + $0x1f0] sm:$0xff]
    %v3709 = vld [vmem:[#allocation16 + $0x1f8] sm:$0xff]
    %v3774 = vunpack.c.l.b16 %v3646
    %v3775 = vunpack.c.h.b16 %v3646
    %v3776 = vunpack.c.l.b16 %v3647
    %v3777 = vunpack.c.h.b16 %v3647
    %v3778 = vunpack.c.l.b16 %v3648
    %v3779 = vunpack.c.h.b16 %v3648
    %v3780 = vunpack.c.l.b16 %v3649
    %v3781 = vunpack.c.h.b16 %v3649
    %v3782 = vunpack.c.l.b16 %v3650
    %v3783 = vunpack.c.h.b16 %v3650
    %v3784 = vunpack.c.l.b16 %v3651
    %v3785 = vunpack.c.h.b16 %v3651
    %v3786 = vunpack.c.l.b16 %v3652
    %v3787 = vunpack.c.h.b16 %v3652
    %v3788 = vunpack.c.l.b16 %v3653
    %v3789 = vunpack.c.h.b16 %v3653
    %v3790 = vunpack.c.l.b16 %v3654
    %v3791 = vunpack.c.h.b16 %v3654
    %v3792 = vunpack.c.l.b16 %v3655
    %v3793 = vunpack.c.h.b16 %v3655
    %v3794 = vunpack.c.l.b16 %v3656
    %v3795 = vunpack.c.h.b16 %v3656
    %v3796 = vunpack.c.l.b16 %v3657
    %v3797 = vunpack.c.h.b16 %v3657
    %v3798 = vunpack.c.l.b16 %v3658
    %v3799 = vunpack.c.h.b16 %v3658
    %v3800 = vunpack.c.l.b16 %v3659
    %v3801 = vunpack.c.h.b16 %v3659
    %v3802 = vunpack.c.l.b16 %v3660
    %v3803 = vunpack.c.h.b16 %v3660
    %v3804 = vunpack.c.l.b16 %v3661
    %v3805 = vunpack.c.h.b16 %v3661
    %v3806 = vunpack.c.l.b16 %v3662
    %v3807 = vunpack.c.h.b16 %v3662
    %v3808 = vunpack.c.l.b16 %v3663
    %v3809 = vunpack.c.h.b16 %v3663
    %v3810 = vunpack.c.l.b16 %v3664
    %v3811 = vunpack.c.h.b16 %v3664
    %v3812 = vunpack.c.l.b16 %v3665
    %v3813 = vunpack.c.h.b16 %v3665
    %v3814 = vunpack.c.l.b16 %v3666
    %v3815 = vunpack.c.h.b16 %v3666
    %v3816 = vunpack.c.l.b16 %v3667
    %v3817 = vunpack.c.h.b16 %v3667
    %v3818 = vunpack.c.l.b16 %v3668
    %v3819 = vunpack.c.h.b16 %v3668
    %v3820 = vunpack.c.l.b16 %v3669
    %v3821 = vunpack.c.h.b16 %v3669
    %v3822 = vunpack.c.l.b16 %v3670
    %v3823 = vunpack.c.h.b16 %v3670
    %v3824 = vunpack.c.l.b16 %v3671
    %v3825 = vunpack.c.h.b16 %v3671
    %v3826 = vunpack.c.l.b16 %v3672
    %v3827 = vunpack.c.h.b16 %v3672
    %v3828 = vunpack.c.l.b16 %v3673
    %v3829 = vunpack.c.h.b16 %v3673
    %v3830 = vunpack.c.l.b16 %v3674
    %v3831 = vunpack.c.h.b16 %v3674
    %v3832 = vunpack.c.l.b16 %v3675
    %v3833 = vunpack.c.h.b16 %v3675
    %v3834 = vunpack.c.l.b16 %v3676
    %v3835 = vunpack.c.h.b16 %v3676
    %v3836 = vunpack.c.l.b16 %v3677
    %v3837 = vunpack.c.h.b16 %v3677
    %v3838 = vunpack.c.l.b16 %v3678
    %v3839 = vunpack.c.h.b16 %v3678
    %v3840 = vunpack.c.l.b16 %v3679
    %v3841 = vunpack.c.h.b16 %v3679
    %v3842 = vunpack.c.l.b16 %v3680
    %v3843 = vunpack.c.h.b16 %v3680
    %v3844 = vunpack.c.l.b16 %v3681
    %v3845 = vunpack.c.h.b16 %v3681
    %v3846 = vunpack.c.l.b16 %v3682
    %v3847 = vunpack.c.h.b16 %v3682
    %v3848 = vunpack.c.l.b16 %v3683
    %v3849 = vunpack.c.h.b16 %v3683
    %v3850 = vunpack.c.l.b16 %v3684
    %v3851 = vunpack.c.h.b16 %v3684
    %v3852 = vunpack.c.l.b16 %v3685
    %v3853 = vunpack.c.h.b16 %v3685
    %v3854 = vunpack.c.l.b16 %v3686
    %v3855 = vunpack.c.h.b16 %v3686
    %v3856 = vunpack.c.l.b16 %v3687
    %v3857 = vunpack.c.h.b16 %v3687
    %v3858 = vunpack.c.l.b16 %v3688
    %v3859 = vunpack.c.h.b16 %v3688
    %v3860 = vunpack.c.l.b16 %v3689
    %v3861 = vunpack.c.h.b16 %v3689
    %v3862 = vunpack.c.l.b16 %v3690
    %v3863 = vunpack.c.h.b16 %v3690
    %v3864 = vunpack.c.l.b16 %v3691
    %v3865 = vunpack.c.h.b16 %v3691
    %v3866 = vunpack.c.l.b16 %v3692
    %v3867 = vunpack.c.h.b16 %v3692
    %v3868 = vunpack.c.l.b16 %v3693
    %v3869 = vunpack.c.h.b16 %v3693
    %v3870 = vunpack.c.l.b16 %v3694
    %v3871 = vunpack.c.h.b16 %v3694
    %v3872 = vunpack.c.l.b16 %v3695
    %v3873 = vunpack.c.h.b16 %v3695
    %v3874 = vunpack.c.l.b16 %v3696
    %v3875 = vunpack.c.h.b16 %v3696
    %v3876 = vunpack.c.l.b16 %v3697
    %v3877 = vunpack.c.h.b16 %v3697
    %v3878 = vunpack.c.l.b16 %v3698
    %v3879 = vunpack.c.h.b16 %v3698
    %v3880 = vunpack.c.l.b16 %v3699
    %v3881 = vunpack.c.h.b16 %v3699
    %v3882 = vunpack.c.l.b16 %v3700
    %v3883 = vunpack.c.h.b16 %v3700
    %v3884 = vunpack.c.l.b16 %v3701
    %v3885 = vunpack.c.h.b16 %v3701
    %v3886 = vunpack.c.l.b16 %v3702
    %v3887 = vunpack.c.h.b16 %v3702
    %v3888 = vunpack.c.l.b16 %v3703
    %v3889 = vunpack.c.h.b16 %v3703
    %v3890 = vunpack.c.l.b16 %v3704
    %v3891 = vunpack.c.h.b16 %v3704
    %v3892 = vunpack.c.l.b16 %v3705
    %v3893 = vunpack.c.h.b16 %v3705
    %v3894 = vunpack.c.l.b16 %v3706
    %v3895 = vunpack.c.h.b16 %v3706
    %v3896 = vunpack.c.l.b16 %v3707
    %v3897 = vunpack.c.h.b16 %v3707
    %v3898 = vunpack.c.l.b16 %v3708
    %v3899 = vunpack.c.h.b16 %v3708
    %v3900 = vunpack.c.l.b16 %v3709
    %v3901 = vunpack.c.h.b16 %v3709
    %v3902 = vpack.c.b16 %v3776, %v3774
    %v3903 = vpack.c.b16 %v3777, %v3775
    %v3904 = vpack.c.b16 %v3780, %v3778
    %v3905 = vpack.c.b16 %v3781, %v3779
    %v3906 = vpack.c.b16 %v3784, %v3782
    %v3907 = vpack.c.b16 %v3785, %v3783
    %v3908 = vpack.c.b16 %v3788, %v3786
    %v3909 = vpack.c.b16 %v3789, %v3787
    %v3910 = vpack.c.b16 %v3792, %v3790
    %v3911 = vpack.c.b16 %v3793, %v3791
    %v3912 = vpack.c.b16 %v3796, %v3794
    %v3913 = vpack.c.b16 %v3797, %v3795
    %v3914 = vpack.c.b16 %v3800, %v3798
    %v3915 = vpack.c.b16 %v3801, %v3799
    %v3916 = vpack.c.b16 %v3804, %v3802
    %v3917 = vpack.c.b16 %v3805, %v3803
    %v3918 = vpack.c.b16 %v3808, %v3806
    %v3919 = vpack.c.b16 %v3809, %v3807
    %v3920 = vpack.c.b16 %v3812, %v3810
    %v3921 = vpack.c.b16 %v3813, %v3811
    %v3922 = vpack.c.b16 %v3816, %v3814
    %v3923 = vpack.c.b16 %v3817, %v3815
    %v3924 = vpack.c.b16 %v3820, %v3818
    %v3925 = vpack.c.b16 %v3821, %v3819
    %v3926 = vpack.c.b16 %v3824, %v3822
    %v3927 = vpack.c.b16 %v3825, %v3823
    %v3928 = vpack.c.b16 %v3828, %v3826
    %v3929 = vpack.c.b16 %v3829, %v3827
    %v3930 = vpack.c.b16 %v3832, %v3830
    %v3931 = vpack.c.b16 %v3833, %v3831
    %v3932 = vpack.c.b16 %v3836, %v3834
    %v3933 = vpack.c.b16 %v3837, %v3835
    %v3934 = vpack.c.b16 %v3840, %v3838
    %v3935 = vpack.c.b16 %v3841, %v3839
    %v3936 = vpack.c.b16 %v3844, %v3842
    %v3937 = vpack.c.b16 %v3845, %v3843
    %v3938 = vpack.c.b16 %v3848, %v3846
    %v3939 = vpack.c.b16 %v3849, %v3847
    %v3940 = vpack.c.b16 %v3852, %v3850
    %v3941 = vpack.c.b16 %v3853, %v3851
    %v3942 = vpack.c.b16 %v3856, %v3854
    %v3943 = vpack.c.b16 %v3857, %v3855
    %v3944 = vpack.c.b16 %v3860, %v3858
    %v3945 = vpack.c.b16 %v3861, %v3859
    %v3946 = vpack.c.b16 %v3864, %v3862
    %v3947 = vpack.c.b16 %v3865, %v3863
    %v3948 = vpack.c.b16 %v3868, %v3866
    %v3949 = vpack.c.b16 %v3869, %v3867
    %v3950 = vpack.c.b16 %v3872, %v3870
    %v3951 = vpack.c.b16 %v3873, %v3871
    %v3952 = vpack.c.b16 %v3876, %v3874
    %v3953 = vpack.c.b16 %v3877, %v3875
    %v3954 = vpack.c.b16 %v3880, %v3878
    %v3955 = vpack.c.b16 %v3881, %v3879
    %v3956 = vpack.c.b16 %v3884, %v3882
    %v3957 = vpack.c.b16 %v3885, %v3883
    %v3958 = vpack.c.b16 %v3888, %v3886
    %v3959 = vpack.c.b16 %v3889, %v3887
    %v3960 = vpack.c.b16 %v3892, %v3890
    %v3961 = vpack.c.b16 %v3893, %v3891
    %v3962 = vpack.c.b16 %v3896, %v3894
    %v3963 = vpack.c.b16 %v3897, %v3895
    %v3964 = vpack.c.b16 %v3900, %v3898
    %v3965 = vpack.c.b16 %v3901, %v3899
    %4030 = vmatprep.subr.bf16.mxu0 %v3917
    %4031 = vmatpush1.bf16.msra.mxu0 %v3916
    %4032 = vmatprep.subr.bf16.mxu0 %v3915
    %4033 = vmatpush1.bf16.msra.mxu0 %v3914
    %4034 = vmatprep.subr.bf16.mxu0 %v3913
    %4035 = vmatpush1.bf16.msra.mxu0 %v3912
    %4036 = vmatprep.subr.bf16.mxu0 %v3911
    %4037 = vmatpush1.bf16.msra.mxu0 %v3910
    %4038 = vmatprep.subr.bf16.mxu0 %v3909
    %4039 = vmatpush1.bf16.msra.mxu0 %v3908
    %4040 = vmatprep.subr.bf16.mxu0 %v3907
    %4041 = vmatpush1.bf16.msra.mxu0 %v3906
    %4042 = vmatprep.subr.bf16.mxu0 %v3905
    %4043 = vmatpush1.bf16.msra.mxu0 %v3904
    %4044 = vmatprep.subr.bf16.mxu0 %v3903
    %4045 = vmatpush1.bf16.msra.mxu0 %v3902
    %4046 = vmatprep.subr.bf16.mxu0 %v3933
    %4047 = vmatpush2.bf16.msra.mxu0 %v3932
    %4048 = vmatprep.subr.bf16.mxu0 %v3931
    %4049 = vmatpush2.bf16.msra.mxu0 %v3930
    %4050 = vmatprep.subr.bf16.mxu0 %v3929
    %4051 = vmatpush2.bf16.msra.mxu0 %v3928
    %4052 = vmatprep.subr.bf16.mxu0 %v3927
    %4053 = vmatpush2.bf16.msra.mxu0 %v3926
    %4054 = vmatprep.subr.bf16.mxu0 %v3925
    %4055 = vmatpush2.bf16.msra.mxu0 %v3924
    %4056 = vmatprep.subr.bf16.mxu0 %v3923
    %4057 = vmatpush2.bf16.msra.mxu0 %v3922
    %4058 = vmatprep.subr.bf16.mxu0 %v3921
    %4059 = vmatpush2.bf16.msra.mxu0 %v3920
    %4060 = vmatprep.subr.bf16.mxu0 %v3919
    %4061 = vmatpush2.bf16.msra.mxu0 %v3918
    %4062 = vmatprep.mubr.bf16.mxu0 %v3639
    %4063 = vmatmul.mubr.bf16.gmra.mxu0 %v3638
    %v4064 = vpop.f32.mrf.mxu0
    %v4065 = vadd.f32 0.0, %v4064
    %v4066 = vpop.f32.mrf.mxu0
    %v4067 = vadd.f32 0.0, %v4066
    %v4068 = vpop.f32.mrf.mxu0
    %v4069 = vadd.f32 0.0, %v4068
    %v4070 = vpop.f32.mrf.mxu0
    %v4071 = vadd.f32 0.0, %v4070
    %4072 = vmatprep.mubr.bf16.mxu0 %v3643
    %4073 = vmatmul.mubr.bf16.gmra.mxu0 %v3642
    %v4074 = vpop.f32.mrf.mxu0
    %v4075 = vadd.f32 0.0, %v4074
    %v4076 = vpop.f32.mrf.mxu0
    %v4077 = vadd.f32 0.0, %v4076
    %v4078 = vpop.f32.mrf.mxu0
    %v4079 = vadd.f32 0.0, %v4078
    %v4080 = vpop.f32.mrf.mxu0
    %v4081 = vadd.f32 0.0, %v4080
    %4082 = vdwg.mxu0
    %4083 = vmatprep.subr.bf16.mxu0 %v3949
    %4084 = vmatpush1.bf16.msra.mxu0 %v3948
    %4085 = vmatprep.subr.bf16.mxu0 %v3947
    %4086 = vmatpush1.bf16.msra.mxu0 %v3946
    %4087 = vmatprep.subr.bf16.mxu0 %v3945
    %4088 = vmatpush1.bf16.msra.mxu0 %v3944
    %4089 = vmatprep.subr.bf16.mxu0 %v3943
    %4090 = vmatpush1.bf16.msra.mxu0 %v3942
    %4091 = vmatprep.subr.bf16.mxu0 %v3941
    %4092 = vmatpush1.bf16.msra.mxu0 %v3940
    %4093 = vmatprep.subr.bf16.mxu0 %v3939
    %4094 = vmatpush1.bf16.msra.mxu0 %v3938
    %4095 = vmatprep.subr.bf16.mxu0 %v3937
    %4096 = vmatpush1.bf16.msra.mxu0 %v3936
    %4097 = vmatprep.subr.bf16.mxu0 %v3935
    %4098 = vmatpush1.bf16.msra.mxu0 %v3934
    %4099 = vmatprep.subr.bf16.mxu0 %v3965
    %4100 = vmatpush2.bf16.msra.mxu0 %v3964
    %4101 = vmatprep.subr.bf16.mxu0 %v3963
    %4102 = vmatpush2.bf16.msra.mxu0 %v3962
    %4103 = vmatprep.subr.bf16.mxu0 %v3961
    %4104 = vmatpush2.bf16.msra.mxu0 %v3960
    %4105 = vmatprep.subr.bf16.mxu0 %v3959
    %4106 = vmatpush2.bf16.msra.mxu0 %v3958
    %4107 = vmatprep.subr.bf16.mxu0 %v3957
    %4108 = vmatpush2.bf16.msra.mxu0 %v3956
    %4109 = vmatprep.subr.bf16.mxu0 %v3955
    %4110 = vmatpush2.bf16.msra.mxu0 %v3954
    %4111 = vmatprep.subr.bf16.mxu0 %v3953
    %4112 = vmatpush2.bf16.msra.mxu0 %v3952
    %4113 = vmatprep.subr.bf16.mxu0 %v3951
    %4114 = vmatpush2.bf16.msra.mxu0 %v3950
    %4115 = vmatprep.mubr.bf16.mxu0 %v3641
    %4116 = vmatmul.mubr.bf16.gmra.mxu0 %v3640
    %v4117 = vpop.f32.mrf.mxu0
    %v4118 = vadd.f32 %v4065, %v4117
    %v4119 = vpop.f32.mrf.mxu0
    %v4120 = vadd.f32 %v4067, %v4119
    %v4121 = vpop.f32.mrf.mxu0
    %v4122 = vadd.f32 %v4069, %v4121
    %v4123 = vpop.f32.mrf.mxu0
    %v4124 = vadd.f32 %v4071, %v4123
    %4125 = vmatprep.mubr.bf16.mxu0 %v3645
    %4126 = vmatmul.mubr.bf16.gmra.mxu0 %v3644
    %v4127 = vpop.f32.mrf.mxu0
    %v4128 = vadd.f32 %v4075, %v4127
    %v4129 = vpop.f32.mrf.mxu0
    %v4130 = vadd.f32 %v4077, %v4129
    %v4131 = vpop.f32.mrf.mxu0
    %v4132 = vadd.f32 %v4079, %v4131
    %v4133 = vpop.f32.mrf.mxu0
    %v4134 = vadd.f32 %v4081, %v4133
    %4135 = vdwg.mxu0
    %v4136 = vadd.f32 %v3034, %v4118
    %v4137 = vadd.f32 %v3035, %v4120
    %v4138 = vadd.f32 %v3036, %v4122
    %v4139 = vadd.f32 %v3037, %v4124
    %v4140 = vadd.f32 %v3038, %v4128
    %v4141 = vadd.f32 %v3039, %v4130
    %v4142 = vadd.f32 %v3040, %v4132
    %v4143 = vadd.f32 %v3041, %v4134
    %v4144 = vld [vmem:[#allocation17 + $0x14] sm:$0x3]
    %v4146 = vlaneseq
    %v4147 = vshrl.u32 %v4146, 7
    %v4148 = vsub.s32 0, %v4147
    %v4149 = vrot.slane %v4144, %v4148
    %v4150 = vlaneseq
    %v4151 = vshrl.u32 %v4150, 7
    %v4152 = vsub.s32 1, %v4151
    %v4153 = vrot.slane %v4144, %v4152
    %v4156 = vadd.f32 %v4136, %v4149
    %v4157 = vadd.f32 %v4137, %v4153
    %v4158 = vadd.f32 %v4138, %v4149
    %v4159 = vadd.f32 %v4139, %v4153
    %v4160 = vadd.f32 %v4140, %v4149
    %v4161 = vadd.f32 %v4141, %v4153
    %v4162 = vadd.f32 %v4142, %v4149
    %v4163 = vadd.f32 %v4143, %v4153
    %4164 = vst [vmem:[#allocation19] sm:$0xff] %v4156
    %4165 = vst [vmem:[#allocation19 + $0x8] sm:$0xff] %v4157
    %4166 = vst [vmem:[#allocation19 + $0x10] sm:$0xff] %v4158
    %4167 = vst [vmem:[#allocation19 + $0x18] sm:$0xff] %v4159
    %4168 = vst [vmem:[#allocation19 + $0x20] sm:$0xff] %v4160
    %4169 = vst [vmem:[#allocation19 + $0x28] sm:$0xff] %v4161
    %4170 = vst [vmem:[#allocation19 + $0x30] sm:$0xff] %v4162
    %4171 = vst [vmem:[#allocation19 + $0x38] sm:$0xff] %v4163
    // Predicated region
    $region98: #{tpu_custom_call.1} parent=1 // pred_check
      _
    $region99: #{tpu_custom_call.1} parent=1 // pred_check_branch
      %4173 = sbr.rel (0) target = $region101
    $region100: #{tpu_custom_call.1} parent=1 // pred_region
      %s4175 = ssub.s32 1024, 1024
      %4176 = vsyncadd [#allocation4], %s4175
      %s4177 = sshll.u32 [#allocation19], 4
      %s4178 = int_to_ptr.vmem [resolvable:$true] %s4177
      %4183 = dma.vmem_to_hbm [thread:$0]  %s4178, 1024, %s14, [#allocation4], 256, 256, 16
    $region101: #{tpu_custom_call.1} parent=1 // pred_fallthru
      _
    // Predicated region
    $region102: #{tpu_custom_call.1} parent=1 // pred_check
      _
    $region103: #{tpu_custom_call.1} parent=1 // pred_check_branch
      %4185 = sbr.rel (0) target = $region105
    $region104: #{tpu_custom_call.1} parent=1 // pred_region
      %4186 = dma.done [#allocation4], 1024
    $region105: #{tpu_custom_call.1} parent=1 // pred_fallthru
      _
    %4187 = vsyncpa [#allocation3], 1
    %4188 = vsyncpa [#allocation6], 1
    %4189 = vsyncpa [#allocation9], 1
    %4190 = vsyncpa [#allocation12], 1
    %4191 = vsyncpa [#allocation15], 1
    %4192 = vsyncpa [#allocation18], 1
    %4193 = vsyncpa [#allocation4], 1

</llo_original>
